<compile_context>
chip_gen: v6e
topology: v6e:2x2x1
jax: 0.10.0
libtpu: 0.0.40
codegen_flags: <defaults>
</compile_context>

<pallas_src>
import math

import numpy as np
import jax
import jax.numpy as jnp
from jax import lax
from jax.experimental import pallas as pl
from jax.experimental.pallas import tpu as pltpu


# ---------------------------------------------------------------------------
# Fused forward: one pallas_call for the whole network
# ---------------------------------------------------------------------------
def emotion_cnn_forward(x_nchw, kp):
    """x_nchw: (B, 1, H, W) f32.  kp: folded kernel params (see fold_params)."""
    B, Cin, H, W = x_nchw.shape
    assert Cin == 1
    K, P, nc = kp["ksize"], kp["pool"], kp["num_classes"]
    C1, C2 = kp["c1"], kp["c2"]

    Ho1, Wo1 = H - K + 1, W - K + 1
    Hp1, Wp1 = Ho1 // P, Wo1 // P
    Ho2, Wo2 = Hp1 - K + 1, Wp1 - K + 1
    Hp2, Wp2 = Ho2 // P, Wo2 // P
    OUTP = kp["wf3"].shape[1]

    def kernel(x_ref, w1t_ref, sh1_ref, w2f_ref, sh2_ref,
               wf1_ref, shf1_ref, wf2_ref, shf2_ref, wf3_ref, bf3_ref, o_ref):
        xi = x_ref[0, 0]                                               # (H, W)

        # ---- Conv1 + BN + ReLU: one width-Toeplitz matmul over the whole plane.
        xcat = jnp.concatenate([xi[kh:kh + Ho1, :] for kh in range(K)], axis=1)  # (Ho1, K*W)
        y1 = jnp.dot(xcat, w1t_ref[...], preferred_element_type=jnp.float32)
        y1 = jnp.maximum(y1 + sh1_ref[...], 0.0)                       # (Ho1, Wo1*C1)

        # ---- MaxPool PxP (floor): rows via reshape+max, cols via lane-block max.
        yr = y1[:P * Hp1, :].reshape(Hp1, P, Wo1 * C1).max(axis=1)     # (Hp1, Wo1*C1)
        cols = []
        for pw in range(Wp1):
            blk = yr[:, (P * pw) * C1:(P * pw + 1) * C1]
            for q in range(1, P):
                blk = jnp.maximum(blk, yr[:, (P * pw + q) * C1:(P * pw + q + 1) * C1])
            cols.append(blk[:, None, :])                               # (Hp1, 1, C1)
        x1 = jnp.concatenate(cols, axis=1)                             # (Hp1, Wp1, C1)

        # ---- Conv2 + BN + ReLU: whole-plane im2col, a single MXU matmul.
        taps = [x1[kh:kh + Ho2, kw:kw + Wo2, :] for kh in range(K) for kw in range(K)]
        xc2 = jnp.concatenate(taps, axis=2).reshape(Ho2 * Wo2, K * K * C1)
        y2 = jnp.dot(xc2, w2f_ref[...], preferred_element_type=jnp.float32)
        y2 = jnp.maximum(y2 + sh2_ref[...], 0.0)                       # (Ho2*Wo2, C2)

        # ---- MaxPool PxP + NHWC flatten, fused (fc1 rows were pre-permuted to match).
        pieces = []
        for ph in range(Hp2):
            for pw in range(Wp2):
                m = y2[(P * ph) * Wo2 + P * pw:(P * ph) * Wo2 + P * pw + 1, :]
                for dh in range(P):
                    for dw in range(P):
                        if dh == 0 and dw == 0:
                            continue
                        r = (P * ph + dh) * Wo2 + (P * pw + dw)
                        m = jnp.maximum(m, y2[r:r + 1, :])
                pieces.append(m)                                       # (1, C2)
        flat = jnp.concatenate(pieces, axis=1)                         # (1, Hp2*Wp2*C2)

        # ---- MLP head (BN folded into weights/shifts); lane-dense padded logits.
        h = jnp.maximum(jnp.dot(flat, wf1_ref[...],
                                preferred_element_type=jnp.float32) + shf1_ref[...], 0.0)
        h = jnp.maximum(jnp.dot(h, wf2_ref[...],
                                preferred_element_type=jnp.float32) + shf2_ref[...], 0.0)
        o_ref[0] = jnp.dot(h, wf3_ref[...],
                           preferred_element_type=jnp.float32) + bf3_ref[...]

    weights = [kp["w1t"], kp["sh1t"], kp["w2f"], kp["sh2"],
               kp["wf1"], kp["shf1"], kp["wf2"], kp["shf2"], kp["wf3"], kp["bf3"]]

    def _wspec(a):
        n = a.ndim
        return pl.BlockSpec(a.shape, lambda b, n=n: (0,) * n)

    out = pl.pallas_call(
        kernel,
        out_shape=jax.ShapeDtypeStruct((B, 1, OUTP), jnp.float32),
        grid=(B,),
        in_specs=[pl.BlockSpec((1, 1, H, W), lambda b: (b, 0, 0, 0))]
                 + [_wspec(a) for a in weights],
        out_specs=pl.BlockSpec((1, 1, OUTP), lambda b: (b, 0, 0)),
        compiler_params=pltpu.CompilerParams(
            dimension_semantics=("parallel",),
            vmem_limit_bytes=32 * 1024 * 1024),
    )(x_nchw, *weights)
    return out[:, 0, :nc]


# ---------------------------------------------------------------------------
# Pure-JAX reference (matches PyTorch eval-mode semantics on the raw params)
# ---------------------------------------------------------------------------
def reference_forward(x_nchw, params):
    eps = 1e-5
    P = params["meta"]["pool"]
    x = jnp.transpose(x_nchw, (0, 2, 3, 1))                            # NCHW -> NHWC
    for (w, b, gamma, beta, mean, var) in params["conv"]:
        y = lax.conv_general_dilated(x, w, (1, 1), "VALID",
                                     dimension_numbers=("NHWC", "HWIO", "NHWC"))
        y = (y + b - mean) * (gamma / jnp.sqrt(var + eps)) + beta
        y = jnp.maximum(y, 0.0)
        x = lax.reduce_window(y, -jnp.inf, lax.max, (1, P, P, 1), (1, P, P, 1), "VALID")
    flat = jnp.transpose(x, (0, 3, 1, 2)).reshape(x.shape[0], -1)      # PyTorch NCHW flatten
    (W1, b1, g1, be1, m1, v1), (W2, b2, g2, be2, m2, v2), (W3, b3) = params["fc"]
    h = flat @ W1 + b1
    h = jnp.maximum((h - m1) * (g1 / jnp.sqrt(v1 + eps)) + be1, 0.0)
    h = h @ W2 + b2
    h = jnp.maximum((h - m2) * (g2 / jnp.sqrt(v2 + eps)) + be2, 0.0)
    return h @ W3 + b3


# ---------------------------------------------------------------------------
# Deterministic raw params (same structure as EmotionCNN.__init__) + fold step
# ---------------------------------------------------------------------------
def init_params(key, num_classes, width, height, kernel_size=3, pool=2, layers=(64, 128)):
    params = {"conv": [], "fc": [],
              "meta": dict(num_classes=num_classes, width=width, height=height,
                           ksize=kernel_size, pool=pool)}
    in_c, w_sp, h_sp = 1, width, height
    for out_c in layers:
        key, k1, k2, k3, k4, k5, k6 = jax.random.split(key, 7)
        fan_in = in_c * kernel_size ** 2
        w = jax.random.normal(k1, (kernel_size, kernel_size, in_c, out_c), jnp.float32) / math.sqrt(fan_in)
        b = 0.01 * jax.random.normal(k2, (out_c,), jnp.float32)
        gamma = 1.0 + 0.1 * jax.random.normal(k3, (out_c,), jnp.float32)
        beta = 0.1 * jax.random.normal(k4, (out_c,), jnp.float32)
        mean = 0.05 * jax.random.normal(k5, (out_c,), jnp.float32)
        var = 1.0 + 0.1 * jnp.abs(jax.random.normal(k6, (out_c,), jnp.float32))
        params["conv"].append((w, b, gamma, beta, mean, var))
        in_c = out_c
        w_sp = (w_sp - kernel_size + 1) // pool
        h_sp = (h_sp - kernel_size + 1) // pool

    dims = [in_c * w_sp * h_sp, in_c * 2, in_c * 4, num_classes]
    for i, (din, dout) in enumerate(zip(dims[:-1], dims[1:])):
        key, k1, k2, k3, k4, k5, k6 = jax.random.split(key, 7)
        W = jax.random.normal(k1, (din, dout), jnp.float32) / math.sqrt(din)
        bb = 0.01 * jax.random.normal(k2, (dout,), jnp.float32)
        if i < 2:  # BatchNorm1d follows the first two Linears
            gamma = 1.0 + 0.1 * jax.random.normal(k3, (dout,), jnp.float32)
            beta = 0.1 * jax.random.normal(k4, (dout,), jnp.float32)
            mean = 0.05 * jax.random.normal(k5, (dout,), jnp.float32)
            var = 1.0 + 0.1 * jnp.abs(jax.random.normal(k6, (dout,), jnp.float32))
            params["fc"].append((W, bb, gamma, beta, mean, var))
        else:
            params["fc"].append((W, bb))
    return params


def fold_params(params):
    """Fold BN(eval)+bias into weights/shifts, build the Toeplitz/im2col weight layouts,
    permute fc1 rows to NHWC flatten order, and pad the logits to 128 lanes."""
    eps = 1e-5
    meta = params["meta"]
    K, P, nc = meta["ksize"], meta["pool"], meta["num_classes"]
    H, W = meta["height"], meta["width"]
    (w1, b1, g1, be1, m1, v1), (w2, b2, g2, be2, m2, v2) = params["conv"]
    C1, C2 = w1.shape[-1], w2.shape[-1]
    Ho1, Wo1 = H - K + 1, W - K + 1
    Hp1, Wp1 = Ho1 // P, Wo1 // P
    Ho2, Wo2 = Hp1 - K + 1, Wp1 - K + 1
    Hp2, Wp2 = Ho2 // P, Wo2 // P

    # Conv1: width-Toeplitz weight (K*W, Wo1*C1), BN scale folded in.
    s1 = g1 / jnp.sqrt(v1 + eps)
    t1 = be1 - m1 * s1
    w1s = np.asarray(w1 * s1)                                    # (K, K, 1, C1)
    w1t = np.zeros((K * W, Wo1 * C1), np.float32)
    for kh in range(K):
        for kw in range(K):
            for ow in range(Wo1):
                w1t[kh * W + ow + kw, ow * C1:(ow + 1) * C1] = w1s[kh, kw, 0]
    sh1t = jnp.tile(b1 * s1 + t1, Wo1)[None, :]                  # (1, Wo1*C1)

    # Conv2: im2col weight (K*K*C1, C2), BN scale folded in.
    s2 = g2 / jnp.sqrt(v2 + eps)
    t2 = be2 - m2 * s2
    w2f = (w2 * s2).reshape(K * K * C1, C2)
    sh2 = (b2 * s2 + t2)[None, :]

    (W1, bb1, gf1, bef1, mf1, vf1), (W2, bb2, gf2, bef2, mf2, vf2), (W3, bb3) = params["fc"]

    # FC1: rows reordered NCHW-flatten -> NHWC-flatten; BN scale folded into columns.
    sf1 = gf1 / jnp.sqrt(vf1 + eps)
    tf1 = bef1 - mf1 * sf1
    W1p = jnp.transpose(W1.reshape(C2, Hp2, Wp2, -1), (1, 2, 0, 3)).reshape(Hp2 * Wp2 * C2, -1)
    wf1 = W1p * sf1[None, :]
    shf1 = (bb1 * sf1 + tf1)[None, :]

    sf2 = gf2 / jnp.sqrt(vf2 + eps)
    tf2 = bef2 - mf2 * sf2
    wf2 = W2 * sf2[None, :]
    shf2 = (bb2 * sf2 + tf2)[None, :]

    # FC3: pad logits to a lane-dense 128-wide slab (sliced back in the wrapper).
    OUTP = 128
    wf3 = jnp.zeros((W3.shape[0], OUTP), jnp.float32).at[:, :nc].set(W3)
    bf3 = jnp.zeros((1, OUTP), jnp.float32).at[0, :nc].set(bb3)

    return dict(w1t=jnp.asarray(w1t), sh1t=sh1t, w2f=w2f, sh2=sh2,
                wf1=wf1, shf1=shf1, wf2=wf2, shf2=shf2, wf3=wf3, bf3=bf3,
                ksize=K, pool=P, num_classes=nc, c1=int(C1), c2=int(C2))


if __name__ == "__main__":
    B, num_classes, width, height = 2, 7, 16, 16
    key = jax.random.PRNGKey(0)
    kx, kparam = jax.random.split(key)
    x = jax.random.normal(kx, (B, 1, height, width), jnp.float32)   # NCHW like PyTorch
    params = init_params(kparam, num_classes, width, height)
    kp = fold_params(params)

    out = emotion_cnn_forward(x, kp)
    out = jax.block_until_ready(out)

    ref = reference_forward(x, params)
    assert out.shape == (B, num_classes), out.shape
    max_err = float(jnp.max(jnp.abs(out - ref)))
    assert jnp.allclose(out, ref, atol=1e-3, rtol=1e-3), max_err
    print("KERNEL_OK")
</pallas_src>

<mosaic_0001>
module attributes {stable_mosaic.version = 11 : i64} {
  func.func @kernel(%arg0: i32, %arg1: memref<1x1x16x16xf32, #tpu.memory_space<vmem>>, %arg2: memref<48x896xf32, #tpu.memory_space<vmem>>, %arg3: memref<1x896xf32, #tpu.memory_space<vmem>>, %arg4: memref<576x128xf32, #tpu.memory_space<vmem>>, %arg5: memref<1x128xf32, #tpu.memory_space<vmem>>, %arg6: memref<512x256xf32, #tpu.memory_space<vmem>>, %arg7: memref<1x256xf32, #tpu.memory_space<vmem>>, %arg8: memref<256x512xf32, #tpu.memory_space<vmem>>, %arg9: memref<1x512xf32, #tpu.memory_space<vmem>>, %arg10: memref<512x128xf32, #tpu.memory_space<vmem>>, %arg11: memref<1x128xf32, #tpu.memory_space<vmem>>, %arg12: memref<1x1x128xf32, #tpu.memory_space<vmem>>) attributes {dimension_semantics = [#tpu.dimension_semantics<parallel>], iteration_bounds = array<i64: 2>, scalar_prefetch = 0 : i64, scratch_operands = 0 : i64, tpu.core_type = #tpu.core_type<tc>, window_params = [{transform_indices = @transform_0, window_bounds = array<i64: 1, 1, 16, 16>}, {pipeline_mode = #tpu.pipeline_mode<synchronous>, transform_indices = @transform_1, window_bounds = array<i64: 48, 896>}, {pipeline_mode = #tpu.pipeline_mode<synchronous>, transform_indices = @transform_2, window_bounds = array<i64: 1, 896>}, {pipeline_mode = #tpu.pipeline_mode<synchronous>, transform_indices = @transform_3, window_bounds = array<i64: 576, 128>}, {pipeline_mode = #tpu.pipeline_mode<synchronous>, transform_indices = @transform_4, window_bounds = array<i64: 1, 128>}, {pipeline_mode = #tpu.pipeline_mode<synchronous>, transform_indices = @transform_5, window_bounds = array<i64: 512, 256>}, {pipeline_mode = #tpu.pipeline_mode<synchronous>, transform_indices = @transform_6, window_bounds = array<i64: 1, 256>}, {pipeline_mode = #tpu.pipeline_mode<synchronous>, transform_indices = @transform_7, window_bounds = array<i64: 256, 512>}, {pipeline_mode = #tpu.pipeline_mode<synchronous>, transform_indices = @transform_8, window_bounds = array<i64: 1, 512>}, {pipeline_mode = #tpu.pipeline_mode<synchronous>, transform_indices = @transform_9, window_bounds = array<i64: 512, 128>}, {pipeline_mode = #tpu.pipeline_mode<synchronous>, transform_indices = @transform_10, window_bounds = array<i64: 1, 128>}, {transform_indices = @transform_11, window_bounds = array<i64: 1, 1, 128>}]} {
    %c0 = arith.constant 0 : index
    %c0_0 = arith.constant 0 : index
    %c0_1 = arith.constant 0 : index
    %c0_2 = arith.constant 0 : index
    %0 = vector.load %arg1[%c0, %c0_0, %c0_1, %c0_2] : memref<1x1x16x16xf32, #tpu.memory_space<vmem>>, vector<1x1x16x16xf32>
    %1 = vector.shape_cast %0 : vector<1x1x16x16xf32> to vector<16x16xf32>
    %2 = vector.extract_strided_slice %1 {offsets = [0, 0], sizes = [14, 16], strides = [1, 1]} : vector<16x16xf32> to vector<14x16xf32>
    %3 = vector.extract_strided_slice %1 {offsets = [1, 0], sizes = [14, 16], strides = [1, 1]} : vector<16x16xf32> to vector<14x16xf32>
    %4 = vector.extract_strided_slice %1 {offsets = [2, 0], sizes = [14, 16], strides = [1, 1]} : vector<16x16xf32> to vector<14x16xf32>
    %5 = tpu.concatenate %2, %3, %4 in 1 : vector<14x16xf32>, vector<14x16xf32>, vector<14x16xf32> -> vector<14x48xf32>
    %c0_3 = arith.constant 0 : index
    %c0_4 = arith.constant 0 : index
    %6 = vector.load %arg2[%c0_3, %c0_4] : memref<48x896xf32, #tpu.memory_space<vmem>>, vector<48x896xf32>
    %cst = arith.constant dense<0.000000e+00> : vector<14x896xf32>
    %7 = tpu.matmul %5, %6, %cst {dimension_numbers = #tpu.dot_dimension_numbers<[1], [0], [0], [1], [0, 0, 1, 1], [], []>} : vector<14x48xf32>, vector<48x896xf32>, vector<14x896xf32> -> vector<14x896xf32>
    %c0_5 = arith.constant 0 : index
    %c0_6 = arith.constant 0 : index
    %8 = vector.load %arg3[%c0_5, %c0_6] : memref<1x896xf32, #tpu.memory_space<vmem>>, vector<1x896xf32>
    %9 = vector.broadcast %8 : vector<1x896xf32> to vector<14x896xf32>
    %10 = arith.addf %7, %9 : vector<14x896xf32>
    %cst_7 = arith.constant 0.000000e+00 : f32
    %11 = vector.broadcast %cst_7 : f32 to vector<14x896xf32>
    %12 = arith.maximumf %10, %11 : vector<14x896xf32>
    %13 = vector.shape_cast %12 : vector<14x896xf32> to vector<7x2x896xf32>
    %cst_8 = arith.constant dense<0xFF800000> : vector<7x896xf32>
    %14 = vector.multi_reduction <maximumf>, %13, %cst_8 [1] : vector<7x2x896xf32> to vector<7x896xf32>
    %15 = vector.extract_strided_slice %14 {offsets = [0, 0], sizes = [7, 64], strides = [1, 1]} : vector<7x896xf32> to vector<7x64xf32>
    %16 = vector.extract_strided_slice %14 {offsets = [0, 64], sizes = [7, 64], strides = [1, 1]} : vector<7x896xf32> to vector<7x64xf32>
    %17 = arith.maximumf %15, %16 : vector<7x64xf32>
    %18 = vector.shape_cast %17 : vector<7x64xf32> to vector<7x1x64xf32>
    %19 = vector.extract_strided_slice %14 {offsets = [0, 128], sizes = [7, 64], strides = [1, 1]} : vector<7x896xf32> to vector<7x64xf32>
    %20 = vector.extract_strided_slice %14 {offsets = [0, 192], sizes = [7, 64], strides = [1, 1]} : vector<7x896xf32> to vector<7x64xf32>
    %21 = arith.maximumf %19, %20 : vector<7x64xf32>
    %22 = vector.shape_cast %21 : vector<7x64xf32> to vector<7x1x64xf32>
    %23 = vector.extract_strided_slice %14 {offsets = [0, 256], sizes = [7, 64], strides = [1, 1]} : vector<7x896xf32> to vector<7x64xf32>
    %24 = vector.extract_strided_slice %14 {offsets = [0, 320], sizes = [7, 64], strides = [1, 1]} : vector<7x896xf32> to vector<7x64xf32>
    %25 = arith.maximumf %23, %24 : vector<7x64xf32>
    %26 = vector.shape_cast %25 : vector<7x64xf32> to vector<7x1x64xf32>
    %27 = vector.extract_strided_slice %14 {offsets = [0, 384], sizes = [7, 64], strides = [1, 1]} : vector<7x896xf32> to vector<7x64xf32>
    %28 = vector.extract_strided_slice %14 {offsets = [0, 448], sizes = [7, 64], strides = [1, 1]} : vector<7x896xf32> to vector<7x64xf32>
    %29 = arith.maximumf %27, %28 : vector<7x64xf32>
    %30 = vector.shape_cast %29 : vector<7x64xf32> to vector<7x1x64xf32>
    %31 = vector.extract_strided_slice %14 {offsets = [0, 512], sizes = [7, 64], strides = [1, 1]} : vector<7x896xf32> to vector<7x64xf32>
    %32 = vector.extract_strided_slice %14 {offsets = [0, 576], sizes = [7, 64], strides = [1, 1]} : vector<7x896xf32> to vector<7x64xf32>
    %33 = arith.maximumf %31, %32 : vector<7x64xf32>
    %34 = vector.shape_cast %33 : vector<7x64xf32> to vector<7x1x64xf32>
    %35 = vector.extract_strided_slice %14 {offsets = [0, 640], sizes = [7, 64], strides = [1, 1]} : vector<7x896xf32> to vector<7x64xf32>
    %36 = vector.extract_strided_slice %14 {offsets = [0, 704], sizes = [7, 64], strides = [1, 1]} : vector<7x896xf32> to vector<7x64xf32>
    %37 = arith.maximumf %35, %36 : vector<7x64xf32>
    %38 = vector.shape_cast %37 : vector<7x64xf32> to vector<7x1x64xf32>
    %39 = vector.extract_strided_slice %14 {offsets = [0, 768], sizes = [7, 64], strides = [1, 1]} : vector<7x896xf32> to vector<7x64xf32>
    %40 = vector.extract_strided_slice %14 {offsets = [0, 832], sizes = [7, 64], strides = [1, 1]} : vector<7x896xf32> to vector<7x64xf32>
    %41 = arith.maximumf %39, %40 : vector<7x64xf32>
    %42 = vector.shape_cast %41 : vector<7x64xf32> to vector<7x1x64xf32>
    %43 = tpu.concatenate %18, %22, %26, %30, %34, %38, %42 in 1 : vector<7x1x64xf32>, vector<7x1x64xf32>, vector<7x1x64xf32>, vector<7x1x64xf32>, vector<7x1x64xf32>, vector<7x1x64xf32>, vector<7x1x64xf32> -> vector<7x7x64xf32>
    %44 = vector.extract_strided_slice %43 {offsets = [0, 0, 0], sizes = [5, 5, 64], strides = [1, 1, 1]} : vector<7x7x64xf32> to vector<5x5x64xf32>
    %45 = vector.extract_strided_slice %43 {offsets = [0, 1, 0], sizes = [5, 5, 64], strides = [1, 1, 1]} : vector<7x7x64xf32> to vector<5x5x64xf32>
    %46 = vector.extract_strided_slice %43 {offsets = [0, 2, 0], sizes = [5, 5, 64], strides = [1, 1, 1]} : vector<7x7x64xf32> to vector<5x5x64xf32>
    %47 = vector.extract_strided_slice %43 {offsets = [1, 0, 0], sizes = [5, 5, 64], strides = [1, 1, 1]} : vector<7x7x64xf32> to vector<5x5x64xf32>
    %48 = vector.extract_strided_slice %43 {offsets = [1, 1, 0], sizes = [5, 5, 64], strides = [1, 1, 1]} : vector<7x7x64xf32> to vector<5x5x64xf32>
    %49 = vector.extract_strided_slice %43 {offsets = [1, 2, 0], sizes = [5, 5, 64], strides = [1, 1, 1]} : vector<7x7x64xf32> to vector<5x5x64xf32>
    %50 = vector.extract_strided_slice %43 {offsets = [2, 0, 0], sizes = [5, 5, 64], strides = [1, 1, 1]} : vector<7x7x64xf32> to vector<5x5x64xf32>
    %51 = vector.extract_strided_slice %43 {offsets = [2, 1, 0], sizes = [5, 5, 64], strides = [1, 1, 1]} : vector<7x7x64xf32> to vector<5x5x64xf32>
    %52 = vector.extract_strided_slice %43 {offsets = [2, 2, 0], sizes = [5, 5, 64], strides = [1, 1, 1]} : vector<7x7x64xf32> to vector<5x5x64xf32>
    %53 = tpu.concatenate %44, %45, %46, %47, %48, %49, %50, %51, %52 in 2 : vector<5x5x64xf32>, vector<5x5x64xf32>, vector<5x5x64xf32>, vector<5x5x64xf32>, vector<5x5x64xf32>, vector<5x5x64xf32>, vector<5x5x64xf32>, vector<5x5x64xf32>, vector<5x5x64xf32> -> vector<5x5x576xf32>
    %54 = vector.shape_cast %53 : vector<5x5x576xf32> to vector<25x576xf32>
    %c0_9 = arith.constant 0 : index
    %c0_10 = arith.constant 0 : index
    %55 = vector.load %arg4[%c0_9, %c0_10] : memref<576x128xf32, #tpu.memory_space<vmem>>, vector<576x128xf32>
    %cst_11 = arith.constant dense<0.000000e+00> : vector<25x128xf32>
    %56 = tpu.matmul %54, %55, %cst_11 {dimension_numbers = #tpu.dot_dimension_numbers<[1], [0], [0], [1], [0, 0, 1, 1], [], []>} : vector<25x576xf32>, vector<576x128xf32>, vector<25x128xf32> -> vector<25x128xf32>
    %c0_12 = arith.constant 0 : index
    %c0_13 = arith.constant 0 : index
    %57 = vector.load %arg5[%c0_12, %c0_13] : memref<1x128xf32, #tpu.memory_space<vmem>>, vector<1x128xf32>
    %58 = vector.broadcast %57 : vector<1x128xf32> to vector<25x128xf32>
    %59 = arith.addf %56, %58 : vector<25x128xf32>
    %cst_14 = arith.constant 0.000000e+00 : f32
    %60 = vector.broadcast %cst_14 : f32 to vector<25x128xf32>
    %61 = arith.maximumf %59, %60 : vector<25x128xf32>
    %62 = vector.extract_strided_slice %61 {offsets = [0, 0], sizes = [1, 128], strides = [1, 1]} : vector<25x128xf32> to vector<1x128xf32>
    %63 = vector.extract_strided_slice %61 {offsets = [1, 0], sizes = [1, 128], strides = [1, 1]} : vector<25x128xf32> to vector<1x128xf32>
    %64 = arith.maximumf %62, %63 : vector<1x128xf32>
    %65 = vector.extract_strided_slice %61 {offsets = [5, 0], sizes = [1, 128], strides = [1, 1]} : vector<25x128xf32> to vector<1x128xf32>
    %66 = arith.maximumf %64, %65 : vector<1x128xf32>
    %67 = vector.extract_strided_slice %61 {offsets = [6, 0], sizes = [1, 128], strides = [1, 1]} : vector<25x128xf32> to vector<1x128xf32>
    %68 = arith.maximumf %66, %67 : vector<1x128xf32>
    %69 = vector.extract_strided_slice %61 {offsets = [2, 0], sizes = [1, 128], strides = [1, 1]} : vector<25x128xf32> to vector<1x128xf32>
    %70 = vector.extract_strided_slice %61 {offsets = [3, 0], sizes = [1, 128], strides = [1, 1]} : vector<25x128xf32> to vector<1x128xf32>
    %71 = arith.maximumf %69, %70 : vector<1x128xf32>
    %72 = vector.extract_strided_slice %61 {offsets = [7, 0], sizes = [1, 128], strides = [1, 1]} : vector<25x128xf32> to vector<1x128xf32>
    %73 = arith.maximumf %71, %72 : vector<1x128xf32>
    %74 = vector.extract_strided_slice %61 {offsets = [8, 0], sizes = [1, 128], strides = [1, 1]} : vector<25x128xf32> to vector<1x128xf32>
    %75 = arith.maximumf %73, %74 : vector<1x128xf32>
    %76 = vector.extract_strided_slice %61 {offsets = [10, 0], sizes = [1, 128], strides = [1, 1]} : vector<25x128xf32> to vector<1x128xf32>
    %77 = vector.extract_strided_slice %61 {offsets = [11, 0], sizes = [1, 128], strides = [1, 1]} : vector<25x128xf32> to vector<1x128xf32>
    %78 = arith.maximumf %76, %77 : vector<1x128xf32>
    %79 = vector.extract_strided_slice %61 {offsets = [15, 0], sizes = [1, 128], strides = [1, 1]} : vector<25x128xf32> to vector<1x128xf32>
    %80 = arith.maximumf %78, %79 : vector<1x128xf32>
    %81 = vector.extract_strided_slice %61 {offsets = [16, 0], sizes = [1, 128], strides = [1, 1]} : vector<25x128xf32> to vector<1x128xf32>
    %82 = arith.maximumf %80, %81 : vector<1x128xf32>
    %83 = vector.extract_strided_slice %61 {offsets = [12, 0], sizes = [1, 128], strides = [1, 1]} : vector<25x128xf32> to vector<1x128xf32>
    %84 = vector.extract_strided_slice %61 {offsets = [13, 0], sizes = [1, 128], strides = [1, 1]} : vector<25x128xf32> to vector<1x128xf32>
    %85 = arith.maximumf %83, %84 : vector<1x128xf32>
    %86 = vector.extract_strided_slice %61 {offsets = [17, 0], sizes = [1, 128], strides = [1, 1]} : vector<25x128xf32> to vector<1x128xf32>
    %87 = arith.maximumf %85, %86 : vector<1x128xf32>
    %88 = vector.extract_strided_slice %61 {offsets = [18, 0], sizes = [1, 128], strides = [1, 1]} : vector<25x128xf32> to vector<1x128xf32>
    %89 = arith.maximumf %87, %88 : vector<1x128xf32>
    %90 = tpu.concatenate %68, %75, %82, %89 in 1 : vector<1x128xf32>, vector<1x128xf32>, vector<1x128xf32>, vector<1x128xf32> -> vector<1x512xf32>
    %c0_15 = arith.constant 0 : index
    %c0_16 = arith.constant 0 : index
    %91 = vector.load %arg6[%c0_15, %c0_16] : memref<512x256xf32, #tpu.memory_space<vmem>>, vector<512x256xf32>
    %cst_17 = arith.constant dense<0.000000e+00> : vector<1x256xf32>
    %92 = tpu.matmul %90, %91, %cst_17 {dimension_numbers = #tpu.dot_dimension_numbers<[1], [0], [0], [1], [0, 0, 1, 1], [], []>} : vector<1x512xf32>, vector<512x256xf32>, vector<1x256xf32> -> vector<1x256xf32>
    %c0_18 = arith.constant 0 : index
    %c0_19 = arith.constant 0 : index
    %93 = vector.load %arg7[%c0_18, %c0_19] : memref<1x256xf32, #tpu.memory_space<vmem>>, vector<1x256xf32>
    %94 = arith.addf %92, %93 : vector<1x256xf32>
    %cst_20 = arith.constant 0.000000e+00 : f32
    %95 = vector.broadcast %cst_20 : f32 to vector<1x256xf32>
    %96 = arith.maximumf %94, %95 : vector<1x256xf32>
    %c0_21 = arith.constant 0 : index
    %c0_22 = arith.constant 0 : index
    %97 = vector.load %arg8[%c0_21, %c0_22] : memref<256x512xf32, #tpu.memory_space<vmem>>, vector<256x512xf32>
    %cst_23 = arith.constant dense<0.000000e+00> : vector<1x512xf32>
    %98 = tpu.matmul %96, %97, %cst_23 {dimension_numbers = #tpu.dot_dimension_numbers<[1], [0], [0], [1], [0, 0, 1, 1], [], []>} : vector<1x256xf32>, vector<256x512xf32>, vector<1x512xf32> -> vector<1x512xf32>
    %c0_24 = arith.constant 0 : index
    %c0_25 = arith.constant 0 : index
    %99 = vector.load %arg9[%c0_24, %c0_25] : memref<1x512xf32, #tpu.memory_space<vmem>>, vector<1x512xf32>
    %100 = arith.addf %98, %99 : vector<1x512xf32>
    %cst_26 = arith.constant 0.000000e+00 : f32
    %101 = vector.broadcast %cst_26 : f32 to vector<1x512xf32>
    %102 = arith.maximumf %100, %101 : vector<1x512xf32>
    %c0_27 = arith.constant 0 : index
    %c0_28 = arith.constant 0 : index
    %103 = vector.load %arg10[%c0_27, %c0_28] : memref<512x128xf32, #tpu.memory_space<vmem>>, vector<512x128xf32>
    %cst_29 = arith.constant dense<0.000000e+00> : vector<1x128xf32>
    %104 = tpu.matmul %102, %103, %cst_29 {dimension_numbers = #tpu.dot_dimension_numbers<[1], [0], [0], [1], [0, 0, 1, 1], [], []>} : vector<1x512xf32>, vector<512x128xf32>, vector<1x128xf32> -> vector<1x128xf32>
    %c0_30 = arith.constant 0 : index
    %c0_31 = arith.constant 0 : index
    %105 = vector.load %arg11[%c0_30, %c0_31] : memref<1x128xf32, #tpu.memory_space<vmem>>, vector<1x128xf32>
    %106 = arith.addf %104, %105 : vector<1x128xf32>
    %c0_32 = arith.constant 0 : index
    %c0_33 = arith.constant 0 : index
    %c0_34 = arith.constant 0 : index
    %107 = vector.load %arg12[%c0_32, %c0_33, %c0_34] : memref<1x1x128xf32, #tpu.memory_space<vmem>>, vector<1x1x128xf32>
    %108 = vector.shape_cast %107 : vector<1x1x128xf32> to vector<1x128xf32>
    %109 = vector.shape_cast %106 : vector<1x128xf32> to vector<1x1x128xf32>
    tpu.vector_store %arg12[%c0_32, %c0_33, %c0_34], %109 {strides = array<i32>} : memref<1x1x128xf32, #tpu.memory_space<vmem>>, vector<1x1x128xf32>,
    return
  }
  func.func @transform_0(%arg0: i32) -> (i32, i32, i32, i32) {
    %c0_i32 = arith.constant 0 : i32
    %c0_i32_0 = arith.constant 0 : i32
    %c0_i32_1 = arith.constant 0 : i32
    %c0_i32_2 = arith.constant 0 : i32
    return %arg0, %c0_i32, %c0_i32_0, %c0_i32_1 : i32, i32, i32, i32
  }
  func.func @transform_1(%arg0: i32) -> (i32, i32) {
    %c0_i32 = arith.constant 0 : i32
    %c0_i32_0 = arith.constant 0 : i32
    %c0_i32_1 = arith.constant 0 : i32
    return %c0_i32, %c0_i32_0 : i32, i32
  }
  func.func @transform_2(%arg0: i32) -> (i32, i32) {
    %c0_i32 = arith.constant 0 : i32
    %c0_i32_0 = arith.constant 0 : i32
    %c0_i32_1 = arith.constant 0 : i32
    return %c0_i32, %c0_i32_0 : i32, i32
  }
  func.func @transform_3(%arg0: i32) -> (i32, i32) {
    %c0_i32 = arith.constant 0 : i32
    %c0_i32_0 = arith.constant 0 : i32
    %c0_i32_1 = arith.constant 0 : i32
    return %c0_i32, %c0_i32_0 : i32, i32
  }
  func.func @transform_4(%arg0: i32) -> (i32, i32) {
    %c0_i32 = arith.constant 0 : i32
    %c0_i32_0 = arith.constant 0 : i32
    %c0_i32_1 = arith.constant 0 : i32
    return %c0_i32, %c0_i32_0 : i32, i32
  }
  func.func @transform_5(%arg0: i32) -> (i32, i32) {
    %c0_i32 = arith.constant 0 : i32
    %c0_i32_0 = arith.constant 0 : i32
    %c0_i32_1 = arith.constant 0 : i32
    return %c0_i32, %c0_i32_0 : i32, i32
  }
  func.func @transform_6(%arg0: i32) -> (i32, i32) {
    %c0_i32 = arith.constant 0 : i32
    %c0_i32_0 = arith.constant 0 : i32
    %c0_i32_1 = arith.constant 0 : i32
    return %c0_i32, %c0_i32_0 : i32, i32
  }
  func.func @transform_7(%arg0: i32) -> (i32, i32) {
    %c0_i32 = arith.constant 0 : i32
    %c0_i32_0 = arith.constant 0 : i32
    %c0_i32_1 = arith.constant 0 : i32
    return %c0_i32, %c0_i32_0 : i32, i32
  }
  func.func @transform_8(%arg0: i32) -> (i32, i32) {
    %c0_i32 = arith.constant 0 : i32
    %c0_i32_0 = arith.constant 0 : i32
    %c0_i32_1 = arith.constant 0 : i32
    return %c0_i32, %c0_i32_0 : i32, i32
  }
  func.func @transform_9(%arg0: i32) -> (i32, i32) {
    %c0_i32 = arith.constant 0 : i32
    %c0_i32_0 = arith.constant 0 : i32
    %c0_i32_1 = arith.constant 0 : i32
    return %c0_i32, %c0_i32_0 : i32, i32
  }
  func.func @transform_10(%arg0: i32) -> (i32, i32) {
    %c0_i32 = arith.constant 0 : i32
    %c0_i32_0 = arith.constant 0 : i32
    %c0_i32_1 = arith.constant 0 : i32
    return %c0_i32, %c0_i32_0 : i32, i32
  }
  func.func @transform_11(%arg0: i32) -> (i32, i32, i32) {
    %c0_i32 = arith.constant 0 : i32
    %c0_i32_0 = arith.constant 0 : i32
    %c0_i32_1 = arith.constant 0 : i32
    return %arg0, %c0_i32, %c0_i32_0 : i32, i32, i32
  }
}

</mosaic_0001>

<llo_original>
// kernel: tpu_custom_call.1
$region0: #{tpu_custom_call.1}
  #allocation0 [shape = 'u32[]', space=smem, size = 0x4, offset = 0x4, fixed_abs, tag = 'smem constant byte address 0x4 - core index']
  #allocation1 [shape = 'u32[144,128]{1,0:T(1,128)}', space=vmem, size = 0x12000, scoped, tag = 'internal scratch']
  %s0 = inlined_call_operand.hbm [shape: f32[2,1,16,16], index: 0, kind: input, shape index: {}]
  %s1 = inlined_call_operand.hbm [shape: f32[48,896], index: 1, kind: input, shape index: {}]
  %s2 = inlined_call_operand.hbm [shape: f32[1,896], index: 2, kind: input, shape index: {}]
  %s3 = inlined_call_operand.hbm [shape: f32[576,128], index: 3, kind: input, shape index: {}]
  %s4 = inlined_call_operand.vmem [shape: f32[1,128], index: 4, kind: input, shape index: {}]
  %s5 = inlined_call_operand.hbm [shape: f32[512,256], index: 5, kind: input, shape index: {}]
  %s6 = inlined_call_operand.vmem [shape: f32[1,256], index: 6, kind: input, shape index: {}]
  %s7 = inlined_call_operand.hbm [shape: f32[256,512], index: 7, kind: input, shape index: {}]
  %s8 = inlined_call_operand.vmem [shape: f32[1,512], index: 8, kind: input, shape index: {}]
  %s9 = inlined_call_operand.hbm [shape: f32[512,128], index: 9, kind: input, shape index: {}]
  %s10 = inlined_call_operand.vmem [shape: f32[1,128], index: 10, kind: input, shape index: {}]
  %s11 = inlined_call_operand.hbm [shape: f32[2,1,128], index: 11, kind: output, shape index: {}]
  %s12 = sld [smem:[#allocation0]]
  $region105: #{tpu_custom_call.1} parent=0
    _
  %s14 = ssub.s32 1, %s12
  %s15 = scalar_select 0, %s14, %s12
  $region1: #{tpu_custom_call.1} parent=0
    #allocation2 [shape = 'u8[16384]{0}', space=vmem, size = 0x4000, scoped, tag = 'input window, operand 0']
    #allocation3 [shape = 's32[2]{0}', space=sflag, size = 0x8, scoped, tag = 'scoped memory for tpu_custom_call.1']
    #allocation4 [shape = 's32[2]{0}', space=sflag, size = 0x8, scoped, tag = 'scoped memory for tpu_custom_call.1']
    #allocation5 [shape = 'u8[172032]{0}', space=vmem, size = 0x2a000, scoped, tag = 'input window, operand 1, single buffered']
    #allocation6 [shape = 's32[1]{0}', space=sflag, size = 0x4, scoped, tag = 'scoped memory for tpu_custom_call.1']
    #allocation7 [shape = 'u8[3584]{0}', space=vmem, size = 0x1000, scoped, tag = 'input window, operand 2, single buffered']
    #allocation8 [shape = 'u8[294912]{0}', space=vmem, size = 0x48000, scoped, tag = 'input window, operand 3, single buffered']
    #allocation9 [shape = 's32[1]{0}', space=sflag, size = 0x4, scoped, tag = 'scoped memory for tpu_custom_call.1']
    #allocation10 [shape = 'u8[524288]{0}', space=vmem, size = 0x80000, scoped, tag = 'input window, operand 5, single buffered']
    #allocation11 [shape = 'u8[524288]{0}', space=vmem, size = 0x80000, scoped, tag = 'input window, operand 7, single buffered']
    #allocation12 [shape = 's32[1]{0}', space=sflag, size = 0x4, scoped, tag = 'scoped memory for tpu_custom_call.1']
    #allocation13 [shape = 'u8[262144]{0}', space=vmem, size = 0x40000, scoped, tag = 'input window, operand 9, single buffered']
    #allocation14 [shape = 'u8[1024]{0}', space=vmem, size = 0x400, scoped, tag = 'output window, operand 0']
    %16 = vsyncpa [#allocation3], 0
    %s17 = scalar_lea.sflag [#allocation3], 1
    %18 = vsyncpa %s17, 0
    %19 = vsyncpa [#allocation6], 0
    %20 = vsyncpa [#allocation9], 0
    %21 = vsyncpa [#allocation12], 0
    %22 = vsyncpa [#allocation4], 0
    %s23 = scalar_lea.sflag [#allocation4], 1
    %24 = vsyncpa %s23, 0
    loop: start=0, step=1, limit=4
    $region2: #{tpu_custom_call.1} parent=1 // loop_pre_header
      _
    $region3: #{tpu_custom_call.1} parent=1 // loop_header
      %s26 = sphi 0, %s30
      %p27 = scmp.ge.s32.totalorder %s26, 4
      %s36 = sphi 0, %s38
      %s39 = sphi 0, %s36
      %s40 = sphi 0, %s39
      %s56 = sphi 0, %s40
      %s60 = sphi 0, %s60
      %s62 = sphi 0, %s60
      %s63 = sphi 0, %s62
      %s77 = sphi 0, %s63
      %s81 = sphi 0, %s81
      %s83 = sphi 0, %s81
      %s84 = sphi 0, %s83
      %s98 = sphi 0, %s84
      %s102 = sphi 0, %s102
      %s104 = sphi 0, %s102
      %s105 = sphi 0, %s104
      %s119 = sphi 0, %s105
      %s123 = sphi 0, %s123
      %s125 = sphi 0, %s123
      %s126 = sphi 0, %s125
      %s140 = sphi 0, %s126
      %s144 = sphi 0, %s144
      %s146 = sphi 0, %s144
      %s147 = sphi 0, %s146
      %s161 = sphi 0, %s147
      %s165 = sphi 0, %s165
      %s167 = sphi 0, %s165
      %s168 = sphi 0, %s167
      %s182 = sphi 0, %s168
      %s186 = sphi 0, %s186
      %s188 = sphi 0, %s186
      %s189 = sphi 0, %s188
      %s203 = sphi 0, %s189
      %s207 = sphi 0, %s207
      %s209 = sphi 0, %s207
      %s210 = sphi 0, %s209
      %s224 = sphi 0, %s210
      %s228 = sphi 0, %s228
      %s230 = sphi 0, %s228
      %s231 = sphi 0, %s230
      %s245 = sphi 0, %s231
      %s249 = sphi 0, %s249
      %s251 = sphi 0, %s249
      %s252 = sphi 0, %s251
      %s266 = sphi 0, %s252
      %s272 = sphi 0, %s274
      %s275 = sphi 0, %s272
      %s276 = sphi 0, %s275
      %s292 = sphi 0, %s276
    $region4: #{tpu_custom_call.1} parent=1 // loop_header_branch
      %29 = sbr.rel (%p27) target = $region8
    $region5: #{tpu_custom_call.1} parent=1 // loop_body
      %s31 = ssub.s32 %s26, 1
      %s32 = ssub.s32 %s26, 2
      %s33 = sadd.s32 %s26, 1
      %s34 = ssub.s32 %s26, %s33
      %p35 = scmp.eq.s32.totalorder %s34, 0
      %s37 = sadd.s32 %s36, 1
      %s38 = scalar_select %p35, %s36, %s37
      %p41 = pneg %p35
      %p42 = scmp.eq.s32.totalorder %s26, 1
      %p43 = por %p41, %p42
      %p44 = scmp.ne.s32.totalorder %s36, %s39
      %p45 = scmp.eq.s32.totalorder %s26, 0
      %p46 = por %p44, %p45
      %p47 = scmp.ne.s32.totalorder %s36, %s39
      %p48 = scmp.eq.s32.totalorder %s31, 1
      %p49 = por %p47, %p48
      %p50 = scmp.ne.s32.totalorder %s39, %s40
      %p51 = scmp.eq.s32.totalorder %s31, 0
      %p52 = por %p50, %p51
      %p53 = scmp.ne.s32.totalorder %s39, %s40
      %p54 = scmp.eq.s32.totalorder %s32, 1
      %p55 = por %p53, %p54
      %p57 = scmp.ne.s32.totalorder %s40, %s56
      %p58 = scmp.eq.s32.totalorder %s32, 0
      %p59 = por %p57, %p58
      %s61 = sadd.s32 %s60, 1
      %p64 = scmp.eq.s32.totalorder %s26, 1
      %p65 = scmp.ne.s32.totalorder %s60, %s62
      %p66 = scmp.eq.s32.totalorder %s26, 0
      %p67 = por %p65, %p66
      %p68 = scmp.ne.s32.totalorder %s60, %s62
      %p69 = scmp.eq.s32.totalorder %s31, 1
      %p70 = por %p68, %p69
      %p71 = scmp.ne.s32.totalorder %s62, %s63
      %p72 = scmp.eq.s32.totalorder %s31, 0
      %p73 = por %p71, %p72
      %p74 = scmp.ne.s32.totalorder %s62, %s63
      %p75 = scmp.eq.s32.totalorder %s32, 1
      %p76 = por %p74, %p75
      %p78 = scmp.ne.s32.totalorder %s63, %s77
      %p79 = scmp.eq.s32.totalorder %s32, 0
      %p80 = por %p78, %p79
      %s82 = sadd.s32 %s81, 1
      %p85 = scmp.eq.s32.totalorder %s26, 1
      %p86 = scmp.ne.s32.totalorder %s81, %s83
      %p87 = scmp.eq.s32.totalorder %s26, 0
      %p88 = por %p86, %p87
      %p89 = scmp.ne.s32.totalorder %s81, %s83
      %p90 = scmp.eq.s32.totalorder %s31, 1
      %p91 = por %p89, %p90
      %p92 = scmp.ne.s32.totalorder %s83, %s84
      %p93 = scmp.eq.s32.totalorder %s31, 0
      %p94 = por %p92, %p93
      %p95 = scmp.ne.s32.totalorder %s83, %s84
      %p96 = scmp.eq.s32.totalorder %s32, 1
      %p97 = por %p95, %p96
      %p99 = scmp.ne.s32.totalorder %s84, %s98
      %p100 = scmp.eq.s32.totalorder %s32, 0
      %p101 = por %p99, %p100
      %s103 = sadd.s32 %s102, 1
      %p106 = scmp.eq.s32.totalorder %s26, 1
      %p107 = scmp.ne.s32.totalorder %s102, %s104
      %p108 = scmp.eq.s32.totalorder %s26, 0
      %p109 = por %p107, %p108
      %p110 = scmp.ne.s32.totalorder %s102, %s104
      %p111 = scmp.eq.s32.totalorder %s31, 1
      %p112 = por %p110, %p111
      %p113 = scmp.ne.s32.totalorder %s104, %s105
      %p114 = scmp.eq.s32.totalorder %s31, 0
      %p115 = por %p113, %p114
      %p116 = scmp.ne.s32.totalorder %s104, %s105
      %p117 = scmp.eq.s32.totalorder %s32, 1
      %p118 = por %p116, %p117
      %p120 = scmp.ne.s32.totalorder %s105, %s119
      %p121 = scmp.eq.s32.totalorder %s32, 0
      %p122 = por %p120, %p121
      %s124 = sadd.s32 %s123, 1
      %p127 = scmp.eq.s32.totalorder %s26, 1
      %p128 = scmp.ne.s32.totalorder %s123, %s125
      %p129 = scmp.eq.s32.totalorder %s26, 0
      %p130 = por %p128, %p129
      %p131 = scmp.ne.s32.totalorder %s123, %s125
      %p132 = scmp.eq.s32.totalorder %s31, 1
      %p133 = por %p131, %p132
      %p134 = scmp.ne.s32.totalorder %s125, %s126
      %p135 = scmp.eq.s32.totalorder %s31, 0
      %p136 = por %p134, %p135
      %p137 = scmp.ne.s32.totalorder %s125, %s126
      %p138 = scmp.eq.s32.totalorder %s32, 1
      %p139 = por %p137, %p138
      %p141 = scmp.ne.s32.totalorder %s126, %s140
      %p142 = scmp.eq.s32.totalorder %s32, 0
      %p143 = por %p141, %p142
      %s145 = sadd.s32 %s144, 1
      %p148 = scmp.eq.s32.totalorder %s26, 1
      %p149 = scmp.ne.s32.totalorder %s144, %s146
      %p150 = scmp.eq.s32.totalorder %s26, 0
      %p151 = por %p149, %p150
      %p152 = scmp.ne.s32.totalorder %s144, %s146
      %p153 = scmp.eq.s32.totalorder %s31, 1
      %p154 = por %p152, %p153
      %p155 = scmp.ne.s32.totalorder %s146, %s147
      %p156 = scmp.eq.s32.totalorder %s31, 0
      %p157 = por %p155, %p156
      %p158 = scmp.ne.s32.totalorder %s146, %s147
      %p159 = scmp.eq.s32.totalorder %s32, 1
      %p160 = por %p158, %p159
      %p162 = scmp.ne.s32.totalorder %s147, %s161
      %p163 = scmp.eq.s32.totalorder %s32, 0
      %p164 = por %p162, %p163
      %s166 = sadd.s32 %s165, 1
      %p169 = scmp.eq.s32.totalorder %s26, 1
      %p170 = scmp.ne.s32.totalorder %s165, %s167
      %p171 = scmp.eq.s32.totalorder %s26, 0
      %p172 = por %p170, %p171
      %p173 = scmp.ne.s32.totalorder %s165, %s167
      %p174 = scmp.eq.s32.totalorder %s31, 1
      %p175 = por %p173, %p174
      %p176 = scmp.ne.s32.totalorder %s167, %s168
      %p177 = scmp.eq.s32.totalorder %s31, 0
      %p178 = por %p176, %p177
      %p179 = scmp.ne.s32.totalorder %s167, %s168
      %p180 = scmp.eq.s32.totalorder %s32, 1
      %p181 = por %p179, %p180
      %p183 = scmp.ne.s32.totalorder %s168, %s182
      %p184 = scmp.eq.s32.totalorder %s32, 0
      %p185 = por %p183, %p184
      %s187 = sadd.s32 %s186, 1
      %p190 = scmp.eq.s32.totalorder %s26, 1
      %p191 = scmp.ne.s32.totalorder %s186, %s188
      %p192 = scmp.eq.s32.totalorder %s26, 0
      %p193 = por %p191, %p192
      %p194 = scmp.ne.s32.totalorder %s186, %s188
      %p195 = scmp.eq.s32.totalorder %s31, 1
      %p196 = por %p194, %p195
      %p197 = scmp.ne.s32.totalorder %s188, %s189
      %p198 = scmp.eq.s32.totalorder %s31, 0
      %p199 = por %p197, %p198
      %p200 = scmp.ne.s32.totalorder %s188, %s189
      %p201 = scmp.eq.s32.totalorder %s32, 1
      %p202 = por %p200, %p201
      %p204 = scmp.ne.s32.totalorder %s189, %s203
      %p205 = scmp.eq.s32.totalorder %s32, 0
      %p206 = por %p204, %p205
      %s208 = sadd.s32 %s207, 1
      %p211 = scmp.eq.s32.totalorder %s26, 1
      %p212 = scmp.ne.s32.totalorder %s207, %s209
      %p213 = scmp.eq.s32.totalorder %s26, 0
      %p214 = por %p212, %p213
      %p215 = scmp.ne.s32.totalorder %s207, %s209
      %p216 = scmp.eq.s32.totalorder %s31, 1
      %p217 = por %p215, %p216
      %p218 = scmp.ne.s32.totalorder %s209, %s210
      %p219 = scmp.eq.s32.totalorder %s31, 0
      %p220 = por %p218, %p219
      %p221 = scmp.ne.s32.totalorder %s209, %s210
      %p222 = scmp.eq.s32.totalorder %s32, 1
      %p223 = por %p221, %p222
      %p225 = scmp.ne.s32.totalorder %s210, %s224
      %p226 = scmp.eq.s32.totalorder %s32, 0
      %p227 = por %p225, %p226
      %s229 = sadd.s32 %s228, 1
      %p232 = scmp.eq.s32.totalorder %s26, 1
      %p233 = scmp.ne.s32.totalorder %s228, %s230
      %p234 = scmp.eq.s32.totalorder %s26, 0
      %p235 = por %p233, %p234
      %p236 = scmp.ne.s32.totalorder %s228, %s230
      %p237 = scmp.eq.s32.totalorder %s31, 1
      %p238 = por %p236, %p237
      %p239 = scmp.ne.s32.totalorder %s230, %s231
      %p240 = scmp.eq.s32.totalorder %s31, 0
      %p241 = por %p239, %p240
      %p242 = scmp.ne.s32.totalorder %s230, %s231
      %p243 = scmp.eq.s32.totalorder %s32, 1
      %p244 = por %p242, %p243
      %p246 = scmp.ne.s32.totalorder %s231, %s245
      %p247 = scmp.eq.s32.totalorder %s32, 0
      %p248 = por %p246, %p247
      %s250 = sadd.s32 %s249, 1
      %p253 = scmp.eq.s32.totalorder %s26, 1
      %p254 = scmp.ne.s32.totalorder %s249, %s251
      %p255 = scmp.eq.s32.totalorder %s26, 0
      %p256 = por %p254, %p255
      %p257 = scmp.ne.s32.totalorder %s249, %s251
      %p258 = scmp.eq.s32.totalorder %s31, 1
      %p259 = por %p257, %p258
      %p260 = scmp.ne.s32.totalorder %s251, %s252
      %p261 = scmp.eq.s32.totalorder %s31, 0
      %p262 = por %p260, %p261
      %p263 = scmp.ne.s32.totalorder %s251, %s252
      %p264 = scmp.eq.s32.totalorder %s32, 1
      %p265 = por %p263, %p264
      %p267 = scmp.ne.s32.totalorder %s252, %s266
      %p268 = scmp.eq.s32.totalorder %s32, 0
      %p269 = por %p267, %p268
      %s270 = ssub.s32 %s26, %s33
      %p271 = scmp.eq.s32.totalorder %s270, 0
      %s273 = sadd.s32 %s272, 1
      %s274 = scalar_select %p271, %s272, %s273
      %p277 = pneg %p271
      %p278 = scmp.eq.s32.totalorder %s26, 1
      %p279 = por %p277, %p278
      %p280 = scmp.ne.s32.totalorder %s272, %s275
      %p281 = scmp.eq.s32.totalorder %s26, 0
      %p282 = por %p280, %p281
      %p283 = scmp.ne.s32.totalorder %s272, %s275
      %p284 = scmp.eq.s32.totalorder %s31, 1
      %p285 = por %p283, %p284
      %p286 = scmp.ne.s32.totalorder %s275, %s276
      %p287 = scmp.eq.s32.totalorder %s31, 0
      %p288 = por %p286, %p287
      %p289 = scmp.ne.s32.totalorder %s275, %s276
      %p290 = scmp.eq.s32.totalorder %s32, 1
      %p291 = por %p289, %p290
      %p293 = scmp.ne.s32.totalorder %s276, %s292
      %p294 = scmp.eq.s32.totalorder %s32, 0
      %p295 = por %p293, %p294
      %p296 = scmp.le.s32.totalorder 1, %s26
      %p297 = scmp.lt.s32.totalorder %s26, 3
      %p298 = pnand %p296, %p297
      %p299 = pneg %p298
      // Predicated region
      $region9: #{tpu_custom_call.1} parent=5 // pred_check
        _
      $region10: #{tpu_custom_call.1} parent=5 // pred_check_branch
        %301 = sbr.rel (%p298) target = $region12
      $region11: #{tpu_custom_call.1} parent=5 // pred_region
        %s302 = ssub.s32 %s26, 1
        // Predicated region
        $region13: #{tpu_custom_call.1} parent=11 // pred_check
          %p303 = pneg %p73
        $region14: #{tpu_custom_call.1} parent=11 // pred_check_branch
          %305 = sbr.rel (%p303) target = $region16
        $region15: #{tpu_custom_call.1} parent=11 // pred_region
          %s307 = ssub.s32 5376, 5376
          %308 = vsyncadd [#allocation6], %s307
          %s309 = sshll.u32 [#allocation5], 4
          %s310 = int_to_ptr.vmem [resolvable:$true] %s309
          %315 = dma.hbm_to_vmem [thread:$0]  %s1, 5376, %s310, [#allocation6], 896, 896, 56
        $region16: #{tpu_custom_call.1} parent=11 // pred_fallthru
          _
        // Predicated region
        $region17: #{tpu_custom_call.1} parent=11 // pred_check
          %p316 = pneg %p94
        $region18: #{tpu_custom_call.1} parent=11 // pred_check_branch
          %318 = sbr.rel (%p316) target = $region20
        $region19: #{tpu_custom_call.1} parent=11 // pred_region
          %s320 = ssub.s32 112, 112
          %321 = vsyncadd [#allocation6], %s320
          %s323 = sshll.u32 [#allocation7], 4
          %s324 = int_to_ptr.vmem [resolvable:$true] %s323
          %326 = dma.hbm_to_vmem [thread:$0]  %s2, 112, %s324, [#allocation6]
        $region20: #{tpu_custom_call.1} parent=11 // pred_fallthru
          _
        // Predicated region
        $region21: #{tpu_custom_call.1} parent=11 // pred_check
          %p327 = pneg %p115
        $region22: #{tpu_custom_call.1} parent=11 // pred_check_branch
          %329 = sbr.rel (%p327) target = $region24
        $region23: #{tpu_custom_call.1} parent=11 // pred_region
          %s331 = ssub.s32 9216, 9216
          %332 = vsyncadd [#allocation9], %s331
          %s333 = sshll.u32 [#allocation8], 4
          %s334 = int_to_ptr.vmem [resolvable:$true] %s333
          %339 = dma.hbm_to_vmem [thread:$0]  %s3, 9216, %s334, [#allocation9], 128, 128, 8
        $region24: #{tpu_custom_call.1} parent=11 // pred_fallthru
          _
        // Predicated region
        $region25: #{tpu_custom_call.1} parent=11 // pred_check
          %p340 = pneg %p136
        $region26: #{tpu_custom_call.1} parent=11 // pred_check_branch
          %342 = sbr.rel (%p340) target = $region28
        $region27: #{tpu_custom_call.1} parent=11 // pred_region
          _
        $region28: #{tpu_custom_call.1} parent=11 // pred_fallthru
          _
        // Predicated region
        $region29: #{tpu_custom_call.1} parent=11 // pred_check
          %p343 = pneg %p157
        $region30: #{tpu_custom_call.1} parent=11 // pred_check_branch
          %345 = sbr.rel (%p343) target = $region32
        $region31: #{tpu_custom_call.1} parent=11 // pred_region
          %s347 = ssub.s32 16384, 16384
          %348 = vsyncadd [#allocation9], %s347
          %s349 = sshll.u32 [#allocation10], 4
          %s350 = int_to_ptr.vmem [resolvable:$true] %s349
          %355 = dma.hbm_to_vmem [thread:$0]  %s5, 16384, %s350, [#allocation9], 256, 256, 16
        $region32: #{tpu_custom_call.1} parent=11 // pred_fallthru
          _
        // Predicated region
        $region33: #{tpu_custom_call.1} parent=11 // pred_check
          %p356 = pneg %p178
        $region34: #{tpu_custom_call.1} parent=11 // pred_check_branch
          %358 = sbr.rel (%p356) target = $region36
        $region35: #{tpu_custom_call.1} parent=11 // pred_region
          _
        $region36: #{tpu_custom_call.1} parent=11 // pred_fallthru
          _
        // Predicated region
        $region37: #{tpu_custom_call.1} parent=11 // pred_check
          %p359 = pneg %p199
        $region38: #{tpu_custom_call.1} parent=11 // pred_check_branch
          %361 = sbr.rel (%p359) target = $region40
        $region39: #{tpu_custom_call.1} parent=11 // pred_region
          %s363 = ssub.s32 16384, 16384
          %364 = vsyncadd [#allocation12], %s363
          %s365 = sshll.u32 [#allocation11], 4
          %s366 = int_to_ptr.vmem [resolvable:$true] %s365
          %371 = dma.hbm_to_vmem [thread:$0]  %s7, 16384, %s366, [#allocation12], 512, 512, 32
        $region40: #{tpu_custom_call.1} parent=11 // pred_fallthru
          _
        // Predicated region
        $region41: #{tpu_custom_call.1} parent=11 // pred_check
          %p372 = pneg %p220
        $region42: #{tpu_custom_call.1} parent=11 // pred_check_branch
          %374 = sbr.rel (%p372) target = $region44
        $region43: #{tpu_custom_call.1} parent=11 // pred_region
          _
        $region44: #{tpu_custom_call.1} parent=11 // pred_fallthru
          _
        // Predicated region
        $region45: #{tpu_custom_call.1} parent=11 // pred_check
          %p375 = pneg %p241
        $region46: #{tpu_custom_call.1} parent=11 // pred_check_branch
          %377 = sbr.rel (%p375) target = $region48
        $region47: #{tpu_custom_call.1} parent=11 // pred_region
          %s379 = ssub.s32 8192, 8192
          %380 = vsyncadd [#allocation12], %s379
          %s381 = sshll.u32 [#allocation13], 4
          %s382 = int_to_ptr.vmem [resolvable:$true] %s381
          %387 = dma.hbm_to_vmem [thread:$0]  %s9, 8192, %s382, [#allocation12], 128, 128, 8
        $region48: #{tpu_custom_call.1} parent=11 // pred_fallthru
          _
        // Predicated region
        $region49: #{tpu_custom_call.1} parent=11 // pred_check
          %p388 = pneg %p262
        $region50: #{tpu_custom_call.1} parent=11 // pred_check_branch
          %390 = sbr.rel (%p388) target = $region52
        $region51: #{tpu_custom_call.1} parent=11 // pred_region
          _
        $region52: #{tpu_custom_call.1} parent=11 // pred_fallthru
          _
      $region12: #{tpu_custom_call.1} parent=5 // pred_fallthru
        _
      %p391 = scmp.lt.s32.totalorder %s26, 2
      // Predicated region
      $region53: #{tpu_custom_call.1} parent=5 // pred_check
        %p392 = pneg %p391
      $region54: #{tpu_custom_call.1} parent=5 // pred_check_branch
        %394 = sbr.rel (%p392) target = $region56
      $region55: #{tpu_custom_call.1} parent=5 // pred_region
        // Predicated region
        $region57: #{tpu_custom_call.1} parent=55 // pred_check
          %p395 = pneg %p46
        $region58: #{tpu_custom_call.1} parent=55 // pred_check_branch
          %397 = sbr.rel (%p395) target = $region60
        $region59: #{tpu_custom_call.1} parent=55 // pred_region
          %s398 = sand.u32 %s36, 1
          %s399 = scalar_lea.sflag [#allocation3], %s398
          %s400 = sand.u32 %s36, 1
          %s401 = smul.addr %s400, 16
          %s402 = scalar_lea.vmem [#allocation2], %s401
          %s404 = ssub.s32 256, 256
          %405 = vsyncadd %s399, %s404
          %s406 = smul.addr %s26, 2
          %s407 = smul.addr %s406, 128
          %s408 = scalar_lea.hbm %s0, %s407
          %s409 = sshll.u32 %s402, 4
          %s410 = int_to_ptr.vmem [resolvable:$true] %s409
          %415 = dma.hbm_to_vmem [thread:$0]  %s408, 256, %s410, %s399, 128, 128, 8
        $region60: #{tpu_custom_call.1} parent=55 // pred_fallthru
          _
      $region56: #{tpu_custom_call.1} parent=5 // pred_fallthru
        _
      %p416 = scmp.le.s32.totalorder 1, %s26
      %p417 = scmp.lt.s32.totalorder %s26, 3
      %p418 = pnand %p416, %p417
      %p419 = pneg %p418
      // Predicated region
      $region61: #{tpu_custom_call.1} parent=5 // pred_check
        _
      $region62: #{tpu_custom_call.1} parent=5 // pred_check_branch
        %421 = sbr.rel (%p418) target = $region64
      $region63: #{tpu_custom_call.1} parent=5 // pred_region
        %s422 = ssub.s32 %s26, 1
        %s423 = sand.u32 %s39, 1
        %s424 = scalar_lea.sflag [#allocation3], %s423
        %s425 = sand.u32 %s39, 1
        %s426 = smul.addr %s425, 16
        %s427 = scalar_lea.vmem [#allocation2], %s426
        // Predicated region
        $region65: #{tpu_custom_call.1} parent=63 // pred_check
          %p428 = pneg %p52
        $region66: #{tpu_custom_call.1} parent=63 // pred_check_branch
          %430 = sbr.rel (%p428) target = $region68
        $region67: #{tpu_custom_call.1} parent=63 // pred_region
          %431 = dma.done %s424, 256
        $region68: #{tpu_custom_call.1} parent=63 // pred_fallthru
          _
        // Predicated region
        $region69: #{tpu_custom_call.1} parent=63 // pred_check
          %p432 = pneg %p73
        $region70: #{tpu_custom_call.1} parent=63 // pred_check_branch
          %434 = sbr.rel (%p432) target = $region72
        $region71: #{tpu_custom_call.1} parent=63 // pred_region
          %435 = dma.done [#allocation6], 5376
        $region72: #{tpu_custom_call.1} parent=63 // pred_fallthru
          _
        // Predicated region
        $region73: #{tpu_custom_call.1} parent=63 // pred_check
          %p436 = pneg %p94
        $region74: #{tpu_custom_call.1} parent=63 // pred_check_branch
          %438 = sbr.rel (%p436) target = $region76
        $region75: #{tpu_custom_call.1} parent=63 // pred_region
          %439 = dma.done [#allocation6], 112
        $region76: #{tpu_custom_call.1} parent=63 // pred_fallthru
          _
        // Predicated region
        $region77: #{tpu_custom_call.1} parent=63 // pred_check
          %p440 = pneg %p115
        $region78: #{tpu_custom_call.1} parent=63 // pred_check_branch
          %442 = sbr.rel (%p440) target = $region80
        $region79: #{tpu_custom_call.1} parent=63 // pred_region
          %443 = dma.done [#allocation9], 9216
        $region80: #{tpu_custom_call.1} parent=63 // pred_fallthru
          _
        // Predicated region
        $region81: #{tpu_custom_call.1} parent=63 // pred_check
          %p444 = pneg %p157
        $region82: #{tpu_custom_call.1} parent=63 // pred_check_branch
          %446 = sbr.rel (%p444) target = $region84
        $region83: #{tpu_custom_call.1} parent=63 // pred_region
          %447 = dma.done [#allocation9], 16384
        $region84: #{tpu_custom_call.1} parent=63 // pred_fallthru
          _
        // Predicated region
        $region85: #{tpu_custom_call.1} parent=63 // pred_check
          %p448 = pneg %p199
        $region86: #{tpu_custom_call.1} parent=63 // pred_check_branch
          %450 = sbr.rel (%p448) target = $region88
        $region87: #{tpu_custom_call.1} parent=63 // pred_region
          %451 = dma.done [#allocation12], 16384
        $region88: #{tpu_custom_call.1} parent=63 // pred_fallthru
          _
        // Predicated region
        $region89: #{tpu_custom_call.1} parent=63 // pred_check
          %p452 = pneg %p241
        $region90: #{tpu_custom_call.1} parent=63 // pred_check_branch
          %454 = sbr.rel (%p452) target = $region92
        $region91: #{tpu_custom_call.1} parent=63 // pred_region
          %455 = dma.done [#allocation12], 8192
        $region92: #{tpu_custom_call.1} parent=63 // pred_fallthru
          _
        %s456 = sand.u32 %s39, 1
        %s457 = scalar_lea.sflag [#allocation3], %s456
        %s458 = sand.u32 %s39, 1
        %s459 = smul.addr %s458, 16
        %s460 = scalar_lea.vmem [#allocation2], %s459
        %p461 = pneg %p52
        %p462 = pneg %p49
        %p463 = pneg %p73
        %p464 = pneg %p70
        %p465 = pneg %p94
        %p466 = pneg %p91
        %p467 = pneg %p115
        %p468 = pneg %p112
        %p469 = pneg %p136
        %p470 = pneg %p133
        %p471 = pneg %p157
        %p472 = pneg %p154
        %p473 = pneg %p178
        %p474 = pneg %p175
        %p475 = pneg %p199
        %p476 = pneg %p196
        %p477 = pneg %p220
        %p478 = pneg %p217
        %p479 = pneg %p241
        %p480 = pneg %p238
        %p481 = pneg %p262
        %p482 = pneg %p259
        %p483 = pneg %p288
        %p484 = pneg %p285
        %s485 = sand.u32 %s275, 1
        %s486 = scalar_lea.sflag [#allocation4], %s485
        %s487 = sand.u32 %s275, 1
        %s488 = scalar_lea.vmem [#allocation14], %s487
        %v489 = vld [vmem:[%s427] sm:$0xff]
        %v490 = vld [vmem:[%s427 + $0x8] sm:$0xff]
        %vm493 = vcmask 1046528
        %v494 = vrot.slane %v489, 1
        %v495 = vrot.slane %v490, 1
        %v496 = vsel %vm493, %v494, %v495
        %497 = vrot.lane.b32.xlu0 %v496, 16
        %v498 = vpop.permute.xlu0 %497
        %499 = vrot.lane.b32.xlu0 %v495, 16
        %v500 = vpop.permute.xlu0 %499
        %vm503 = vcmask 1045504
        %v504 = vrot.slane %v489, 2
        %v505 = vrot.slane %v490, 2
        %v506 = vsel %vm503, %v504, %v505
        %507 = vrot.lane.b32.xlu0 %v506, 32
        %v508 = vpop.permute.xlu0 %507
        %509 = vrot.lane.b32.xlu0 %v505, 32
        %v510 = vpop.permute.xlu0 %509
        %vm513 = vcmask 130048
        %v514 = vsel %vm513, %v489, %v498
        %v515 = vsel %vm513, %v490, %v500
        %vm516 = vcmask 261120
        %v517 = vsel %vm516, %v514, %v508
        %v518 = vsel %vm516, %v515, %v510
        %v519 = vld [vmem:[#allocation5] sm:$0xff]
        %v520 = vld [vmem:[#allocation5 + $0x8] sm:$0xff]
        %v521 = vld [vmem:[#allocation5 + $0x10] sm:$0xff]
        %v522 = vld [vmem:[#allocation5 + $0x18] sm:$0xff]
        %v523 = vld [vmem:[#allocation5 + $0x20] sm:$0xff]
        %v524 = vld [vmem:[#allocation5 + $0x28] sm:$0xff]
        %v525 = vld [vmem:[#allocation5 + $0x30] sm:$0xff]
        %v526 = vld [vmem:[#allocation5 + $0x38] sm:$0xff]
        %v527 = vld [vmem:[#allocation5 + $0x40] sm:$0xff]
        %v528 = vld [vmem:[#allocation5 + $0x48] sm:$0xff]
        %v529 = vld [vmem:[#allocation5 + $0x50] sm:$0xff]
        %v530 = vld [vmem:[#allocation5 + $0x58] sm:$0xff]
        %v531 = vld [vmem:[#allocation5 + $0x60] sm:$0xff]
        %v532 = vld [vmem:[#allocation5 + $0x68] sm:$0xff]
        %v533 = vld [vmem:[#allocation5 + $0x70] sm:$0xff]
        %v534 = vld [vmem:[#allocation5 + $0x78] sm:$0xff]
        %v535 = vld [vmem:[#allocation5 + $0x80] sm:$0xff]
        %v536 = vld [vmem:[#allocation5 + $0x88] sm:$0xff]
        %v537 = vld [vmem:[#allocation5 + $0x90] sm:$0xff]
        %v538 = vld [vmem:[#allocation5 + $0x98] sm:$0xff]
        %v539 = vld [vmem:[#allocation5 + $0xa0] sm:$0xff]
        %v540 = vld [vmem:[#allocation5 + $0xa8] sm:$0xff]
        %v541 = vld [vmem:[#allocation5 + $0xb0] sm:$0xff]
        %v542 = vld [vmem:[#allocation5 + $0xb8] sm:$0xff]
        %v543 = vld [vmem:[#allocation5 + $0xc0] sm:$0xff]
        %v544 = vld [vmem:[#allocation5 + $0xc8] sm:$0xff]
        %v545 = vld [vmem:[#allocation5 + $0xd0] sm:$0xff]
        %v546 = vld [vmem:[#allocation5 + $0xd8] sm:$0xff]
        %v547 = vld [vmem:[#allocation5 + $0xe0] sm:$0xff]
        %v548 = vld [vmem:[#allocation5 + $0xe8] sm:$0xff]
        %v549 = vld [vmem:[#allocation5 + $0xf0] sm:$0xff]
        %v550 = vld [vmem:[#allocation5 + $0xf8] sm:$0xff]
        %v551 = vld [vmem:[#allocation5 + $0x100] sm:$0xff]
        %v552 = vld [vmem:[#allocation5 + $0x108] sm:$0xff]
        %v553 = vld [vmem:[#allocation5 + $0x110] sm:$0xff]
        %v554 = vld [vmem:[#allocation5 + $0x118] sm:$0xff]
        %v555 = vld [vmem:[#allocation5 + $0x120] sm:$0xff]
        %v556 = vld [vmem:[#allocation5 + $0x128] sm:$0xff]
        %v557 = vld [vmem:[#allocation5 + $0x130] sm:$0xff]
        %v558 = vld [vmem:[#allocation5 + $0x138] sm:$0xff]
        %v559 = vld [vmem:[#allocation5 + $0x140] sm:$0xff]
        %v560 = vld [vmem:[#allocation5 + $0x148] sm:$0xff]
        %v561 = vld [vmem:[#allocation7] sm:$0xff]
        %v563 = vlaneseq
        %v564 = vshrl.u32 %v563, 7
        %v565 = vsub.s32 0, %v564
        %v566 = vrot.slane %v561, %v565
        %v567 = vlaneseq
        %v568 = vshrl.u32 %v567, 7
        %v569 = vsub.s32 1, %v568
        %v570 = vrot.slane %v561, %v569
        %v571 = vlaneseq
        %v572 = vshrl.u32 %v571, 7
        %v573 = vsub.s32 2, %v572
        %v574 = vrot.slane %v561, %v573
        %v575 = vlaneseq
        %v576 = vshrl.u32 %v575, 7
        %v577 = vsub.s32 3, %v576
        %v578 = vrot.slane %v561, %v577
        %v579 = vlaneseq
        %v580 = vshrl.u32 %v579, 7
        %v581 = vsub.s32 4, %v580
        %v582 = vrot.slane %v561, %v581
        %v583 = vlaneseq
        %v584 = vshrl.u32 %v583, 7
        %v585 = vsub.s32 5, %v584
        %v586 = vrot.slane %v561, %v585
        %v587 = vlaneseq
        %v588 = vshrl.u32 %v587, 7
        %v589 = vsub.s32 6, %v588
        %v590 = vrot.slane %v561, %v589
        %vm598 = vcmask 392192
        %v600 = vsel %vm598, %v517, 0
        %v603 = vsel %vm598, %v518, 0
        %605 = vmatprep.subr.mxu0 0.0
        %606 = vmatpush1.msra.mxu0 0.0
        %607 = vmatprep.subr.mxu0 0.0
        %608 = vmatpush1.msra.mxu0 0.0
        %609 = vmatprep.subr.mxu0 0.0
        %610 = vmatpush1.msra.mxu0 0.0
        %611 = vmatprep.subr.mxu0 0.0
        %612 = vmatpush1.msra.mxu0 0.0
        %613 = vmatprep.subr.mxu0 0.0
        %614 = vmatpush1.msra.mxu0 0.0
        %615 = vmatprep.subr.mxu0 0.0
        %616 = vmatpush1.msra.mxu0 0.0
        %617 = vmatprep.subr.mxu0 0.0
        %618 = vmatpush1.msra.mxu0 0.0
        %619 = vmatprep.subr.mxu0 0.0
        %620 = vmatpush1.msra.mxu0 0.0
        %621 = vmatprep.subr.mxu0 0.0
        %622 = vmatpush1.msra.mxu0 0.0
        %623 = vmatprep.subr.mxu0 0.0
        %624 = vmatpush1.msra.mxu0 0.0
        %625 = vmatprep.subr.mxu0 %v555
        %626 = vmatpush1.msra.mxu0 %v554
        %627 = vmatprep.subr.mxu0 %v548
        %628 = vmatpush1.msra.mxu0 %v547
        %629 = vmatprep.subr.mxu0 %v541
        %630 = vmatpush1.msra.mxu0 %v540
        %631 = vmatprep.subr.mxu0 %v534
        %632 = vmatpush1.msra.mxu0 %v533
        %633 = vmatprep.subr.mxu0 %v527
        %634 = vmatpush1.msra.mxu0 %v526
        %635 = vmatprep.subr.mxu0 %v520
        %636 = vmatpush1.msra.mxu0 %v519
        %637 = vmatprep.subr.mxu0 0.0
        %638 = vmatpush2.msra.mxu0 0.0
        %639 = vmatprep.subr.mxu0 0.0
        %640 = vmatpush2.msra.mxu0 0.0
        %641 = vmatprep.subr.mxu0 0.0
        %642 = vmatpush2.msra.mxu0 0.0
        %643 = vmatprep.subr.mxu0 0.0
        %644 = vmatpush2.msra.mxu0 0.0
        %645 = vmatprep.subr.mxu0 0.0
        %646 = vmatpush2.msra.mxu0 0.0
        %647 = vmatprep.subr.mxu0 0.0
        %648 = vmatpush2.msra.mxu0 0.0
        %649 = vmatprep.subr.mxu0 0.0
        %650 = vmatpush2.msra.mxu0 0.0
        %651 = vmatprep.subr.mxu0 0.0
        %652 = vmatpush2.msra.mxu0 0.0
        %653 = vmatprep.subr.mxu0 0.0
        %654 = vmatpush2.msra.mxu0 0.0
        %655 = vmatprep.subr.mxu0 0.0
        %656 = vmatpush2.msra.mxu0 0.0
        %657 = vmatprep.subr.mxu0 0.0
        %658 = vmatpush2.msra.mxu0 0.0
        %659 = vmatprep.subr.mxu0 0.0
        %660 = vmatpush2.msra.mxu0 0.0
        %661 = vmatprep.subr.mxu0 0.0
        %662 = vmatpush2.msra.mxu0 0.0
        %663 = vmatprep.subr.mxu0 0.0
        %664 = vmatpush2.msra.mxu0 0.0
        %665 = vmatprep.subr.mxu0 0.0
        %666 = vmatpush2.msra.mxu0 0.0
        %667 = vmatprep.subr.mxu0 0.0
        %668 = vmatpush2.msra.mxu0 0.0
        %669 = vmatprep.mubr.f32.mxu0 0.0
        %670 = vmatmul.mubr.f32.gmra.mxu0 %v600
        %v671 = vpop.f32.mrf.mxu0
        %v672 = vadd.f32 %v566, %v671
        %v673 = vpop.f32.mrf.mxu0
        %v674 = vadd.f32 %v570, %v673
        %675 = vmatprep.mubr.f32.mxu0 0.0
        %676 = vmatmul.mubr.f32.gmra.mxu0 %v603
        %v677 = vpop.f32.mrf.mxu0
        %v678 = vadd.f32 %v566, %v677
        %v679 = vpop.f32.mrf.mxu0
        %v680 = vadd.f32 %v570, %v679
        %681 = vdwg.mxu0
        %682 = vmatprep.subr.mxu0 0.0
        %683 = vmatpush1.msra.mxu0 0.0
        %684 = vmatprep.subr.mxu0 0.0
        %685 = vmatpush1.msra.mxu0 0.0
        %686 = vmatprep.subr.mxu0 0.0
        %687 = vmatpush1.msra.mxu0 0.0
        %688 = vmatprep.subr.mxu0 0.0
        %689 = vmatpush1.msra.mxu0 0.0
        %690 = vmatprep.subr.mxu0 0.0
        %691 = vmatpush1.msra.mxu0 0.0
        %692 = vmatprep.subr.mxu0 0.0
        %693 = vmatpush1.msra.mxu0 0.0
        %694 = vmatprep.subr.mxu0 0.0
        %695 = vmatpush1.msra.mxu0 0.0
        %696 = vmatprep.subr.mxu0 0.0
        %697 = vmatpush1.msra.mxu0 0.0
        %698 = vmatprep.subr.mxu0 0.0
        %699 = vmatpush1.msra.mxu0 0.0
        %700 = vmatprep.subr.mxu0 0.0
        %701 = vmatpush1.msra.mxu0 0.0
        %702 = vmatprep.subr.mxu0 %v557
        %703 = vmatpush1.msra.mxu0 %v556
        %704 = vmatprep.subr.mxu0 %v550
        %705 = vmatpush1.msra.mxu0 %v549
        %706 = vmatprep.subr.mxu0 %v543
        %707 = vmatpush1.msra.mxu0 %v542
        %708 = vmatprep.subr.mxu0 %v536
        %709 = vmatpush1.msra.mxu0 %v535
        %710 = vmatprep.subr.mxu0 %v529
        %711 = vmatpush1.msra.mxu0 %v528
        %712 = vmatprep.subr.mxu0 %v522
        %713 = vmatpush1.msra.mxu0 %v521
        %714 = vmatprep.subr.mxu0 0.0
        %715 = vmatpush2.msra.mxu0 0.0
        %716 = vmatprep.subr.mxu0 0.0
        %717 = vmatpush2.msra.mxu0 0.0
        %718 = vmatprep.subr.mxu0 0.0
        %719 = vmatpush2.msra.mxu0 0.0
        %720 = vmatprep.subr.mxu0 0.0
        %721 = vmatpush2.msra.mxu0 0.0
        %722 = vmatprep.subr.mxu0 0.0
        %723 = vmatpush2.msra.mxu0 0.0
        %724 = vmatprep.subr.mxu0 0.0
        %725 = vmatpush2.msra.mxu0 0.0
        %726 = vmatprep.subr.mxu0 0.0
        %727 = vmatpush2.msra.mxu0 0.0
        %728 = vmatprep.subr.mxu0 0.0
        %729 = vmatpush2.msra.mxu0 0.0
        %730 = vmatprep.subr.mxu0 0.0
        %731 = vmatpush2.msra.mxu0 0.0
        %732 = vmatprep.subr.mxu0 0.0
        %733 = vmatpush2.msra.mxu0 0.0
        %734 = vmatprep.subr.mxu0 0.0
        %735 = vmatpush2.msra.mxu0 0.0
        %736 = vmatprep.subr.mxu0 0.0
        %737 = vmatpush2.msra.mxu0 0.0
        %738 = vmatprep.subr.mxu0 0.0
        %739 = vmatpush2.msra.mxu0 0.0
        %740 = vmatprep.subr.mxu0 0.0
        %741 = vmatpush2.msra.mxu0 0.0
        %742 = vmatprep.subr.mxu0 0.0
        %743 = vmatpush2.msra.mxu0 0.0
        %744 = vmatprep.subr.mxu0 0.0
        %745 = vmatpush2.msra.mxu0 0.0
        %746 = vmatprep.mubr.f32.mxu0 0.0
        %747 = vmatmul.mubr.f32.gmra.mxu0 %v600
        %v748 = vpop.f32.mrf.mxu0
        %v749 = vadd.f32 %v574, %v748
        %v750 = vpop.f32.mrf.mxu0
        %v751 = vadd.f32 %v578, %v750
        %752 = vmatprep.mubr.f32.mxu0 0.0
        %753 = vmatmul.mubr.f32.gmra.mxu0 %v603
        %v754 = vpop.f32.mrf.mxu0
        %v755 = vadd.f32 %v574, %v754
        %v756 = vpop.f32.mrf.mxu0
        %v757 = vadd.f32 %v578, %v756
        %758 = vdwg.mxu0
        %759 = vmatprep.subr.mxu0 0.0
        %760 = vmatpush1.msra.mxu0 0.0
        %761 = vmatprep.subr.mxu0 0.0
        %762 = vmatpush1.msra.mxu0 0.0
        %763 = vmatprep.subr.mxu0 0.0
        %764 = vmatpush1.msra.mxu0 0.0
        %765 = vmatprep.subr.mxu0 0.0
        %766 = vmatpush1.msra.mxu0 0.0
        %767 = vmatprep.subr.mxu0 0.0
        %768 = vmatpush1.msra.mxu0 0.0
        %769 = vmatprep.subr.mxu0 0.0
        %770 = vmatpush1.msra.mxu0 0.0
        %771 = vmatprep.subr.mxu0 0.0
        %772 = vmatpush1.msra.mxu0 0.0
        %773 = vmatprep.subr.mxu0 0.0
        %774 = vmatpush1.msra.mxu0 0.0
        %775 = vmatprep.subr.mxu0 0.0
        %776 = vmatpush1.msra.mxu0 0.0
        %777 = vmatprep.subr.mxu0 0.0
        %778 = vmatpush1.msra.mxu0 0.0
        %779 = vmatprep.subr.mxu0 %v559
        %780 = vmatpush1.msra.mxu0 %v558
        %781 = vmatprep.subr.mxu0 %v552
        %782 = vmatpush1.msra.mxu0 %v551
        %783 = vmatprep.subr.mxu0 %v545
        %784 = vmatpush1.msra.mxu0 %v544
        %785 = vmatprep.subr.mxu0 %v538
        %786 = vmatpush1.msra.mxu0 %v537
        %787 = vmatprep.subr.mxu0 %v531
        %788 = vmatpush1.msra.mxu0 %v530
        %789 = vmatprep.subr.mxu0 %v524
        %790 = vmatpush1.msra.mxu0 %v523
        %791 = vmatprep.subr.mxu0 0.0
        %792 = vmatpush2.msra.mxu0 0.0
        %793 = vmatprep.subr.mxu0 0.0
        %794 = vmatpush2.msra.mxu0 0.0
        %795 = vmatprep.subr.mxu0 0.0
        %796 = vmatpush2.msra.mxu0 0.0
        %797 = vmatprep.subr.mxu0 0.0
        %798 = vmatpush2.msra.mxu0 0.0
        %799 = vmatprep.subr.mxu0 0.0
        %800 = vmatpush2.msra.mxu0 0.0
        %801 = vmatprep.subr.mxu0 0.0
        %802 = vmatpush2.msra.mxu0 0.0
        %803 = vmatprep.subr.mxu0 0.0
        %804 = vmatpush2.msra.mxu0 0.0
        %805 = vmatprep.subr.mxu0 0.0
        %806 = vmatpush2.msra.mxu0 0.0
        %807 = vmatprep.subr.mxu0 0.0
        %808 = vmatpush2.msra.mxu0 0.0
        %809 = vmatprep.subr.mxu0 0.0
        %810 = vmatpush2.msra.mxu0 0.0
        %811 = vmatprep.subr.mxu0 0.0
        %812 = vmatpush2.msra.mxu0 0.0
        %813 = vmatprep.subr.mxu0 0.0
        %814 = vmatpush2.msra.mxu0 0.0
        %815 = vmatprep.subr.mxu0 0.0
        %816 = vmatpush2.msra.mxu0 0.0
        %817 = vmatprep.subr.mxu0 0.0
        %818 = vmatpush2.msra.mxu0 0.0
        %819 = vmatprep.subr.mxu0 0.0
        %820 = vmatpush2.msra.mxu0 0.0
        %821 = vmatprep.subr.mxu0 0.0
        %822 = vmatpush2.msra.mxu0 0.0
        %823 = vmatprep.mubr.f32.mxu0 0.0
        %824 = vmatmul.mubr.f32.gmra.mxu0 %v600
        %v825 = vpop.f32.mrf.mxu0
        %v826 = vadd.f32 %v582, %v825
        %v827 = vpop.f32.mrf.mxu0
        %v828 = vadd.f32 %v586, %v827
        %829 = vmatprep.mubr.f32.mxu0 0.0
        %830 = vmatmul.mubr.f32.gmra.mxu0 %v603
        %v831 = vpop.f32.mrf.mxu0
        %v832 = vadd.f32 %v582, %v831
        %v833 = vpop.f32.mrf.mxu0
        %v834 = vadd.f32 %v586, %v833
        %835 = vdwg.mxu0
        %836 = vmatprep.subr.mxu0 0.0
        %837 = vmatpush1.msra.mxu0 0.0
        %838 = vmatprep.subr.mxu0 0.0
        %839 = vmatpush1.msra.mxu0 0.0
        %840 = vmatprep.subr.mxu0 0.0
        %841 = vmatpush1.msra.mxu0 0.0
        %842 = vmatprep.subr.mxu0 0.0
        %843 = vmatpush1.msra.mxu0 0.0
        %844 = vmatprep.subr.mxu0 0.0
        %845 = vmatpush1.msra.mxu0 0.0
        %846 = vmatprep.subr.mxu0 0.0
        %847 = vmatpush1.msra.mxu0 0.0
        %848 = vmatprep.subr.mxu0 0.0
        %849 = vmatpush1.msra.mxu0 0.0
        %850 = vmatprep.subr.mxu0 0.0
        %851 = vmatpush1.msra.mxu0 0.0
        %852 = vmatprep.subr.mxu0 0.0
        %853 = vmatpush1.msra.mxu0 0.0
        %854 = vmatprep.subr.mxu0 0.0
        %855 = vmatpush1.msra.mxu0 0.0
        %856 = vmatprep.subr.mxu0 0.0
        %857 = vmatpush1.msra.mxu0 %v560
        %858 = vmatprep.subr.mxu0 0.0
        %859 = vmatpush1.msra.mxu0 %v553
        %860 = vmatprep.subr.mxu0 0.0
        %861 = vmatpush1.msra.mxu0 %v546
        %862 = vmatprep.subr.mxu0 0.0
        %863 = vmatpush1.msra.mxu0 %v539
        %864 = vmatprep.subr.mxu0 0.0
        %865 = vmatpush1.msra.mxu0 %v532
        %866 = vmatprep.subr.mxu0 0.0
        %867 = vmatpush1.msra.mxu0 %v525
        %868 = vmatprep.subr.mxu0 0.0
        %869 = vmatpush2.msra.mxu0 0.0
        %870 = vmatprep.subr.mxu0 0.0
        %871 = vmatpush2.msra.mxu0 0.0
        %872 = vmatprep.subr.mxu0 0.0
        %873 = vmatpush2.msra.mxu0 0.0
        %874 = vmatprep.subr.mxu0 0.0
        %875 = vmatpush2.msra.mxu0 0.0
        %876 = vmatprep.subr.mxu0 0.0
        %877 = vmatpush2.msra.mxu0 0.0
        %878 = vmatprep.subr.mxu0 0.0
        %879 = vmatpush2.msra.mxu0 0.0
        %880 = vmatprep.subr.mxu0 0.0
        %881 = vmatpush2.msra.mxu0 0.0
        %882 = vmatprep.subr.mxu0 0.0
        %883 = vmatpush2.msra.mxu0 0.0
        %884 = vmatprep.subr.mxu0 0.0
        %885 = vmatpush2.msra.mxu0 0.0
        %886 = vmatprep.subr.mxu0 0.0
        %887 = vmatpush2.msra.mxu0 0.0
        %888 = vmatprep.subr.mxu0 0.0
        %889 = vmatpush2.msra.mxu0 0.0
        %890 = vmatprep.subr.mxu0 0.0
        %891 = vmatpush2.msra.mxu0 0.0
        %892 = vmatprep.subr.mxu0 0.0
        %893 = vmatpush2.msra.mxu0 0.0
        %894 = vmatprep.subr.mxu0 0.0
        %895 = vmatpush2.msra.mxu0 0.0
        %896 = vmatprep.subr.mxu0 0.0
        %897 = vmatpush2.msra.mxu0 0.0
        %898 = vmatprep.subr.mxu0 0.0
        %899 = vmatpush2.msra.mxu0 0.0
        %900 = vmatprep.mubr.f32.mxu0 0.0
        %901 = vmatmul.mubr.f32.gmra.mxu0 %v600
        %v902 = vpop.f32.mrf.mxu0
        %v903 = vadd.f32 %v590, %v902
        %v904 = vpop.f32.mrf.mxu0
        %905 = vmatprep.mubr.f32.mxu0 0.0
        %906 = vmatmul.mubr.f32.gmra.mxu0 %v603
        %v907 = vpop.f32.mrf.mxu0
        %v908 = vadd.f32 %v590, %v907
        %v909 = vpop.f32.mrf.mxu0
        %910 = vdwg.mxu0
        %v911 = vmax.f32 %v672, 0.0
        %v912 = vmax.f32 %v674, 0.0
        %v913 = vmax.f32 %v749, 0.0
        %v914 = vmax.f32 %v751, 0.0
        %v915 = vmax.f32 %v826, 0.0
        %v916 = vmax.f32 %v828, 0.0
        %v917 = vmax.f32 %v903, 0.0
        %v918 = vmax.f32 %v678, 0.0
        %v919 = vmax.f32 %v680, 0.0
        %v920 = vmax.f32 %v755, 0.0
        %v921 = vmax.f32 %v757, 0.0
        %v922 = vmax.f32 %v832, 0.0
        %v923 = vmax.f32 %v834, 0.0
        %v924 = vmax.f32 %v908, 0.0
        %v939 = vcombine.low %v911, %v912
        %v940 = vcombine.high %v911, %v912
        %v941 = vcombine.low %v913, %v914
        %v942 = vcombine.high %v913, %v914
        %v944 = vunpack.c.l.s4 1983009808
        %v945 = vunpack.c.0.s8 %v944
        %v946 = vlaneseq
        %v947 = vshrl.u32 %v946, 7
        %v948 = vsub.s32 %v945, %v947
        %v949 = vrot.slane %v939, %v948
        %v951 = vunpack.c.l.s4 1983009808
        %v952 = vunpack.c.0.s8 %v951
        %v953 = vlaneseq
        %v954 = vshrl.u32 %v953, 7
        %v955 = vsub.s32 %v952, %v954
        %v956 = vrot.slane %v940, %v955
        %v958 = vunpack.c.l.s4 1983009808
        %v959 = vunpack.c.0.s8 %v958
        %v960 = vlaneseq
        %v961 = vshrl.u32 %v960, 7
        %v962 = vsub.s32 %v959, %v961
        %v963 = vrot.slane %v941, %v962
        %v965 = vunpack.c.l.s4 1983009808
        %v966 = vunpack.c.0.s8 %v965
        %v967 = vlaneseq
        %v968 = vshrl.u32 %v967, 7
        %v969 = vsub.s32 %v966, %v968
        %v970 = vrot.slane %v942, %v969
        %v971 = vcombine.low %v949, %v963
        %v972 = vcombine.high %v949, %v963
        %v973 = vcombine.low %v956, %v970
        %v974 = vcombine.high %v956, %v970
        %v975 = vcombine.low %v915, %v916
        %v976 = vcombine.high %v915, %v916
        %v977 = vcombine.high %v917, %v917
        %v979 = vunpack.c.l.s4 1983009808
        %v980 = vunpack.c.0.s8 %v979
        %v981 = vlaneseq
        %v982 = vshrl.u32 %v981, 7
        %v983 = vsub.s32 %v980, %v982
        %v984 = vrot.slane %v975, %v983
        %v986 = vunpack.c.l.s4 1983009808
        %v987 = vunpack.c.0.s8 %v986
        %v988 = vlaneseq
        %v989 = vshrl.u32 %v988, 7
        %v990 = vsub.s32 %v987, %v989
        %v991 = vrot.slane %v976, %v990
        %v993 = vunpack.c.l.s4 1983009808
        %v994 = vunpack.c.0.s8 %v993
        %v995 = vlaneseq
        %v996 = vshrl.u32 %v995, 7
        %v997 = vsub.s32 %v994, %v996
        %v998 = vrot.slane %v917, %v997
        %v1000 = vunpack.c.l.s4 1983009808
        %v1001 = vunpack.c.0.s8 %v1000
        %v1002 = vlaneseq
        %v1003 = vshrl.u32 %v1002, 7
        %v1004 = vsub.s32 %v1001, %v1003
        %v1005 = vrot.slane %v977, %v1004
        %v1006 = vcombine.low %v984, %v998
        %v1007 = vcombine.high %v984, %v998
        %v1008 = vcombine.low %v991, %v1005
        %v1009 = vcombine.high %v991, %v1005
        %v1010 = vcombine.low %v918, %v919
        %v1011 = vcombine.high %v918, %v919
        %v1012 = vcombine.low %v920, %v921
        %v1013 = vcombine.high %v920, %v921
        %v1015 = vunpack.c.l.s4 1983009808
        %v1016 = vunpack.c.0.s8 %v1015
        %v1017 = vlaneseq
        %v1018 = vshrl.u32 %v1017, 7
        %v1019 = vsub.s32 %v1016, %v1018
        %v1020 = vrot.slane %v1010, %v1019
        %v1022 = vunpack.c.l.s4 1983009808
        %v1023 = vunpack.c.0.s8 %v1022
        %v1024 = vlaneseq
        %v1025 = vshrl.u32 %v1024, 7
        %v1026 = vsub.s32 %v1023, %v1025
        %v1027 = vrot.slane %v1011, %v1026
        %v1029 = vunpack.c.l.s4 1983009808
        %v1030 = vunpack.c.0.s8 %v1029
        %v1031 = vlaneseq
        %v1032 = vshrl.u32 %v1031, 7
        %v1033 = vsub.s32 %v1030, %v1032
        %v1034 = vrot.slane %v1012, %v1033
        %v1036 = vunpack.c.l.s4 1983009808
        %v1037 = vunpack.c.0.s8 %v1036
        %v1038 = vlaneseq
        %v1039 = vshrl.u32 %v1038, 7
        %v1040 = vsub.s32 %v1037, %v1039
        %v1041 = vrot.slane %v1013, %v1040
        %v1042 = vcombine.low %v1020, %v1034
        %v1043 = vcombine.high %v1020, %v1034
        %v1044 = vcombine.low %v1027, %v1041
        %v1045 = vcombine.low %v922, %v923
        %v1046 = vcombine.high %v922, %v923
        %v1047 = vcombine.high %v924, %v924
        %v1049 = vunpack.c.l.s4 1983009808
        %v1050 = vunpack.c.0.s8 %v1049
        %v1051 = vlaneseq
        %v1052 = vshrl.u32 %v1051, 7
        %v1053 = vsub.s32 %v1050, %v1052
        %v1054 = vrot.slane %v1045, %v1053
        %v1056 = vunpack.c.l.s4 1983009808
        %v1057 = vunpack.c.0.s8 %v1056
        %v1058 = vlaneseq
        %v1059 = vshrl.u32 %v1058, 7
        %v1060 = vsub.s32 %v1057, %v1059
        %v1061 = vrot.slane %v1046, %v1060
        %v1063 = vunpack.c.l.s4 1983009808
        %v1064 = vunpack.c.0.s8 %v1063
        %v1065 = vlaneseq
        %v1066 = vshrl.u32 %v1065, 7
        %v1067 = vsub.s32 %v1064, %v1066
        %v1068 = vrot.slane %v924, %v1067
        %v1070 = vunpack.c.l.s4 1983009808
        %v1071 = vunpack.c.0.s8 %v1070
        %v1072 = vlaneseq
        %v1073 = vshrl.u32 %v1072, 7
        %v1074 = vsub.s32 %v1071, %v1073
        %v1075 = vrot.slane %v1047, %v1074
        %v1076 = vcombine.low %v1054, %v1068
        %v1077 = vcombine.high %v1054, %v1068
        %v1078 = vcombine.low %v1061, %v1075
        %v1079 = vcombine.high %v971, %v971
        %v1081 = vunpack.c.l.s4 1983009808
        %v1082 = vunpack.c.0.s8 %v1081
        %v1083 = vlaneseq
        %v1084 = vshrl.u32 %v1083, 7
        %v1085 = vsub.s32 %v1082, %v1084
        %v1086 = vrot.slane %v971, %v1085
        %v1088 = vunpack.c.l.s4 1983009808
        %v1089 = vunpack.c.0.s8 %v1088
        %v1090 = vlaneseq
        %v1091 = vshrl.u32 %v1090, 7
        %v1092 = vsub.s32 %v1089, %v1091
        %v1093 = vrot.slane %v1079, %v1092
        %v1094 = vcombine.high %v1086, %v1086
        %v1095 = vcombine.high %v1093, %v1093
        %v1096 = vcombine.high %v1006, %v1006
        %v1098 = vunpack.c.l.s4 1983009808
        %v1099 = vunpack.c.0.s8 %v1098
        %v1100 = vlaneseq
        %v1101 = vshrl.u32 %v1100, 7
        %v1102 = vsub.s32 %v1099, %v1101
        %v1103 = vrot.slane %v1006, %v1102
        %v1105 = vunpack.c.l.s4 1983009808
        %v1106 = vunpack.c.0.s8 %v1105
        %v1107 = vlaneseq
        %v1108 = vshrl.u32 %v1107, 7
        %v1109 = vsub.s32 %v1106, %v1108
        %v1110 = vrot.slane %v1096, %v1109
        %v1111 = vcombine.high %v1103, %v1103
        %v1112 = vcombine.high %v972, %v972
        %v1114 = vunpack.c.l.s4 1983009808
        %v1115 = vunpack.c.0.s8 %v1114
        %v1116 = vlaneseq
        %v1117 = vshrl.u32 %v1116, 7
        %v1118 = vsub.s32 %v1115, %v1117
        %v1119 = vrot.slane %v972, %v1118
        %v1121 = vunpack.c.l.s4 1983009808
        %v1122 = vunpack.c.0.s8 %v1121
        %v1123 = vlaneseq
        %v1124 = vshrl.u32 %v1123, 7
        %v1125 = vsub.s32 %v1122, %v1124
        %v1126 = vrot.slane %v1112, %v1125
        %v1127 = vcombine.high %v1119, %v1119
        %v1128 = vcombine.high %v1126, %v1126
        %v1129 = vcombine.high %v1007, %v1007
        %v1131 = vunpack.c.l.s4 1983009808
        %v1132 = vunpack.c.0.s8 %v1131
        %v1133 = vlaneseq
        %v1134 = vshrl.u32 %v1133, 7
        %v1135 = vsub.s32 %v1132, %v1134
        %v1136 = vrot.slane %v1007, %v1135
        %v1138 = vunpack.c.l.s4 1983009808
        %v1139 = vunpack.c.0.s8 %v1138
        %v1140 = vlaneseq
        %v1141 = vshrl.u32 %v1140, 7
        %v1142 = vsub.s32 %v1139, %v1141
        %v1143 = vrot.slane %v1129, %v1142
        %v1144 = vcombine.high %v1136, %v1136
        %v1145 = vcombine.high %v973, %v973
        %v1147 = vunpack.c.l.s4 1983009808
        %v1148 = vunpack.c.0.s8 %v1147
        %v1149 = vlaneseq
        %v1150 = vshrl.u32 %v1149, 7
        %v1151 = vsub.s32 %v1148, %v1150
        %v1152 = vrot.slane %v973, %v1151
        %v1154 = vunpack.c.l.s4 1983009808
        %v1155 = vunpack.c.0.s8 %v1154
        %v1156 = vlaneseq
        %v1157 = vshrl.u32 %v1156, 7
        %v1158 = vsub.s32 %v1155, %v1157
        %v1159 = vrot.slane %v1145, %v1158
        %v1160 = vcombine.high %v1152, %v1152
        %v1161 = vcombine.high %v1159, %v1159
        %v1162 = vcombine.high %v1008, %v1008
        %v1164 = vunpack.c.l.s4 1983009808
        %v1165 = vunpack.c.0.s8 %v1164
        %v1166 = vlaneseq
        %v1167 = vshrl.u32 %v1166, 7
        %v1168 = vsub.s32 %v1165, %v1167
        %v1169 = vrot.slane %v1008, %v1168
        %v1171 = vunpack.c.l.s4 1983009808
        %v1172 = vunpack.c.0.s8 %v1171
        %v1173 = vlaneseq
        %v1174 = vshrl.u32 %v1173, 7
        %v1175 = vsub.s32 %v1172, %v1174
        %v1176 = vrot.slane %v1162, %v1175
        %v1177 = vcombine.high %v1169, %v1169
        %v1178 = vcombine.high %v974, %v974
        %v1180 = vunpack.c.l.s4 1983009808
        %v1181 = vunpack.c.0.s8 %v1180
        %v1182 = vlaneseq
        %v1183 = vshrl.u32 %v1182, 7
        %v1184 = vsub.s32 %v1181, %v1183
        %v1185 = vrot.slane %v974, %v1184
        %v1187 = vunpack.c.l.s4 1983009808
        %v1188 = vunpack.c.0.s8 %v1187
        %v1189 = vlaneseq
        %v1190 = vshrl.u32 %v1189, 7
        %v1191 = vsub.s32 %v1188, %v1190
        %v1192 = vrot.slane %v1178, %v1191
        %v1193 = vcombine.high %v1185, %v1185
        %v1194 = vcombine.high %v1192, %v1192
        %v1195 = vcombine.high %v1009, %v1009
        %v1197 = vunpack.c.l.s4 1983009808
        %v1198 = vunpack.c.0.s8 %v1197
        %v1199 = vlaneseq
        %v1200 = vshrl.u32 %v1199, 7
        %v1201 = vsub.s32 %v1198, %v1200
        %v1202 = vrot.slane %v1009, %v1201
        %v1204 = vunpack.c.l.s4 1983009808
        %v1205 = vunpack.c.0.s8 %v1204
        %v1206 = vlaneseq
        %v1207 = vshrl.u32 %v1206, 7
        %v1208 = vsub.s32 %v1205, %v1207
        %v1209 = vrot.slane %v1195, %v1208
        %v1210 = vcombine.high %v1202, %v1202
        %v1211 = vcombine.high %v1042, %v1042
        %v1213 = vunpack.c.l.s4 1983009808
        %v1214 = vunpack.c.0.s8 %v1213
        %v1215 = vlaneseq
        %v1216 = vshrl.u32 %v1215, 7
        %v1217 = vsub.s32 %v1214, %v1216
        %v1218 = vrot.slane %v1042, %v1217
        %v1220 = vunpack.c.l.s4 1983009808
        %v1221 = vunpack.c.0.s8 %v1220
        %v1222 = vlaneseq
        %v1223 = vshrl.u32 %v1222, 7
        %v1224 = vsub.s32 %v1221, %v1223
        %v1225 = vrot.slane %v1211, %v1224
        %v1226 = vcombine.high %v1218, %v1218
        %v1227 = vcombine.high %v1225, %v1225
        %v1228 = vcombine.high %v1076, %v1076
        %v1230 = vunpack.c.l.s4 1983009808
        %v1231 = vunpack.c.0.s8 %v1230
        %v1232 = vlaneseq
        %v1233 = vshrl.u32 %v1232, 7
        %v1234 = vsub.s32 %v1231, %v1233
        %v1235 = vrot.slane %v1076, %v1234
        %v1237 = vunpack.c.l.s4 1983009808
        %v1238 = vunpack.c.0.s8 %v1237
        %v1239 = vlaneseq
        %v1240 = vshrl.u32 %v1239, 7
        %v1241 = vsub.s32 %v1238, %v1240
        %v1242 = vrot.slane %v1228, %v1241
        %v1243 = vcombine.high %v1235, %v1235
        %v1244 = vcombine.high %v1043, %v1043
        %v1246 = vunpack.c.l.s4 1983009808
        %v1247 = vunpack.c.0.s8 %v1246
        %v1248 = vlaneseq
        %v1249 = vshrl.u32 %v1248, 7
        %v1250 = vsub.s32 %v1247, %v1249
        %v1251 = vrot.slane %v1043, %v1250
        %v1253 = vunpack.c.l.s4 1983009808
        %v1254 = vunpack.c.0.s8 %v1253
        %v1255 = vlaneseq
        %v1256 = vshrl.u32 %v1255, 7
        %v1257 = vsub.s32 %v1254, %v1256
        %v1258 = vrot.slane %v1244, %v1257
        %v1259 = vcombine.high %v1251, %v1251
        %v1260 = vcombine.high %v1258, %v1258
        %v1261 = vcombine.high %v1077, %v1077
        %v1263 = vunpack.c.l.s4 1983009808
        %v1264 = vunpack.c.0.s8 %v1263
        %v1265 = vlaneseq
        %v1266 = vshrl.u32 %v1265, 7
        %v1267 = vsub.s32 %v1264, %v1266
        %v1268 = vrot.slane %v1077, %v1267
        %v1270 = vunpack.c.l.s4 1983009808
        %v1271 = vunpack.c.0.s8 %v1270
        %v1272 = vlaneseq
        %v1273 = vshrl.u32 %v1272, 7
        %v1274 = vsub.s32 %v1271, %v1273
        %v1275 = vrot.slane %v1261, %v1274
        %v1276 = vcombine.high %v1268, %v1268
        %v1277 = vcombine.high %v1044, %v1044
        %v1279 = vunpack.c.l.s4 1983009808
        %v1280 = vunpack.c.0.s8 %v1279
        %v1281 = vlaneseq
        %v1282 = vshrl.u32 %v1281, 7
        %v1283 = vsub.s32 %v1280, %v1282
        %v1284 = vrot.slane %v1044, %v1283
        %v1286 = vunpack.c.l.s4 1983009808
        %v1287 = vunpack.c.0.s8 %v1286
        %v1288 = vlaneseq
        %v1289 = vshrl.u32 %v1288, 7
        %v1290 = vsub.s32 %v1287, %v1289
        %v1291 = vrot.slane %v1277, %v1290
        %v1292 = vcombine.high %v1284, %v1284
        %v1293 = vcombine.high %v1291, %v1291
        %v1294 = vcombine.high %v1078, %v1078
        %v1296 = vunpack.c.l.s4 1983009808
        %v1297 = vunpack.c.0.s8 %v1296
        %v1298 = vlaneseq
        %v1299 = vshrl.u32 %v1298, 7
        %v1300 = vsub.s32 %v1297, %v1299
        %v1301 = vrot.slane %v1078, %v1300
        %v1303 = vunpack.c.l.s4 1983009808
        %v1304 = vunpack.c.0.s8 %v1303
        %v1305 = vlaneseq
        %v1306 = vshrl.u32 %v1305, 7
        %v1307 = vsub.s32 %v1304, %v1306
        %v1308 = vrot.slane %v1294, %v1307
        %v1309 = vcombine.high %v1301, %v1301
        %vm1359 = vcmask 1041408
        %v1360 = vsel %vm1359, %v1086, -inf
        %v1361 = vrot.slane %v1360, 4
        %v1362 = vmax.f32 %v1360, %v1361
        %v1363 = vrot.slane %v1362, 2
        %v1364 = vmax.f32 %v1362, %v1363
        %v1365 = vrot.slane %v1364, 1
        %v1366 = vmax.f32 %v1364, %v1365
        %v1367 = vsel %vm1359, %v1094, -inf
        %v1368 = vrot.slane %v1367, 4
        %v1369 = vmax.f32 %v1367, %v1368
        %v1370 = vrot.slane %v1369, 2
        %v1371 = vmax.f32 %v1369, %v1370
        %v1372 = vrot.slane %v1371, 1
        %v1373 = vmax.f32 %v1371, %v1372
        %v1374 = vsel %vm1359, %v1093, -inf
        %v1375 = vrot.slane %v1374, 4
        %v1376 = vmax.f32 %v1374, %v1375
        %v1377 = vrot.slane %v1376, 2
        %v1378 = vmax.f32 %v1376, %v1377
        %v1379 = vrot.slane %v1378, 1
        %v1380 = vmax.f32 %v1378, %v1379
        %v1381 = vsel %vm1359, %v1095, -inf
        %v1382 = vrot.slane %v1381, 4
        %v1383 = vmax.f32 %v1381, %v1382
        %v1384 = vrot.slane %v1383, 2
        %v1385 = vmax.f32 %v1383, %v1384
        %v1386 = vrot.slane %v1385, 1
        %v1387 = vmax.f32 %v1385, %v1386
        %v1388 = vsel %vm1359, %v1103, -inf
        %v1389 = vrot.slane %v1388, 4
        %v1390 = vmax.f32 %v1388, %v1389
        %v1391 = vrot.slane %v1390, 2
        %v1392 = vmax.f32 %v1390, %v1391
        %v1393 = vrot.slane %v1392, 1
        %v1394 = vmax.f32 %v1392, %v1393
        %v1395 = vsel %vm1359, %v1111, -inf
        %v1396 = vrot.slane %v1395, 4
        %v1397 = vmax.f32 %v1395, %v1396
        %v1398 = vrot.slane %v1397, 2
        %v1399 = vmax.f32 %v1397, %v1398
        %v1400 = vrot.slane %v1399, 1
        %v1401 = vmax.f32 %v1399, %v1400
        %v1402 = vsel %vm1359, %v1110, -inf
        %v1403 = vrot.slane %v1402, 4
        %v1404 = vmax.f32 %v1402, %v1403
        %v1405 = vrot.slane %v1404, 2
        %v1406 = vmax.f32 %v1404, %v1405
        %v1407 = vrot.slane %v1406, 1
        %v1408 = vmax.f32 %v1406, %v1407
        %v1409 = vsel %vm1359, %v1119, -inf
        %v1410 = vrot.slane %v1409, 4
        %v1411 = vmax.f32 %v1409, %v1410
        %v1412 = vrot.slane %v1411, 2
        %v1413 = vmax.f32 %v1411, %v1412
        %v1414 = vrot.slane %v1413, 1
        %v1415 = vmax.f32 %v1413, %v1414
        %v1416 = vsel %vm1359, %v1127, -inf
        %v1417 = vrot.slane %v1416, 4
        %v1418 = vmax.f32 %v1416, %v1417
        %v1419 = vrot.slane %v1418, 2
        %v1420 = vmax.f32 %v1418, %v1419
        %v1421 = vrot.slane %v1420, 1
        %v1422 = vmax.f32 %v1420, %v1421
        %v1423 = vsel %vm1359, %v1126, -inf
        %v1424 = vrot.slane %v1423, 4
        %v1425 = vmax.f32 %v1423, %v1424
        %v1426 = vrot.slane %v1425, 2
        %v1427 = vmax.f32 %v1425, %v1426
        %v1428 = vrot.slane %v1427, 1
        %v1429 = vmax.f32 %v1427, %v1428
        %v1430 = vsel %vm1359, %v1128, -inf
        %v1431 = vrot.slane %v1430, 4
        %v1432 = vmax.f32 %v1430, %v1431
        %v1433 = vrot.slane %v1432, 2
        %v1434 = vmax.f32 %v1432, %v1433
        %v1435 = vrot.slane %v1434, 1
        %v1436 = vmax.f32 %v1434, %v1435
        %v1437 = vsel %vm1359, %v1136, -inf
        %v1438 = vrot.slane %v1437, 4
        %v1439 = vmax.f32 %v1437, %v1438
        %v1440 = vrot.slane %v1439, 2
        %v1441 = vmax.f32 %v1439, %v1440
        %v1442 = vrot.slane %v1441, 1
        %v1443 = vmax.f32 %v1441, %v1442
        %v1444 = vsel %vm1359, %v1144, -inf
        %v1445 = vrot.slane %v1444, 4
        %v1446 = vmax.f32 %v1444, %v1445
        %v1447 = vrot.slane %v1446, 2
        %v1448 = vmax.f32 %v1446, %v1447
        %v1449 = vrot.slane %v1448, 1
        %v1450 = vmax.f32 %v1448, %v1449
        %v1451 = vsel %vm1359, %v1143, -inf
        %v1452 = vrot.slane %v1451, 4
        %v1453 = vmax.f32 %v1451, %v1452
        %v1454 = vrot.slane %v1453, 2
        %v1455 = vmax.f32 %v1453, %v1454
        %v1456 = vrot.slane %v1455, 1
        %v1457 = vmax.f32 %v1455, %v1456
        %v1458 = vsel %vm1359, %v1152, -inf
        %v1459 = vrot.slane %v1458, 4
        %v1460 = vmax.f32 %v1458, %v1459
        %v1461 = vrot.slane %v1460, 2
        %v1462 = vmax.f32 %v1460, %v1461
        %v1463 = vrot.slane %v1462, 1
        %v1464 = vmax.f32 %v1462, %v1463
        %v1465 = vsel %vm1359, %v1160, -inf
        %v1466 = vrot.slane %v1465, 4
        %v1467 = vmax.f32 %v1465, %v1466
        %v1468 = vrot.slane %v1467, 2
        %v1469 = vmax.f32 %v1467, %v1468
        %v1470 = vrot.slane %v1469, 1
        %v1471 = vmax.f32 %v1469, %v1470
        %v1472 = vsel %vm1359, %v1159, -inf
        %v1473 = vrot.slane %v1472, 4
        %v1474 = vmax.f32 %v1472, %v1473
        %v1475 = vrot.slane %v1474, 2
        %v1476 = vmax.f32 %v1474, %v1475
        %v1477 = vrot.slane %v1476, 1
        %v1478 = vmax.f32 %v1476, %v1477
        %v1479 = vsel %vm1359, %v1161, -inf
        %v1480 = vrot.slane %v1479, 4
        %v1481 = vmax.f32 %v1479, %v1480
        %v1482 = vrot.slane %v1481, 2
        %v1483 = vmax.f32 %v1481, %v1482
        %v1484 = vrot.slane %v1483, 1
        %v1485 = vmax.f32 %v1483, %v1484
        %v1486 = vsel %vm1359, %v1169, -inf
        %v1487 = vrot.slane %v1486, 4
        %v1488 = vmax.f32 %v1486, %v1487
        %v1489 = vrot.slane %v1488, 2
        %v1490 = vmax.f32 %v1488, %v1489
        %v1491 = vrot.slane %v1490, 1
        %v1492 = vmax.f32 %v1490, %v1491
        %v1493 = vsel %vm1359, %v1177, -inf
        %v1494 = vrot.slane %v1493, 4
        %v1495 = vmax.f32 %v1493, %v1494
        %v1496 = vrot.slane %v1495, 2
        %v1497 = vmax.f32 %v1495, %v1496
        %v1498 = vrot.slane %v1497, 1
        %v1499 = vmax.f32 %v1497, %v1498
        %v1500 = vsel %vm1359, %v1176, -inf
        %v1501 = vrot.slane %v1500, 4
        %v1502 = vmax.f32 %v1500, %v1501
        %v1503 = vrot.slane %v1502, 2
        %v1504 = vmax.f32 %v1502, %v1503
        %v1505 = vrot.slane %v1504, 1
        %v1506 = vmax.f32 %v1504, %v1505
        %v1507 = vsel %vm1359, %v1185, -inf
        %v1508 = vrot.slane %v1507, 4
        %v1509 = vmax.f32 %v1507, %v1508
        %v1510 = vrot.slane %v1509, 2
        %v1511 = vmax.f32 %v1509, %v1510
        %v1512 = vrot.slane %v1511, 1
        %v1513 = vmax.f32 %v1511, %v1512
        %v1514 = vsel %vm1359, %v1193, -inf
        %v1515 = vrot.slane %v1514, 4
        %v1516 = vmax.f32 %v1514, %v1515
        %v1517 = vrot.slane %v1516, 2
        %v1518 = vmax.f32 %v1516, %v1517
        %v1519 = vrot.slane %v1518, 1
        %v1520 = vmax.f32 %v1518, %v1519
        %v1521 = vsel %vm1359, %v1192, -inf
        %v1522 = vrot.slane %v1521, 4
        %v1523 = vmax.f32 %v1521, %v1522
        %v1524 = vrot.slane %v1523, 2
        %v1525 = vmax.f32 %v1523, %v1524
        %v1526 = vrot.slane %v1525, 1
        %v1527 = vmax.f32 %v1525, %v1526
        %v1528 = vsel %vm1359, %v1194, -inf
        %v1529 = vrot.slane %v1528, 4
        %v1530 = vmax.f32 %v1528, %v1529
        %v1531 = vrot.slane %v1530, 2
        %v1532 = vmax.f32 %v1530, %v1531
        %v1533 = vrot.slane %v1532, 1
        %v1534 = vmax.f32 %v1532, %v1533
        %v1535 = vsel %vm1359, %v1202, -inf
        %v1536 = vrot.slane %v1535, 4
        %v1537 = vmax.f32 %v1535, %v1536
        %v1538 = vrot.slane %v1537, 2
        %v1539 = vmax.f32 %v1537, %v1538
        %v1540 = vrot.slane %v1539, 1
        %v1541 = vmax.f32 %v1539, %v1540
        %v1542 = vsel %vm1359, %v1210, -inf
        %v1543 = vrot.slane %v1542, 4
        %v1544 = vmax.f32 %v1542, %v1543
        %v1545 = vrot.slane %v1544, 2
        %v1546 = vmax.f32 %v1544, %v1545
        %v1547 = vrot.slane %v1546, 1
        %v1548 = vmax.f32 %v1546, %v1547
        %v1549 = vsel %vm1359, %v1209, -inf
        %v1550 = vrot.slane %v1549, 4
        %v1551 = vmax.f32 %v1549, %v1550
        %v1552 = vrot.slane %v1551, 2
        %v1553 = vmax.f32 %v1551, %v1552
        %v1554 = vrot.slane %v1553, 1
        %v1555 = vmax.f32 %v1553, %v1554
        %v1556 = vsel %vm1359, %v1218, -inf
        %v1557 = vrot.slane %v1556, 4
        %v1558 = vmax.f32 %v1556, %v1557
        %v1559 = vrot.slane %v1558, 2
        %v1560 = vmax.f32 %v1558, %v1559
        %v1561 = vrot.slane %v1560, 1
        %v1562 = vmax.f32 %v1560, %v1561
        %v1563 = vsel %vm1359, %v1226, -inf
        %v1564 = vrot.slane %v1563, 4
        %v1565 = vmax.f32 %v1563, %v1564
        %v1566 = vrot.slane %v1565, 2
        %v1567 = vmax.f32 %v1565, %v1566
        %v1568 = vrot.slane %v1567, 1
        %v1569 = vmax.f32 %v1567, %v1568
        %v1570 = vsel %vm1359, %v1225, -inf
        %v1571 = vrot.slane %v1570, 4
        %v1572 = vmax.f32 %v1570, %v1571
        %v1573 = vrot.slane %v1572, 2
        %v1574 = vmax.f32 %v1572, %v1573
        %v1575 = vrot.slane %v1574, 1
        %v1576 = vmax.f32 %v1574, %v1575
        %v1577 = vsel %vm1359, %v1227, -inf
        %v1578 = vrot.slane %v1577, 4
        %v1579 = vmax.f32 %v1577, %v1578
        %v1580 = vrot.slane %v1579, 2
        %v1581 = vmax.f32 %v1579, %v1580
        %v1582 = vrot.slane %v1581, 1
        %v1583 = vmax.f32 %v1581, %v1582
        %v1584 = vsel %vm1359, %v1235, -inf
        %v1585 = vrot.slane %v1584, 4
        %v1586 = vmax.f32 %v1584, %v1585
        %v1587 = vrot.slane %v1586, 2
        %v1588 = vmax.f32 %v1586, %v1587
        %v1589 = vrot.slane %v1588, 1
        %v1590 = vmax.f32 %v1588, %v1589
        %v1591 = vsel %vm1359, %v1243, -inf
        %v1592 = vrot.slane %v1591, 4
        %v1593 = vmax.f32 %v1591, %v1592
        %v1594 = vrot.slane %v1593, 2
        %v1595 = vmax.f32 %v1593, %v1594
        %v1596 = vrot.slane %v1595, 1
        %v1597 = vmax.f32 %v1595, %v1596
        %v1598 = vsel %vm1359, %v1242, -inf
        %v1599 = vrot.slane %v1598, 4
        %v1600 = vmax.f32 %v1598, %v1599
        %v1601 = vrot.slane %v1600, 2
        %v1602 = vmax.f32 %v1600, %v1601
        %v1603 = vrot.slane %v1602, 1
        %v1604 = vmax.f32 %v1602, %v1603
        %v1605 = vsel %vm1359, %v1251, -inf
        %v1606 = vrot.slane %v1605, 4
        %v1607 = vmax.f32 %v1605, %v1606
        %v1608 = vrot.slane %v1607, 2
        %v1609 = vmax.f32 %v1607, %v1608
        %v1610 = vrot.slane %v1609, 1
        %v1611 = vmax.f32 %v1609, %v1610
        %v1612 = vsel %vm1359, %v1259, -inf
        %v1613 = vrot.slane %v1612, 4
        %v1614 = vmax.f32 %v1612, %v1613
        %v1615 = vrot.slane %v1614, 2
        %v1616 = vmax.f32 %v1614, %v1615
        %v1617 = vrot.slane %v1616, 1
        %v1618 = vmax.f32 %v1616, %v1617
        %v1619 = vsel %vm1359, %v1258, -inf
        %v1620 = vrot.slane %v1619, 4
        %v1621 = vmax.f32 %v1619, %v1620
        %v1622 = vrot.slane %v1621, 2
        %v1623 = vmax.f32 %v1621, %v1622
        %v1624 = vrot.slane %v1623, 1
        %v1625 = vmax.f32 %v1623, %v1624
        %v1626 = vsel %vm1359, %v1260, -inf
        %v1627 = vrot.slane %v1626, 4
        %v1628 = vmax.f32 %v1626, %v1627
        %v1629 = vrot.slane %v1628, 2
        %v1630 = vmax.f32 %v1628, %v1629
        %v1631 = vrot.slane %v1630, 1
        %v1632 = vmax.f32 %v1630, %v1631
        %v1633 = vsel %vm1359, %v1268, -inf
        %v1634 = vrot.slane %v1633, 4
        %v1635 = vmax.f32 %v1633, %v1634
        %v1636 = vrot.slane %v1635, 2
        %v1637 = vmax.f32 %v1635, %v1636
        %v1638 = vrot.slane %v1637, 1
        %v1639 = vmax.f32 %v1637, %v1638
        %v1640 = vsel %vm1359, %v1276, -inf
        %v1641 = vrot.slane %v1640, 4
        %v1642 = vmax.f32 %v1640, %v1641
        %v1643 = vrot.slane %v1642, 2
        %v1644 = vmax.f32 %v1642, %v1643
        %v1645 = vrot.slane %v1644, 1
        %v1646 = vmax.f32 %v1644, %v1645
        %v1647 = vsel %vm1359, %v1275, -inf
        %v1648 = vrot.slane %v1647, 4
        %v1649 = vmax.f32 %v1647, %v1648
        %v1650 = vrot.slane %v1649, 2
        %v1651 = vmax.f32 %v1649, %v1650
        %v1652 = vrot.slane %v1651, 1
        %v1653 = vmax.f32 %v1651, %v1652
        %v1654 = vsel %vm1359, %v1284, -inf
        %v1655 = vrot.slane %v1654, 4
        %v1656 = vmax.f32 %v1654, %v1655
        %v1657 = vrot.slane %v1656, 2
        %v1658 = vmax.f32 %v1656, %v1657
        %v1659 = vrot.slane %v1658, 1
        %v1660 = vmax.f32 %v1658, %v1659
        %v1661 = vsel %vm1359, %v1292, -inf
        %v1662 = vrot.slane %v1661, 4
        %v1663 = vmax.f32 %v1661, %v1662
        %v1664 = vrot.slane %v1663, 2
        %v1665 = vmax.f32 %v1663, %v1664
        %v1666 = vrot.slane %v1665, 1
        %v1667 = vmax.f32 %v1665, %v1666
        %v1668 = vsel %vm1359, %v1291, -inf
        %v1669 = vrot.slane %v1668, 4
        %v1670 = vmax.f32 %v1668, %v1669
        %v1671 = vrot.slane %v1670, 2
        %v1672 = vmax.f32 %v1670, %v1671
        %v1673 = vrot.slane %v1672, 1
        %v1674 = vmax.f32 %v1672, %v1673
        %v1675 = vsel %vm1359, %v1293, -inf
        %v1676 = vrot.slane %v1675, 4
        %v1677 = vmax.f32 %v1675, %v1676
        %v1678 = vrot.slane %v1677, 2
        %v1679 = vmax.f32 %v1677, %v1678
        %v1680 = vrot.slane %v1679, 1
        %v1681 = vmax.f32 %v1679, %v1680
        %v1682 = vsel %vm1359, %v1301, -inf
        %v1683 = vrot.slane %v1682, 4
        %v1684 = vmax.f32 %v1682, %v1683
        %v1685 = vrot.slane %v1684, 2
        %v1686 = vmax.f32 %v1684, %v1685
        %v1687 = vrot.slane %v1686, 1
        %v1688 = vmax.f32 %v1686, %v1687
        %v1689 = vsel %vm1359, %v1309, -inf
        %v1690 = vrot.slane %v1689, 4
        %v1691 = vmax.f32 %v1689, %v1690
        %v1692 = vrot.slane %v1691, 2
        %v1693 = vmax.f32 %v1691, %v1692
        %v1694 = vrot.slane %v1693, 1
        %v1695 = vmax.f32 %v1693, %v1694
        %v1696 = vsel %vm1359, %v1308, -inf
        %v1697 = vrot.slane %v1696, 4
        %v1698 = vmax.f32 %v1696, %v1697
        %v1699 = vrot.slane %v1698, 2
        %v1700 = vmax.f32 %v1698, %v1699
        %v1701 = vrot.slane %v1700, 1
        %v1702 = vmax.f32 %v1700, %v1701
        %1710 = vrot.lane.b32.xlu0 %v1366, 64
        %v1711 = vpop.permute.xlu0 %1710
        %1712 = vrot.lane.b32.xlu0 %v1415, 64
        %v1713 = vpop.permute.xlu0 %1712
        %1714 = vrot.lane.b32.xlu0 %v1464, 64
        %v1715 = vpop.permute.xlu0 %1714
        %1716 = vrot.lane.b32.xlu0 %v1513, 64
        %v1717 = vpop.permute.xlu0 %1716
        %1718 = vrot.lane.b32.xlu0 %v1562, 64
        %v1719 = vpop.permute.xlu0 %1718
        %1720 = vrot.lane.b32.xlu0 %v1611, 64
        %v1721 = vpop.permute.xlu0 %1720
        %1722 = vrot.lane.b32.xlu0 %v1660, 64
        %v1723 = vpop.permute.xlu0 %1722
        %v1731 = vmax.f32 %v1366, %v1711
        %v1732 = vmax.f32 %v1415, %v1713
        %v1733 = vmax.f32 %v1464, %v1715
        %v1734 = vmax.f32 %v1513, %v1717
        %v1735 = vmax.f32 %v1562, %v1719
        %v1736 = vmax.f32 %v1611, %v1721
        %v1737 = vmax.f32 %v1660, %v1723
        %1745 = vrot.lane.b32.xlu0 %v1373, 64
        %v1746 = vpop.permute.xlu0 %1745
        %1747 = vrot.lane.b32.xlu0 %v1422, 64
        %v1748 = vpop.permute.xlu0 %1747
        %1749 = vrot.lane.b32.xlu0 %v1471, 64
        %v1750 = vpop.permute.xlu0 %1749
        %1751 = vrot.lane.b32.xlu0 %v1520, 64
        %v1752 = vpop.permute.xlu0 %1751
        %1753 = vrot.lane.b32.xlu0 %v1569, 64
        %v1754 = vpop.permute.xlu0 %1753
        %1755 = vrot.lane.b32.xlu0 %v1618, 64
        %v1756 = vpop.permute.xlu0 %1755
        %1757 = vrot.lane.b32.xlu0 %v1667, 64
        %v1758 = vpop.permute.xlu0 %1757
        %v1766 = vmax.f32 %v1373, %v1746
        %v1767 = vmax.f32 %v1422, %v1748
        %v1768 = vmax.f32 %v1471, %v1750
        %v1769 = vmax.f32 %v1520, %v1752
        %v1770 = vmax.f32 %v1569, %v1754
        %v1771 = vmax.f32 %v1618, %v1756
        %v1772 = vmax.f32 %v1667, %v1758
        %1780 = vrot.lane.b32.xlu0 %v1380, 64
        %v1781 = vpop.permute.xlu0 %1780
        %1782 = vrot.lane.b32.xlu0 %v1429, 64
        %v1783 = vpop.permute.xlu0 %1782
        %1784 = vrot.lane.b32.xlu0 %v1478, 64
        %v1785 = vpop.permute.xlu0 %1784
        %1786 = vrot.lane.b32.xlu0 %v1527, 64
        %v1787 = vpop.permute.xlu0 %1786
        %1788 = vrot.lane.b32.xlu0 %v1576, 64
        %v1789 = vpop.permute.xlu0 %1788
        %1790 = vrot.lane.b32.xlu0 %v1625, 64
        %v1791 = vpop.permute.xlu0 %1790
        %1792 = vrot.lane.b32.xlu0 %v1674, 64
        %v1793 = vpop.permute.xlu0 %1792
        %v1801 = vmax.f32 %v1380, %v1781
        %v1802 = vmax.f32 %v1429, %v1783
        %v1803 = vmax.f32 %v1478, %v1785
        %v1804 = vmax.f32 %v1527, %v1787
        %v1805 = vmax.f32 %v1576, %v1789
        %v1806 = vmax.f32 %v1625, %v1791
        %v1807 = vmax.f32 %v1674, %v1793
        %1815 = vrot.lane.b32.xlu0 %v1387, 64
        %v1816 = vpop.permute.xlu0 %1815
        %1817 = vrot.lane.b32.xlu0 %v1436, 64
        %v1818 = vpop.permute.xlu0 %1817
        %1819 = vrot.lane.b32.xlu0 %v1485, 64
        %v1820 = vpop.permute.xlu0 %1819
        %1821 = vrot.lane.b32.xlu0 %v1534, 64
        %v1822 = vpop.permute.xlu0 %1821
        %1823 = vrot.lane.b32.xlu0 %v1583, 64
        %v1824 = vpop.permute.xlu0 %1823
        %1825 = vrot.lane.b32.xlu0 %v1632, 64
        %v1826 = vpop.permute.xlu0 %1825
        %1827 = vrot.lane.b32.xlu0 %v1681, 64
        %v1828 = vpop.permute.xlu0 %1827
        %v1836 = vmax.f32 %v1387, %v1816
        %v1837 = vmax.f32 %v1436, %v1818
        %v1838 = vmax.f32 %v1485, %v1820
        %v1839 = vmax.f32 %v1534, %v1822
        %v1840 = vmax.f32 %v1583, %v1824
        %v1841 = vmax.f32 %v1632, %v1826
        %v1842 = vmax.f32 %v1681, %v1828
        %1850 = vrot.lane.b32.xlu0 %v1394, 64
        %v1851 = vpop.permute.xlu0 %1850
        %1852 = vrot.lane.b32.xlu0 %v1443, 64
        %v1853 = vpop.permute.xlu0 %1852
        %1854 = vrot.lane.b32.xlu0 %v1492, 64
        %v1855 = vpop.permute.xlu0 %1854
        %1856 = vrot.lane.b32.xlu0 %v1541, 64
        %v1857 = vpop.permute.xlu0 %1856
        %1858 = vrot.lane.b32.xlu0 %v1590, 64
        %v1859 = vpop.permute.xlu0 %1858
        %1860 = vrot.lane.b32.xlu0 %v1639, 64
        %v1861 = vpop.permute.xlu0 %1860
        %1862 = vrot.lane.b32.xlu0 %v1688, 64
        %v1863 = vpop.permute.xlu0 %1862
        %v1871 = vmax.f32 %v1394, %v1851
        %v1872 = vmax.f32 %v1443, %v1853
        %v1873 = vmax.f32 %v1492, %v1855
        %v1874 = vmax.f32 %v1541, %v1857
        %v1875 = vmax.f32 %v1590, %v1859
        %v1876 = vmax.f32 %v1639, %v1861
        %v1877 = vmax.f32 %v1688, %v1863
        %1885 = vrot.lane.b32.xlu0 %v1401, 64
        %v1886 = vpop.permute.xlu0 %1885
        %1887 = vrot.lane.b32.xlu0 %v1450, 64
        %v1888 = vpop.permute.xlu0 %1887
        %1889 = vrot.lane.b32.xlu0 %v1499, 64
        %v1890 = vpop.permute.xlu0 %1889
        %1891 = vrot.lane.b32.xlu0 %v1548, 64
        %v1892 = vpop.permute.xlu0 %1891
        %1893 = vrot.lane.b32.xlu0 %v1597, 64
        %v1894 = vpop.permute.xlu0 %1893
        %1895 = vrot.lane.b32.xlu0 %v1646, 64
        %v1896 = vpop.permute.xlu0 %1895
        %1897 = vrot.lane.b32.xlu0 %v1695, 64
        %v1898 = vpop.permute.xlu0 %1897
        %v1906 = vmax.f32 %v1401, %v1886
        %v1907 = vmax.f32 %v1450, %v1888
        %v1908 = vmax.f32 %v1499, %v1890
        %v1909 = vmax.f32 %v1548, %v1892
        %v1910 = vmax.f32 %v1597, %v1894
        %v1911 = vmax.f32 %v1646, %v1896
        %v1912 = vmax.f32 %v1695, %v1898
        %1920 = vrot.lane.b32.xlu0 %v1408, 64
        %v1921 = vpop.permute.xlu0 %1920
        %1922 = vrot.lane.b32.xlu0 %v1457, 64
        %v1923 = vpop.permute.xlu0 %1922
        %1924 = vrot.lane.b32.xlu0 %v1506, 64
        %v1925 = vpop.permute.xlu0 %1924
        %1926 = vrot.lane.b32.xlu0 %v1555, 64
        %v1927 = vpop.permute.xlu0 %1926
        %1928 = vrot.lane.b32.xlu0 %v1604, 64
        %v1929 = vpop.permute.xlu0 %1928
        %1930 = vrot.lane.b32.xlu0 %v1653, 64
        %v1931 = vpop.permute.xlu0 %1930
        %1932 = vrot.lane.b32.xlu0 %v1702, 64
        %v1933 = vpop.permute.xlu0 %1932
        %v1941 = vmax.f32 %v1408, %v1921
        %v1942 = vmax.f32 %v1457, %v1923
        %v1943 = vmax.f32 %v1506, %v1925
        %v1944 = vmax.f32 %v1555, %v1927
        %v1945 = vmax.f32 %v1604, %v1929
        %v1946 = vmax.f32 %v1653, %v1931
        %v1947 = vmax.f32 %v1702, %v1933
        %v1955 = vrot.slane %v1766, 7
        %v1956 = vrot.slane %v1767, 7
        %v1957 = vrot.slane %v1768, 7
        %v1958 = vrot.slane %v1769, 7
        %v1959 = vrot.slane %v1770, 7
        %v1960 = vrot.slane %v1771, 7
        %v1961 = vrot.slane %v1772, 7
        %v1976 = vrot.slane %v1801, 6
        %v1977 = vrot.slane %v1802, 6
        %v1978 = vrot.slane %v1803, 6
        %v1979 = vrot.slane %v1804, 6
        %v1980 = vrot.slane %v1805, 6
        %v1981 = vrot.slane %v1806, 6
        %v1982 = vrot.slane %v1807, 6
        %v1997 = vrot.slane %v1836, 5
        %v1998 = vrot.slane %v1837, 5
        %v1999 = vrot.slane %v1838, 5
        %v2000 = vrot.slane %v1839, 5
        %v2001 = vrot.slane %v1840, 5
        %v2002 = vrot.slane %v1841, 5
        %v2003 = vrot.slane %v1842, 5
        %v2018 = vrot.slane %v1871, 4
        %v2019 = vrot.slane %v1872, 4
        %v2020 = vrot.slane %v1873, 4
        %v2021 = vrot.slane %v1874, 4
        %v2022 = vrot.slane %v1875, 4
        %v2023 = vrot.slane %v1876, 4
        %v2024 = vrot.slane %v1877, 4
        %v2039 = vrot.slane %v1906, 3
        %v2040 = vrot.slane %v1907, 3
        %v2041 = vrot.slane %v1908, 3
        %v2042 = vrot.slane %v1909, 3
        %v2043 = vrot.slane %v1910, 3
        %v2044 = vrot.slane %v1911, 3
        %v2045 = vrot.slane %v1912, 3
        %v2060 = vrot.slane %v1941, 2
        %v2061 = vrot.slane %v1942, 2
        %v2062 = vrot.slane %v1943, 2
        %v2063 = vrot.slane %v1944, 2
        %v2064 = vrot.slane %v1945, 2
        %v2065 = vrot.slane %v1946, 2
        %v2066 = vrot.slane %v1947, 2
        %vm2074 = vcmask 1040384
        %v2075 = vsel %vm2074, %v1731, %v1955
        %v2076 = vsel %vm2074, %v1732, %v1956
        %v2077 = vsel %vm2074, %v1733, %v1957
        %v2078 = vsel %vm2074, %v1734, %v1958
        %v2079 = vsel %vm2074, %v1735, %v1959
        %v2080 = vsel %vm2074, %v1736, %v1960
        %v2081 = vsel %vm2074, %v1737, %v1961
        %v2082 = vsel %vm1359, %v2075, %v1976
        %v2083 = vsel %vm1359, %v2076, %v1977
        %v2084 = vsel %vm1359, %v2077, %v1978
        %v2085 = vsel %vm1359, %v2078, %v1979
        %v2086 = vsel %vm1359, %v2079, %v1980
        %v2087 = vsel %vm1359, %v2080, %v1981
        %v2088 = vsel %vm1359, %v2081, %v1982
        %vm2089 = vcmask 1042432
        %v2090 = vsel %vm2089, %v2082, %v1997
        %v2091 = vsel %vm2089, %v2083, %v1998
        %v2092 = vsel %vm2089, %v2084, %v1999
        %v2093 = vsel %vm2089, %v2085, %v2000
        %v2094 = vsel %vm2089, %v2086, %v2001
        %v2095 = vsel %vm2089, %v2087, %v2002
        %v2096 = vsel %vm2089, %v2088, %v2003
        %vm2097 = vcmask 1043456
        %v2098 = vsel %vm2097, %v2090, %v2018
        %v2099 = vsel %vm2097, %v2091, %v2019
        %v2100 = vsel %vm2097, %v2092, %v2020
        %v2101 = vsel %vm2097, %v2093, %v2021
        %v2102 = vsel %vm2097, %v2094, %v2022
        %v2103 = vsel %vm2097, %v2095, %v2023
        %v2104 = vsel %vm2097, %v2096, %v2024
        %vm2105 = vcmask 1044480
        %v2106 = vsel %vm2105, %v2098, %v2039
        %v2107 = vsel %vm2105, %v2099, %v2040
        %v2108 = vsel %vm2105, %v2100, %v2041
        %v2109 = vsel %vm2105, %v2101, %v2042
        %v2110 = vsel %vm2105, %v2102, %v2043
        %v2111 = vsel %vm2105, %v2103, %v2044
        %v2112 = vsel %vm2105, %v2104, %v2045
        %v2113 = vsel %vm503, %v2106, %v2060
        %v2114 = vsel %vm503, %v2107, %v2061
        %v2115 = vsel %vm503, %v2108, %v2062
        %v2116 = vsel %vm503, %v2109, %v2063
        %v2117 = vsel %vm503, %v2110, %v2064
        %v2118 = vsel %vm503, %v2111, %v2065
        %v2119 = vsel %vm503, %v2112, %v2066
        %v2125 = vrot.slane %v2113, 1
        %v2126 = vrot.slane %v2114, 1
        %v2127 = vrot.slane %v2115, 1
        %v2128 = vrot.slane %v2116, 1
        %v2129 = vrot.slane %v2117, 1
        %2130 = vrot.lane.b32.xlu0 %v2125, 64
        %v2131 = vpop.permute.xlu0 %2130
        %2132 = vrot.lane.b32.xlu0 %v2126, 64
        %v2133 = vpop.permute.xlu0 %2132
        %2134 = vrot.lane.b32.xlu0 %v2127, 64
        %v2135 = vpop.permute.xlu0 %2134
        %2136 = vrot.lane.b32.xlu0 %v2128, 64
        %v2137 = vpop.permute.xlu0 %2136
        %2138 = vrot.lane.b32.xlu0 %v2129, 64
        %v2139 = vpop.permute.xlu0 %2138
        %v2145 = vrot.slane %v2113, 2
        %v2146 = vrot.slane %v2114, 2
        %v2147 = vrot.slane %v2115, 2
        %v2148 = vrot.slane %v2116, 2
        %v2149 = vrot.slane %v2117, 2
        %2156 = vrot.lane.b32.xlu0 %v2114, 64
        %v2157 = vpop.permute.xlu0 %2156
        %2158 = vrot.lane.b32.xlu0 %v2115, 64
        %v2159 = vpop.permute.xlu0 %2158
        %2160 = vrot.lane.b32.xlu0 %v2116, 64
        %v2161 = vpop.permute.xlu0 %2160
        %2162 = vrot.lane.b32.xlu0 %v2117, 64
        %v2163 = vpop.permute.xlu0 %2162
        %2164 = vrot.lane.b32.xlu0 %v2118, 64
        %v2165 = vpop.permute.xlu0 %2164
        %v2171 = vrot.slane %v2118, 1
        %v2177 = vrot.slane %v2118, 2
        %2178 = vrot.lane.b32.xlu0 %v2146, 64
        %v2179 = vpop.permute.xlu0 %2178
        %2180 = vrot.lane.b32.xlu0 %v2147, 64
        %v2181 = vpop.permute.xlu0 %2180
        %2182 = vrot.lane.b32.xlu0 %v2148, 64
        %v2183 = vpop.permute.xlu0 %2182
        %2184 = vrot.lane.b32.xlu0 %v2149, 64
        %v2185 = vpop.permute.xlu0 %2184
        %2186 = vrot.lane.b32.xlu0 %v2177, 64
        %v2187 = vpop.permute.xlu0 %2186
        %v2194 = vrot.slane %v2119, 1
        %2195 = vrot.lane.b32.xlu0 %v2171, 64
        %v2196 = vpop.permute.xlu0 %2195
        %2197 = vrot.lane.b32.xlu0 %v2194, 64
        %v2198 = vpop.permute.xlu0 %2197
        %v2201 = vrot.slane %v2119, 2
        %vm2202 = vcmask 523264
        %v2203 = vsel %vm2202, %v2113, %v2131
        %v2204 = vsel %vm2202, %v2114, %v2133
        %v2205 = vsel %vm2202, %v2115, %v2135
        %v2206 = vsel %vm2202, %v2116, %v2137
        %v2207 = vsel %vm2202, %v2117, %v2139
        %v2208 = vsel %vm2202, %v2145, %v2157
        %v2209 = vsel %vm2202, %v2146, %v2159
        %v2210 = vsel %vm2202, %v2147, %v2161
        %v2211 = vsel %vm2202, %v2148, %v2163
        %v2212 = vsel %vm2202, %v2149, %v2165
        %v2213 = vsel %vm2202, %v2126, %v2179
        %v2214 = vsel %vm2202, %v2127, %v2181
        %v2215 = vsel %vm2202, %v2128, %v2183
        %v2216 = vsel %vm2202, %v2129, %v2185
        %v2217 = vsel %vm2202, %v2171, %v2187
        %v2218 = vsel %vm2202, %v2118, %v2196
        %v2219 = vsel %vm2202, %v2119, %v2198
        %v2237 = vcombine.low %v2203, %v2208
        %v2238 = vcombine.high %v2203, %v2208
        %v2239 = vcombine.low %v2213, %v2205
        %v2240 = vcombine.high %v2213, %v2205
        %v2241 = vcombine.high %v2147, %v2147
        %v2243 = vunpack.c.l.s4 1966171168
        %v2244 = vunpack.c.0.s8 %v2243
        %v2245 = vlaneseq
        %v2246 = vshrl.u32 %v2245, 7
        %v2247 = vsub.s32 %v2244, %v2246
        %v2248 = vrot.slane %v2237, %v2247
        %v2250 = vunpack.c.l.s4 1966171168
        %v2251 = vunpack.c.0.s8 %v2250
        %v2252 = vlaneseq
        %v2253 = vshrl.u32 %v2252, 7
        %v2254 = vsub.s32 %v2251, %v2253
        %v2255 = vrot.slane %v2238, %v2254
        %v2257 = vunpack.c.l.s4 1966171168
        %v2258 = vunpack.c.0.s8 %v2257
        %v2259 = vlaneseq
        %v2260 = vshrl.u32 %v2259, 7
        %v2261 = vsub.s32 %v2258, %v2260
        %v2262 = vrot.slane %v2239, %v2261
        %v2264 = vunpack.c.l.s4 1966171168
        %v2265 = vunpack.c.0.s8 %v2264
        %v2266 = vlaneseq
        %v2267 = vshrl.u32 %v2266, 7
        %v2268 = vsub.s32 %v2265, %v2267
        %v2269 = vrot.slane %v2240, %v2268
        %v2271 = vunpack.c.l.s4 1966171168
        %v2272 = vunpack.c.0.s8 %v2271
        %v2273 = vlaneseq
        %v2274 = vshrl.u32 %v2273, 7
        %v2275 = vsub.s32 %v2272, %v2274
        %v2276 = vrot.slane %v2147, %v2275
        %v2278 = vunpack.c.l.s4 1966171168
        %v2279 = vunpack.c.0.s8 %v2278
        %v2280 = vlaneseq
        %v2281 = vshrl.u32 %v2280, 7
        %v2282 = vsub.s32 %v2279, %v2281
        %v2283 = vrot.slane %v2241, %v2282
        %v2284 = vcombine.low %v2248, %v2262
        %v2285 = vcombine.high %v2248, %v2262
        %v2286 = vcombine.low %v2255, %v2269
        %v2287 = vcombine.high %v2276, %v2276
        %v2289 = vunpack.c.l.s4 1966171168
        %v2290 = vunpack.c.0.s8 %v2289
        %v2291 = vlaneseq
        %v2292 = vshrl.u32 %v2291, 7
        %v2293 = vsub.s32 %v2290, %v2292
        %v2294 = vrot.slane %v2284, %v2293
        %v2296 = vunpack.c.l.s4 1966171168
        %v2297 = vunpack.c.0.s8 %v2296
        %v2298 = vlaneseq
        %v2299 = vshrl.u32 %v2298, 7
        %v2300 = vsub.s32 %v2297, %v2299
        %v2301 = vrot.slane %v2286, %v2300
        %v2303 = vunpack.c.l.s4 1966171168
        %v2304 = vunpack.c.0.s8 %v2303
        %v2305 = vlaneseq
        %v2306 = vshrl.u32 %v2305, 7
        %v2307 = vsub.s32 %v2304, %v2306
        %v2308 = vrot.slane %v2285, %v2307
        %v2310 = vunpack.c.l.s4 1966171168
        %v2311 = vunpack.c.0.s8 %v2310
        %v2312 = vlaneseq
        %v2313 = vshrl.u32 %v2312, 7
        %v2314 = vsub.s32 %v2311, %v2313
        %v2315 = vrot.slane %v2276, %v2314
        %v2317 = vunpack.c.l.s4 1966171168
        %v2318 = vunpack.c.0.s8 %v2317
        %v2319 = vlaneseq
        %v2320 = vshrl.u32 %v2319, 7
        %v2321 = vsub.s32 %v2318, %v2320
        %v2322 = vrot.slane %v2283, %v2321
        %v2324 = vunpack.c.l.s4 1966171168
        %v2325 = vunpack.c.0.s8 %v2324
        %v2326 = vlaneseq
        %v2327 = vshrl.u32 %v2326, 7
        %v2328 = vsub.s32 %v2325, %v2327
        %v2329 = vrot.slane %v2287, %v2328
        %v2330 = vcombine.low %v2294, %v2315
        %v2331 = vcombine.high %v2294, %v2315
        %v2332 = vcombine.low %v2301, %v2322
        %v2333 = vcombine.low %v2308, %v2329
        %v2334 = vcombine.high %v2308, %v2329
        %v2335 = vcombine.low %v2204, %v2209
        %v2336 = vcombine.high %v2204, %v2209
        %v2337 = vcombine.low %v2214, %v2206
        %v2338 = vcombine.high %v2214, %v2206
        %v2339 = vcombine.high %v2148, %v2148
        %v2341 = vunpack.c.l.s4 1966171168
        %v2342 = vunpack.c.0.s8 %v2341
        %v2343 = vlaneseq
        %v2344 = vshrl.u32 %v2343, 7
        %v2345 = vsub.s32 %v2342, %v2344
        %v2346 = vrot.slane %v2335, %v2345
        %v2348 = vunpack.c.l.s4 1966171168
        %v2349 = vunpack.c.0.s8 %v2348
        %v2350 = vlaneseq
        %v2351 = vshrl.u32 %v2350, 7
        %v2352 = vsub.s32 %v2349, %v2351
        %v2353 = vrot.slane %v2336, %v2352
        %v2355 = vunpack.c.l.s4 1966171168
        %v2356 = vunpack.c.0.s8 %v2355
        %v2357 = vlaneseq
        %v2358 = vshrl.u32 %v2357, 7
        %v2359 = vsub.s32 %v2356, %v2358
        %v2360 = vrot.slane %v2337, %v2359
        %v2362 = vunpack.c.l.s4 1966171168
        %v2363 = vunpack.c.0.s8 %v2362
        %v2364 = vlaneseq
        %v2365 = vshrl.u32 %v2364, 7
        %v2366 = vsub.s32 %v2363, %v2365
        %v2367 = vrot.slane %v2338, %v2366
        %v2369 = vunpack.c.l.s4 1966171168
        %v2370 = vunpack.c.0.s8 %v2369
        %v2371 = vlaneseq
        %v2372 = vshrl.u32 %v2371, 7
        %v2373 = vsub.s32 %v2370, %v2372
        %v2374 = vrot.slane %v2148, %v2373
        %v2376 = vunpack.c.l.s4 1966171168
        %v2377 = vunpack.c.0.s8 %v2376
        %v2378 = vlaneseq
        %v2379 = vshrl.u32 %v2378, 7
        %v2380 = vsub.s32 %v2377, %v2379
        %v2381 = vrot.slane %v2339, %v2380
        %v2382 = vcombine.low %v2346, %v2360
        %v2383 = vcombine.high %v2346, %v2360
        %v2384 = vcombine.low %v2353, %v2367
        %v2385 = vcombine.high %v2374, %v2374
        %v2387 = vunpack.c.l.s4 1966171168
        %v2388 = vunpack.c.0.s8 %v2387
        %v2389 = vlaneseq
        %v2390 = vshrl.u32 %v2389, 7
        %v2391 = vsub.s32 %v2388, %v2390
        %v2392 = vrot.slane %v2382, %v2391
        %v2394 = vunpack.c.l.s4 1966171168
        %v2395 = vunpack.c.0.s8 %v2394
        %v2396 = vlaneseq
        %v2397 = vshrl.u32 %v2396, 7
        %v2398 = vsub.s32 %v2395, %v2397
        %v2399 = vrot.slane %v2384, %v2398
        %v2401 = vunpack.c.l.s4 1966171168
        %v2402 = vunpack.c.0.s8 %v2401
        %v2403 = vlaneseq
        %v2404 = vshrl.u32 %v2403, 7
        %v2405 = vsub.s32 %v2402, %v2404
        %v2406 = vrot.slane %v2383, %v2405
        %v2408 = vunpack.c.l.s4 1966171168
        %v2409 = vunpack.c.0.s8 %v2408
        %v2410 = vlaneseq
        %v2411 = vshrl.u32 %v2410, 7
        %v2412 = vsub.s32 %v2409, %v2411
        %v2413 = vrot.slane %v2374, %v2412
        %v2415 = vunpack.c.l.s4 1966171168
        %v2416 = vunpack.c.0.s8 %v2415
        %v2417 = vlaneseq
        %v2418 = vshrl.u32 %v2417, 7
        %v2419 = vsub.s32 %v2416, %v2418
        %v2420 = vrot.slane %v2381, %v2419
        %v2422 = vunpack.c.l.s4 1966171168
        %v2423 = vunpack.c.0.s8 %v2422
        %v2424 = vlaneseq
        %v2425 = vshrl.u32 %v2424, 7
        %v2426 = vsub.s32 %v2423, %v2425
        %v2427 = vrot.slane %v2385, %v2426
        %v2428 = vcombine.low %v2392, %v2413
        %v2429 = vcombine.high %v2392, %v2413
        %v2430 = vcombine.low %v2399, %v2420
        %v2431 = vcombine.low %v2406, %v2427
        %v2432 = vcombine.high %v2406, %v2427
        %v2433 = vcombine.low %v2205, %v2210
        %v2434 = vcombine.high %v2205, %v2210
        %v2435 = vcombine.low %v2215, %v2207
        %v2436 = vcombine.high %v2215, %v2207
        %v2437 = vcombine.high %v2149, %v2149
        %v2439 = vunpack.c.l.s4 1966171168
        %v2440 = vunpack.c.0.s8 %v2439
        %v2441 = vlaneseq
        %v2442 = vshrl.u32 %v2441, 7
        %v2443 = vsub.s32 %v2440, %v2442
        %v2444 = vrot.slane %v2433, %v2443
        %v2446 = vunpack.c.l.s4 1966171168
        %v2447 = vunpack.c.0.s8 %v2446
        %v2448 = vlaneseq
        %v2449 = vshrl.u32 %v2448, 7
        %v2450 = vsub.s32 %v2447, %v2449
        %v2451 = vrot.slane %v2434, %v2450
        %v2453 = vunpack.c.l.s4 1966171168
        %v2454 = vunpack.c.0.s8 %v2453
        %v2455 = vlaneseq
        %v2456 = vshrl.u32 %v2455, 7
        %v2457 = vsub.s32 %v2454, %v2456
        %v2458 = vrot.slane %v2435, %v2457
        %v2460 = vunpack.c.l.s4 1966171168
        %v2461 = vunpack.c.0.s8 %v2460
        %v2462 = vlaneseq
        %v2463 = vshrl.u32 %v2462, 7
        %v2464 = vsub.s32 %v2461, %v2463
        %v2465 = vrot.slane %v2436, %v2464
        %v2467 = vunpack.c.l.s4 1966171168
        %v2468 = vunpack.c.0.s8 %v2467
        %v2469 = vlaneseq
        %v2470 = vshrl.u32 %v2469, 7
        %v2471 = vsub.s32 %v2468, %v2470
        %v2472 = vrot.slane %v2149, %v2471
        %v2474 = vunpack.c.l.s4 1966171168
        %v2475 = vunpack.c.0.s8 %v2474
        %v2476 = vlaneseq
        %v2477 = vshrl.u32 %v2476, 7
        %v2478 = vsub.s32 %v2475, %v2477
        %v2479 = vrot.slane %v2437, %v2478
        %v2480 = vcombine.low %v2444, %v2458
        %v2481 = vcombine.high %v2444, %v2458
        %v2482 = vcombine.low %v2451, %v2465
        %v2483 = vcombine.high %v2472, %v2472
        %v2485 = vunpack.c.l.s4 1966171168
        %v2486 = vunpack.c.0.s8 %v2485
        %v2487 = vlaneseq
        %v2488 = vshrl.u32 %v2487, 7
        %v2489 = vsub.s32 %v2486, %v2488
        %v2490 = vrot.slane %v2480, %v2489
        %v2492 = vunpack.c.l.s4 1966171168
        %v2493 = vunpack.c.0.s8 %v2492
        %v2494 = vlaneseq
        %v2495 = vshrl.u32 %v2494, 7
        %v2496 = vsub.s32 %v2493, %v2495
        %v2497 = vrot.slane %v2482, %v2496
        %v2499 = vunpack.c.l.s4 1966171168
        %v2500 = vunpack.c.0.s8 %v2499
        %v2501 = vlaneseq
        %v2502 = vshrl.u32 %v2501, 7
        %v2503 = vsub.s32 %v2500, %v2502
        %v2504 = vrot.slane %v2481, %v2503
        %v2506 = vunpack.c.l.s4 1966171168
        %v2507 = vunpack.c.0.s8 %v2506
        %v2508 = vlaneseq
        %v2509 = vshrl.u32 %v2508, 7
        %v2510 = vsub.s32 %v2507, %v2509
        %v2511 = vrot.slane %v2472, %v2510
        %v2513 = vunpack.c.l.s4 1966171168
        %v2514 = vunpack.c.0.s8 %v2513
        %v2515 = vlaneseq
        %v2516 = vshrl.u32 %v2515, 7
        %v2517 = vsub.s32 %v2514, %v2516
        %v2518 = vrot.slane %v2479, %v2517
        %v2520 = vunpack.c.l.s4 1966171168
        %v2521 = vunpack.c.0.s8 %v2520
        %v2522 = vlaneseq
        %v2523 = vshrl.u32 %v2522, 7
        %v2524 = vsub.s32 %v2521, %v2523
        %v2525 = vrot.slane %v2483, %v2524
        %v2526 = vcombine.low %v2490, %v2511
        %v2527 = vcombine.high %v2490, %v2511
        %v2528 = vcombine.low %v2497, %v2518
        %v2529 = vcombine.low %v2504, %v2525
        %v2530 = vcombine.high %v2504, %v2525
        %v2531 = vcombine.low %v2206, %v2211
        %v2532 = vcombine.high %v2206, %v2211
        %v2533 = vcombine.low %v2216, %v2218
        %v2534 = vcombine.high %v2216, %v2218
        %v2535 = vcombine.high %v2177, %v2177
        %v2537 = vunpack.c.l.s4 1966171168
        %v2538 = vunpack.c.0.s8 %v2537
        %v2539 = vlaneseq
        %v2540 = vshrl.u32 %v2539, 7
        %v2541 = vsub.s32 %v2538, %v2540
        %v2542 = vrot.slane %v2531, %v2541
        %v2544 = vunpack.c.l.s4 1966171168
        %v2545 = vunpack.c.0.s8 %v2544
        %v2546 = vlaneseq
        %v2547 = vshrl.u32 %v2546, 7
        %v2548 = vsub.s32 %v2545, %v2547
        %v2549 = vrot.slane %v2532, %v2548
        %v2551 = vunpack.c.l.s4 1966171168
        %v2552 = vunpack.c.0.s8 %v2551
        %v2553 = vlaneseq
        %v2554 = vshrl.u32 %v2553, 7
        %v2555 = vsub.s32 %v2552, %v2554
        %v2556 = vrot.slane %v2533, %v2555
        %v2558 = vunpack.c.l.s4 1966171168
        %v2559 = vunpack.c.0.s8 %v2558
        %v2560 = vlaneseq
        %v2561 = vshrl.u32 %v2560, 7
        %v2562 = vsub.s32 %v2559, %v2561
        %v2563 = vrot.slane %v2534, %v2562
        %v2565 = vunpack.c.l.s4 1966171168
        %v2566 = vunpack.c.0.s8 %v2565
        %v2567 = vlaneseq
        %v2568 = vshrl.u32 %v2567, 7
        %v2569 = vsub.s32 %v2566, %v2568
        %v2570 = vrot.slane %v2177, %v2569
        %v2572 = vunpack.c.l.s4 1966171168
        %v2573 = vunpack.c.0.s8 %v2572
        %v2574 = vlaneseq
        %v2575 = vshrl.u32 %v2574, 7
        %v2576 = vsub.s32 %v2573, %v2575
        %v2577 = vrot.slane %v2535, %v2576
        %v2578 = vcombine.low %v2542, %v2556
        %v2579 = vcombine.high %v2542, %v2556
        %v2580 = vcombine.low %v2549, %v2563
        %v2581 = vcombine.high %v2570, %v2570
        %v2583 = vunpack.c.l.s4 1966171168
        %v2584 = vunpack.c.0.s8 %v2583
        %v2585 = vlaneseq
        %v2586 = vshrl.u32 %v2585, 7
        %v2587 = vsub.s32 %v2584, %v2586
        %v2588 = vrot.slane %v2578, %v2587
        %v2590 = vunpack.c.l.s4 1966171168
        %v2591 = vunpack.c.0.s8 %v2590
        %v2592 = vlaneseq
        %v2593 = vshrl.u32 %v2592, 7
        %v2594 = vsub.s32 %v2591, %v2593
        %v2595 = vrot.slane %v2580, %v2594
        %v2597 = vunpack.c.l.s4 1966171168
        %v2598 = vunpack.c.0.s8 %v2597
        %v2599 = vlaneseq
        %v2600 = vshrl.u32 %v2599, 7
        %v2601 = vsub.s32 %v2598, %v2600
        %v2602 = vrot.slane %v2579, %v2601
        %v2604 = vunpack.c.l.s4 1966171168
        %v2605 = vunpack.c.0.s8 %v2604
        %v2606 = vlaneseq
        %v2607 = vshrl.u32 %v2606, 7
        %v2608 = vsub.s32 %v2605, %v2607
        %v2609 = vrot.slane %v2570, %v2608
        %v2611 = vunpack.c.l.s4 1966171168
        %v2612 = vunpack.c.0.s8 %v2611
        %v2613 = vlaneseq
        %v2614 = vshrl.u32 %v2613, 7
        %v2615 = vsub.s32 %v2612, %v2614
        %v2616 = vrot.slane %v2577, %v2615
        %v2618 = vunpack.c.l.s4 1966171168
        %v2619 = vunpack.c.0.s8 %v2618
        %v2620 = vlaneseq
        %v2621 = vshrl.u32 %v2620, 7
        %v2622 = vsub.s32 %v2619, %v2621
        %v2623 = vrot.slane %v2581, %v2622
        %v2624 = vcombine.low %v2588, %v2609
        %v2625 = vcombine.high %v2588, %v2609
        %v2626 = vcombine.low %v2595, %v2616
        %v2627 = vcombine.low %v2602, %v2623
        %v2628 = vcombine.high %v2602, %v2623
        %v2629 = vcombine.low %v2207, %v2212
        %v2630 = vcombine.high %v2207, %v2212
        %v2631 = vcombine.low %v2217, %v2219
        %v2632 = vcombine.high %v2217, %v2219
        %v2633 = vcombine.high %v2201, %v2201
        %v2635 = vunpack.c.l.s4 1966171168
        %v2636 = vunpack.c.0.s8 %v2635
        %v2637 = vlaneseq
        %v2638 = vshrl.u32 %v2637, 7
        %v2639 = vsub.s32 %v2636, %v2638
        %v2640 = vrot.slane %v2629, %v2639
        %v2642 = vunpack.c.l.s4 1966171168
        %v2643 = vunpack.c.0.s8 %v2642
        %v2644 = vlaneseq
        %v2645 = vshrl.u32 %v2644, 7
        %v2646 = vsub.s32 %v2643, %v2645
        %v2647 = vrot.slane %v2630, %v2646
        %v2649 = vunpack.c.l.s4 1966171168
        %v2650 = vunpack.c.0.s8 %v2649
        %v2651 = vlaneseq
        %v2652 = vshrl.u32 %v2651, 7
        %v2653 = vsub.s32 %v2650, %v2652
        %v2654 = vrot.slane %v2631, %v2653
        %v2656 = vunpack.c.l.s4 1966171168
        %v2657 = vunpack.c.0.s8 %v2656
        %v2658 = vlaneseq
        %v2659 = vshrl.u32 %v2658, 7
        %v2660 = vsub.s32 %v2657, %v2659
        %v2661 = vrot.slane %v2632, %v2660
        %v2663 = vunpack.c.l.s4 1966171168
        %v2664 = vunpack.c.0.s8 %v2663
        %v2665 = vlaneseq
        %v2666 = vshrl.u32 %v2665, 7
        %v2667 = vsub.s32 %v2664, %v2666
        %v2668 = vrot.slane %v2201, %v2667
        %v2670 = vunpack.c.l.s4 1966171168
        %v2671 = vunpack.c.0.s8 %v2670
        %v2672 = vlaneseq
        %v2673 = vshrl.u32 %v2672, 7
        %v2674 = vsub.s32 %v2671, %v2673
        %v2675 = vrot.slane %v2633, %v2674
        %v2676 = vcombine.low %v2640, %v2654
        %v2677 = vcombine.high %v2640, %v2654
        %v2678 = vcombine.low %v2647, %v2661
        %v2679 = vcombine.high %v2668, %v2668
        %v2681 = vunpack.c.l.s4 1966171168
        %v2682 = vunpack.c.0.s8 %v2681
        %v2683 = vlaneseq
        %v2684 = vshrl.u32 %v2683, 7
        %v2685 = vsub.s32 %v2682, %v2684
        %v2686 = vrot.slane %v2676, %v2685
        %v2688 = vunpack.c.l.s4 1966171168
        %v2689 = vunpack.c.0.s8 %v2688
        %v2690 = vlaneseq
        %v2691 = vshrl.u32 %v2690, 7
        %v2692 = vsub.s32 %v2689, %v2691
        %v2693 = vrot.slane %v2678, %v2692
        %v2695 = vunpack.c.l.s4 1966171168
        %v2696 = vunpack.c.0.s8 %v2695
        %v2697 = vlaneseq
        %v2698 = vshrl.u32 %v2697, 7
        %v2699 = vsub.s32 %v2696, %v2698
        %v2700 = vrot.slane %v2677, %v2699
        %v2702 = vunpack.c.l.s4 1966171168
        %v2703 = vunpack.c.0.s8 %v2702
        %v2704 = vlaneseq
        %v2705 = vshrl.u32 %v2704, 7
        %v2706 = vsub.s32 %v2703, %v2705
        %v2707 = vrot.slane %v2668, %v2706
        %v2709 = vunpack.c.l.s4 1966171168
        %v2710 = vunpack.c.0.s8 %v2709
        %v2711 = vlaneseq
        %v2712 = vshrl.u32 %v2711, 7
        %v2713 = vsub.s32 %v2710, %v2712
        %v2714 = vrot.slane %v2675, %v2713
        %v2716 = vunpack.c.l.s4 1966171168
        %v2717 = vunpack.c.0.s8 %v2716
        %v2718 = vlaneseq
        %v2719 = vshrl.u32 %v2718, 7
        %v2720 = vsub.s32 %v2717, %v2719
        %v2721 = vrot.slane %v2679, %v2720
        %v2722 = vcombine.low %v2686, %v2707
        %v2723 = vcombine.high %v2686, %v2707
        %v2724 = vcombine.low %v2693, %v2714
        %v2725 = vcombine.low %v2700, %v2721
        %v2726 = vcombine.high %v2700, %v2721
        %v2727 = vld [vmem:[#allocation8] sm:$0xff]
        %v2728 = vld [vmem:[#allocation8 + $0x8] sm:$0xff]
        %v2729 = vld [vmem:[#allocation8 + $0x10] sm:$0xff]
        %v2730 = vld [vmem:[#allocation8 + $0x18] sm:$0xff]
        %v2731 = vld [vmem:[#allocation8 + $0x20] sm:$0xff]
        %v2732 = vld [vmem:[#allocation8 + $0x28] sm:$0xff]
        %v2733 = vld [vmem:[#allocation8 + $0x30] sm:$0xff]
        %v2734 = vld [vmem:[#allocation8 + $0x38] sm:$0xff]
        %v2735 = vld [vmem:[#allocation8 + $0x40] sm:$0xff]
        %v2736 = vld [vmem:[#allocation8 + $0x48] sm:$0xff]
        %v2737 = vld [vmem:[#allocation8 + $0x50] sm:$0xff]
        %v2738 = vld [vmem:[#allocation8 + $0x58] sm:$0xff]
        %v2739 = vld [vmem:[#allocation8 + $0x60] sm:$0xff]
        %v2740 = vld [vmem:[#allocation8 + $0x68] sm:$0xff]
        %v2741 = vld [vmem:[#allocation8 + $0x70] sm:$0xff]
        %v2742 = vld [vmem:[#allocation8 + $0x78] sm:$0xff]
        %v2743 = vld [vmem:[#allocation8 + $0x80] sm:$0xff]
        %v2744 = vld [vmem:[#allocation8 + $0x88] sm:$0xff]
        %v2745 = vld [vmem:[#allocation8 + $0x90] sm:$0xff]
        %v2746 = vld [vmem:[#allocation8 + $0x98] sm:$0xff]
        %v2747 = vld [vmem:[#allocation8 + $0xa0] sm:$0xff]
        %v2748 = vld [vmem:[#allocation8 + $0xa8] sm:$0xff]
        %v2749 = vld [vmem:[#allocation8 + $0xb0] sm:$0xff]
        %v2750 = vld [vmem:[#allocation8 + $0xb8] sm:$0xff]
        %v2751 = vld [vmem:[#allocation8 + $0xc0] sm:$0xff]
        %v2752 = vld [vmem:[#allocation8 + $0xc8] sm:$0xff]
        %v2753 = vld [vmem:[#allocation8 + $0xd0] sm:$0xff]
        %v2754 = vld [vmem:[#allocation8 + $0xd8] sm:$0xff]
        %v2755 = vld [vmem:[#allocation8 + $0xe0] sm:$0xff]
        %v2756 = vld [vmem:[#allocation8 + $0xe8] sm:$0xff]
        %v2757 = vld [vmem:[#allocation8 + $0xf0] sm:$0xff]
        %v2758 = vld [vmem:[#allocation8 + $0xf8] sm:$0xff]
        %v2759 = vld [vmem:[#allocation8 + $0x100] sm:$0xff]
        %v2760 = vld [vmem:[#allocation8 + $0x108] sm:$0xff]
        %v2761 = vld [vmem:[#allocation8 + $0x110] sm:$0xff]
        %v2762 = vld [vmem:[#allocation8 + $0x118] sm:$0xff]
        %v2763 = vld [vmem:[#allocation8 + $0x120] sm:$0xff]
        %v2764 = vld [vmem:[#allocation8 + $0x128] sm:$0xff]
        %v2765 = vld [vmem:[#allocation8 + $0x130] sm:$0xff]
        %v2766 = vld [vmem:[#allocation8 + $0x138] sm:$0xff]
        %v2767 = vld [vmem:[#allocation8 + $0x140] sm:$0xff]
        %v2768 = vld [vmem:[#allocation8 + $0x148] sm:$0xff]
        %v2769 = vld [vmem:[#allocation8 + $0x150] sm:$0xff]
        %v2770 = vld [vmem:[#allocation8 + $0x158] sm:$0xff]
        %v2771 = vld [vmem:[#allocation8 + $0x160] sm:$0xff]
        %v2772 = vld [vmem:[#allocation8 + $0x168] sm:$0xff]
        %v2773 = vld [vmem:[#allocation8 + $0x170] sm:$0xff]
        %v2774 = vld [vmem:[#allocation8 + $0x178] sm:$0xff]
        %v2775 = vld [vmem:[#allocation8 + $0x180] sm:$0xff]
        %v2776 = vld [vmem:[#allocation8 + $0x188] sm:$0xff]
        %v2777 = vld [vmem:[#allocation8 + $0x190] sm:$0xff]
        %v2778 = vld [vmem:[#allocation8 + $0x198] sm:$0xff]
        %v2779 = vld [vmem:[#allocation8 + $0x1a0] sm:$0xff]
        %v2780 = vld [vmem:[#allocation8 + $0x1a8] sm:$0xff]
        %v2781 = vld [vmem:[#allocation8 + $0x1b0] sm:$0xff]
        %v2782 = vld [vmem:[#allocation8 + $0x1b8] sm:$0xff]
        %v2783 = vld [vmem:[#allocation8 + $0x1c0] sm:$0xff]
        %v2784 = vld [vmem:[#allocation8 + $0x1c8] sm:$0xff]
        %v2785 = vld [vmem:[#allocation8 + $0x1d0] sm:$0xff]
        %v2786 = vld [vmem:[#allocation8 + $0x1d8] sm:$0xff]
        %v2787 = vld [vmem:[#allocation8 + $0x1e0] sm:$0xff]
        %v2788 = vld [vmem:[#allocation8 + $0x1e8] sm:$0xff]
        %v2789 = vld [vmem:[#allocation8 + $0x1f0] sm:$0xff]
        %v2790 = vld [vmem:[#allocation8 + $0x1f8] sm:$0xff]
        %v2791 = vld [vmem:[#allocation8 + $0x200] sm:$0xff]
        %v2792 = vld [vmem:[#allocation8 + $0x208] sm:$0xff]
        %v2793 = vld [vmem:[#allocation8 + $0x210] sm:$0xff]
        %v2794 = vld [vmem:[#allocation8 + $0x218] sm:$0xff]
        %v2795 = vld [vmem:[#allocation8 + $0x220] sm:$0xff]
        %v2796 = vld [vmem:[#allocation8 + $0x228] sm:$0xff]
        %v2797 = vld [vmem:[#allocation8 + $0x230] sm:$0xff]
        %v2798 = vld [vmem:[#allocation8 + $0x238] sm:$0xff]
        %v2799 = vld [vmem:[%s4] sm:$0x1]
        %v2801 = vlaneseq
        %v2802 = vshrl.u32 %v2801, 7
        %v2803 = vsub.s32 0, %v2802
        %v2804 = vrot.slane %v2799, %v2803
        %v2806 = vcombine.low %v2330, %v2333
        %v2807 = vcombine.high %v2330, %v2333
        %v2808 = vcombine.low %v2331, %v2334
        %v2809 = vcombine.high %v2331, %v2334
        %v2810 = vcombine.low %v2332, %v2428
        %v2811 = vcombine.high %v2332, %v2428
        %v2812 = vcombine.low %v2431, %v2429
        %v2813 = vcombine.high %v2431, %v2429
        %v2815 = vunpack.c.l.s4 1966171168
        %v2816 = vunpack.c.0.s8 %v2815
        %v2817 = vlaneseq
        %v2818 = vshrl.u32 %v2817, 7
        %v2819 = vsub.s32 %v2816, %v2818
        %v2820 = vrot.slane %v2806, %v2819
        %v2822 = vunpack.c.l.s4 1966171168
        %v2823 = vunpack.c.0.s8 %v2822
        %v2824 = vlaneseq
        %v2825 = vshrl.u32 %v2824, 7
        %v2826 = vsub.s32 %v2823, %v2825
        %v2827 = vrot.slane %v2807, %v2826
        %v2829 = vunpack.c.l.s4 1966171168
        %v2830 = vunpack.c.0.s8 %v2829
        %v2831 = vlaneseq
        %v2832 = vshrl.u32 %v2831, 7
        %v2833 = vsub.s32 %v2830, %v2832
        %v2834 = vrot.slane %v2808, %v2833
        %v2836 = vunpack.c.l.s4 1966171168
        %v2837 = vunpack.c.0.s8 %v2836
        %v2838 = vlaneseq
        %v2839 = vshrl.u32 %v2838, 7
        %v2840 = vsub.s32 %v2837, %v2839
        %v2841 = vrot.slane %v2809, %v2840
        %v2843 = vunpack.c.l.s4 1966171168
        %v2844 = vunpack.c.0.s8 %v2843
        %v2845 = vlaneseq
        %v2846 = vshrl.u32 %v2845, 7
        %v2847 = vsub.s32 %v2844, %v2846
        %v2848 = vrot.slane %v2810, %v2847
        %v2850 = vunpack.c.l.s4 1966171168
        %v2851 = vunpack.c.0.s8 %v2850
        %v2852 = vlaneseq
        %v2853 = vshrl.u32 %v2852, 7
        %v2854 = vsub.s32 %v2851, %v2853
        %v2855 = vrot.slane %v2811, %v2854
        %v2857 = vunpack.c.l.s4 1966171168
        %v2858 = vunpack.c.0.s8 %v2857
        %v2859 = vlaneseq
        %v2860 = vshrl.u32 %v2859, 7
        %v2861 = vsub.s32 %v2858, %v2860
        %v2862 = vrot.slane %v2812, %v2861
        %v2864 = vunpack.c.l.s4 1966171168
        %v2865 = vunpack.c.0.s8 %v2864
        %v2866 = vlaneseq
        %v2867 = vshrl.u32 %v2866, 7
        %v2868 = vsub.s32 %v2865, %v2867
        %v2869 = vrot.slane %v2813, %v2868
        %v2870 = vcombine.low %v2820, %v2834
        %v2871 = vcombine.high %v2820, %v2834
        %v2872 = vcombine.low %v2827, %v2841
        %v2873 = vcombine.low %v2848, %v2862
        %v2874 = vcombine.high %v2848, %v2862
        %v2875 = vcombine.low %v2855, %v2869
        %v2877 = vunpack.c.l.s4 1966171168
        %v2878 = vunpack.c.0.s8 %v2877
        %v2879 = vlaneseq
        %v2880 = vshrl.u32 %v2879, 7
        %v2881 = vsub.s32 %v2878, %v2880
        %v2882 = vrot.slane %v2870, %v2881
        %v2884 = vunpack.c.l.s4 1966171168
        %v2885 = vunpack.c.0.s8 %v2884
        %v2886 = vlaneseq
        %v2887 = vshrl.u32 %v2886, 7
        %v2888 = vsub.s32 %v2885, %v2887
        %v2889 = vrot.slane %v2872, %v2888
        %v2891 = vunpack.c.l.s4 1966171168
        %v2892 = vunpack.c.0.s8 %v2891
        %v2893 = vlaneseq
        %v2894 = vshrl.u32 %v2893, 7
        %v2895 = vsub.s32 %v2892, %v2894
        %v2896 = vrot.slane %v2871, %v2895
        %v2898 = vunpack.c.l.s4 1966171168
        %v2899 = vunpack.c.0.s8 %v2898
        %v2900 = vlaneseq
        %v2901 = vshrl.u32 %v2900, 7
        %v2902 = vsub.s32 %v2899, %v2901
        %v2903 = vrot.slane %v2873, %v2902
        %v2905 = vunpack.c.l.s4 1966171168
        %v2906 = vunpack.c.0.s8 %v2905
        %v2907 = vlaneseq
        %v2908 = vshrl.u32 %v2907, 7
        %v2909 = vsub.s32 %v2906, %v2908
        %v2910 = vrot.slane %v2875, %v2909
        %v2912 = vunpack.c.l.s4 1966171168
        %v2913 = vunpack.c.0.s8 %v2912
        %v2914 = vlaneseq
        %v2915 = vshrl.u32 %v2914, 7
        %v2916 = vsub.s32 %v2913, %v2915
        %v2917 = vrot.slane %v2874, %v2916
        %v2918 = vcombine.low %v2882, %v2903
        %v2919 = vcombine.high %v2882, %v2903
        %v2920 = vcombine.low %v2889, %v2910
        %v2921 = vcombine.low %v2896, %v2917
        %v2922 = vcombine.high %v2896, %v2917
        %v2923 = vcombine.low %v2432, %v2430
        %v2924 = vcombine.high %v2432, %v2430
        %v2925 = vcombine.low %v2526, %v2529
        %v2926 = vcombine.high %v2526, %v2529
        %v2927 = vcombine.low %v2527, %v2530
        %v2928 = vcombine.high %v2527, %v2530
        %v2929 = vcombine.low %v2528, %v2624
        %v2930 = vcombine.high %v2528, %v2624
        %v2932 = vunpack.c.l.s4 1966171168
        %v2933 = vunpack.c.0.s8 %v2932
        %v2934 = vlaneseq
        %v2935 = vshrl.u32 %v2934, 7
        %v2936 = vsub.s32 %v2933, %v2935
        %v2937 = vrot.slane %v2923, %v2936
        %v2939 = vunpack.c.l.s4 1966171168
        %v2940 = vunpack.c.0.s8 %v2939
        %v2941 = vlaneseq
        %v2942 = vshrl.u32 %v2941, 7
        %v2943 = vsub.s32 %v2940, %v2942
        %v2944 = vrot.slane %v2924, %v2943
        %v2946 = vunpack.c.l.s4 1966171168
        %v2947 = vunpack.c.0.s8 %v2946
        %v2948 = vlaneseq
        %v2949 = vshrl.u32 %v2948, 7
        %v2950 = vsub.s32 %v2947, %v2949
        %v2951 = vrot.slane %v2925, %v2950
        %v2953 = vunpack.c.l.s4 1966171168
        %v2954 = vunpack.c.0.s8 %v2953
        %v2955 = vlaneseq
        %v2956 = vshrl.u32 %v2955, 7
        %v2957 = vsub.s32 %v2954, %v2956
        %v2958 = vrot.slane %v2926, %v2957
        %v2960 = vunpack.c.l.s4 1966171168
        %v2961 = vunpack.c.0.s8 %v2960
        %v2962 = vlaneseq
        %v2963 = vshrl.u32 %v2962, 7
        %v2964 = vsub.s32 %v2961, %v2963
        %v2965 = vrot.slane %v2927, %v2964
        %v2967 = vunpack.c.l.s4 1966171168
        %v2968 = vunpack.c.0.s8 %v2967
        %v2969 = vlaneseq
        %v2970 = vshrl.u32 %v2969, 7
        %v2971 = vsub.s32 %v2968, %v2970
        %v2972 = vrot.slane %v2928, %v2971
        %v2974 = vunpack.c.l.s4 1966171168
        %v2975 = vunpack.c.0.s8 %v2974
        %v2976 = vlaneseq
        %v2977 = vshrl.u32 %v2976, 7
        %v2978 = vsub.s32 %v2975, %v2977
        %v2979 = vrot.slane %v2929, %v2978
        %v2981 = vunpack.c.l.s4 1966171168
        %v2982 = vunpack.c.0.s8 %v2981
        %v2983 = vlaneseq
        %v2984 = vshrl.u32 %v2983, 7
        %v2985 = vsub.s32 %v2982, %v2984
        %v2986 = vrot.slane %v2930, %v2985
        %v2987 = vcombine.low %v2937, %v2951
        %v2988 = vcombine.high %v2937, %v2951
        %v2989 = vcombine.low %v2944, %v2958
        %v2990 = vcombine.low %v2965, %v2979
        %v2991 = vcombine.high %v2965, %v2979
        %v2992 = vcombine.low %v2972, %v2986
        %v2994 = vunpack.c.l.s4 1966171168
        %v2995 = vunpack.c.0.s8 %v2994
        %v2996 = vlaneseq
        %v2997 = vshrl.u32 %v2996, 7
        %v2998 = vsub.s32 %v2995, %v2997
        %v2999 = vrot.slane %v2987, %v2998
        %v3001 = vunpack.c.l.s4 1966171168
        %v3002 = vunpack.c.0.s8 %v3001
        %v3003 = vlaneseq
        %v3004 = vshrl.u32 %v3003, 7
        %v3005 = vsub.s32 %v3002, %v3004
        %v3006 = vrot.slane %v2989, %v3005
        %v3008 = vunpack.c.l.s4 1966171168
        %v3009 = vunpack.c.0.s8 %v3008
        %v3010 = vlaneseq
        %v3011 = vshrl.u32 %v3010, 7
        %v3012 = vsub.s32 %v3009, %v3011
        %v3013 = vrot.slane %v2988, %v3012
        %v3015 = vunpack.c.l.s4 1966171168
        %v3016 = vunpack.c.0.s8 %v3015
        %v3017 = vlaneseq
        %v3018 = vshrl.u32 %v3017, 7
        %v3019 = vsub.s32 %v3016, %v3018
        %v3020 = vrot.slane %v2990, %v3019
        %v3022 = vunpack.c.l.s4 1966171168
        %v3023 = vunpack.c.0.s8 %v3022
        %v3024 = vlaneseq
        %v3025 = vshrl.u32 %v3024, 7
        %v3026 = vsub.s32 %v3023, %v3025
        %v3027 = vrot.slane %v2992, %v3026
        %v3029 = vunpack.c.l.s4 1966171168
        %v3030 = vunpack.c.0.s8 %v3029
        %v3031 = vlaneseq
        %v3032 = vshrl.u32 %v3031, 7
        %v3033 = vsub.s32 %v3030, %v3032
        %v3034 = vrot.slane %v2991, %v3033
        %v3035 = vcombine.low %v2999, %v3020
        %v3036 = vcombine.high %v2999, %v3020
        %v3037 = vcombine.low %v3006, %v3027
        %v3038 = vcombine.low %v3013, %v3034
        %v3039 = vcombine.high %v3013, %v3034
        %v3040 = vcombine.low %v2627, %v2625
        %v3041 = vcombine.high %v2627, %v2625
        %v3042 = vcombine.low %v2628, %v2626
        %v3043 = vcombine.high %v2628, %v2626
        %v3044 = vcombine.low %v2722, %v2725
        %v3045 = vcombine.high %v2722, %v2725
        %v3046 = vcombine.low %v2723, %v2726
        %v3047 = vcombine.high %v2723, %v2726
        %v3049 = vunpack.c.l.s4 1966171168
        %v3050 = vunpack.c.0.s8 %v3049
        %v3051 = vlaneseq
        %v3052 = vshrl.u32 %v3051, 7
        %v3053 = vsub.s32 %v3050, %v3052
        %v3054 = vrot.slane %v3040, %v3053
        %v3056 = vunpack.c.l.s4 1966171168
        %v3057 = vunpack.c.0.s8 %v3056
        %v3058 = vlaneseq
        %v3059 = vshrl.u32 %v3058, 7
        %v3060 = vsub.s32 %v3057, %v3059
        %v3061 = vrot.slane %v3041, %v3060
        %v3063 = vunpack.c.l.s4 1966171168
        %v3064 = vunpack.c.0.s8 %v3063
        %v3065 = vlaneseq
        %v3066 = vshrl.u32 %v3065, 7
        %v3067 = vsub.s32 %v3064, %v3066
        %v3068 = vrot.slane %v3042, %v3067
        %v3070 = vunpack.c.l.s4 1966171168
        %v3071 = vunpack.c.0.s8 %v3070
        %v3072 = vlaneseq
        %v3073 = vshrl.u32 %v3072, 7
        %v3074 = vsub.s32 %v3071, %v3073
        %v3075 = vrot.slane %v3043, %v3074
        %v3077 = vunpack.c.l.s4 1966171168
        %v3078 = vunpack.c.0.s8 %v3077
        %v3079 = vlaneseq
        %v3080 = vshrl.u32 %v3079, 7
        %v3081 = vsub.s32 %v3078, %v3080
        %v3082 = vrot.slane %v3044, %v3081
        %v3084 = vunpack.c.l.s4 1966171168
        %v3085 = vunpack.c.0.s8 %v3084
        %v3086 = vlaneseq
        %v3087 = vshrl.u32 %v3086, 7
        %v3088 = vsub.s32 %v3085, %v3087
        %v3089 = vrot.slane %v3045, %v3088
        %v3091 = vunpack.c.l.s4 1966171168
        %v3092 = vunpack.c.0.s8 %v3091
        %v3093 = vlaneseq
        %v3094 = vshrl.u32 %v3093, 7
        %v3095 = vsub.s32 %v3092, %v3094
        %v3096 = vrot.slane %v3046, %v3095
        %v3098 = vunpack.c.l.s4 1966171168
        %v3099 = vunpack.c.0.s8 %v3098
        %v3100 = vlaneseq
        %v3101 = vshrl.u32 %v3100, 7
        %v3102 = vsub.s32 %v3099, %v3101
        %v3103 = vrot.slane %v3047, %v3102
        %v3104 = vcombine.low %v3054, %v3068
        %v3105 = vcombine.high %v3054, %v3068
        %v3106 = vcombine.low %v3061, %v3075
        %v3107 = vcombine.low %v3082, %v3096
        %v3108 = vcombine.high %v3082, %v3096
        %v3109 = vcombine.low %v3089, %v3103
        %v3111 = vunpack.c.l.s4 1966171168
        %v3112 = vunpack.c.0.s8 %v3111
        %v3113 = vlaneseq
        %v3114 = vshrl.u32 %v3113, 7
        %v3115 = vsub.s32 %v3112, %v3114
        %v3116 = vrot.slane %v3104, %v3115
        %v3118 = vunpack.c.l.s4 1966171168
        %v3119 = vunpack.c.0.s8 %v3118
        %v3120 = vlaneseq
        %v3121 = vshrl.u32 %v3120, 7
        %v3122 = vsub.s32 %v3119, %v3121
        %v3123 = vrot.slane %v3106, %v3122
        %v3125 = vunpack.c.l.s4 1966171168
        %v3126 = vunpack.c.0.s8 %v3125
        %v3127 = vlaneseq
        %v3128 = vshrl.u32 %v3127, 7
        %v3129 = vsub.s32 %v3126, %v3128
        %v3130 = vrot.slane %v3105, %v3129
        %v3132 = vunpack.c.l.s4 1966171168
        %v3133 = vunpack.c.0.s8 %v3132
        %v3134 = vlaneseq
        %v3135 = vshrl.u32 %v3134, 7
        %v3136 = vsub.s32 %v3133, %v3135
        %v3137 = vrot.slane %v3107, %v3136
        %v3139 = vunpack.c.l.s4 1966171168
        %v3140 = vunpack.c.0.s8 %v3139
        %v3141 = vlaneseq
        %v3142 = vshrl.u32 %v3141, 7
        %v3143 = vsub.s32 %v3140, %v3142
        %v3144 = vrot.slane %v3109, %v3143
        %v3146 = vunpack.c.l.s4 1966171168
        %v3147 = vunpack.c.0.s8 %v3146
        %v3148 = vlaneseq
        %v3149 = vshrl.u32 %v3148, 7
        %v3150 = vsub.s32 %v3147, %v3149
        %v3151 = vrot.slane %v3108, %v3150
        %v3152 = vcombine.low %v3116, %v3137
        %v3153 = vcombine.high %v3116, %v3137
        %v3154 = vcombine.low %v3123, %v3144
        %v3155 = vcombine.low %v3130, %v3151
        %v3156 = vcombine.high %v3130, %v3151
        %v3157 = vcombine.high %v2724, %v2724
        %v3159 = vunpack.c.l.s4 1966171168
        %v3160 = vunpack.c.0.s8 %v3159
        %v3161 = vlaneseq
        %v3162 = vshrl.u32 %v3161, 7
        %v3163 = vsub.s32 %v3160, %v3162
        %v3164 = vrot.slane %v2724, %v3163
        %v3166 = vunpack.c.l.s4 1966171168
        %v3167 = vunpack.c.0.s8 %v3166
        %v3168 = vlaneseq
        %v3169 = vshrl.u32 %v3168, 7
        %v3170 = vsub.s32 %v3167, %v3169
        %v3171 = vrot.slane %v3157, %v3170
        %v3172 = vcombine.high %v3164, %v3164
        %v3174 = vunpack.c.l.s4 1966171168
        %v3175 = vunpack.c.0.s8 %v3174
        %v3176 = vlaneseq
        %v3177 = vshrl.u32 %v3176, 7
        %v3178 = vsub.s32 %v3175, %v3177
        %v3179 = vrot.slane %v3164, %v3178
        %v3181 = vunpack.c.l.s4 1966171168
        %v3182 = vunpack.c.0.s8 %v3181
        %v3183 = vlaneseq
        %v3184 = vshrl.u32 %v3183, 7
        %v3185 = vsub.s32 %v3182, %v3184
        %v3186 = vrot.slane %v3171, %v3185
        %v3188 = vunpack.c.l.s4 1966171168
        %v3189 = vunpack.c.0.s8 %v3188
        %v3190 = vlaneseq
        %v3191 = vshrl.u32 %v3190, 7
        %v3192 = vsub.s32 %v3189, %v3191
        %v3193 = vrot.slane %v3172, %v3192
        %v3194 = vcombine.high %v3179, %v3179
        %v3195 = vcombine.high %v3193, %v3193
        %v3212 = vsel %vm2202, %v2920, 0
        %v3214 = vsel %vm2202, %v3037, 0
        %v3216 = vsel %vm2202, %v3154, 0
        %v3218 = vsel %vm2202, %v3186, 0
        %3220 = vmatprep.subr.mxu0 0.0
        %3221 = vmatpush1.msra.mxu0 %v2742
        %3222 = vmatprep.subr.mxu0 0.0
        %3223 = vmatpush1.msra.mxu0 %v2741
        %3224 = vmatprep.subr.mxu0 0.0
        %3225 = vmatpush1.msra.mxu0 %v2740
        %3226 = vmatprep.subr.mxu0 0.0
        %3227 = vmatpush1.msra.mxu0 %v2739
        %3228 = vmatprep.subr.mxu0 0.0
        %3229 = vmatpush1.msra.mxu0 %v2738
        %3230 = vmatprep.subr.mxu0 0.0
        %3231 = vmatpush1.msra.mxu0 %v2737
        %3232 = vmatprep.subr.mxu0 0.0
        %3233 = vmatpush1.msra.mxu0 %v2736
        %3234 = vmatprep.subr.mxu0 0.0
        %3235 = vmatpush1.msra.mxu0 %v2735
        %3236 = vmatprep.subr.mxu0 0.0
        %3237 = vmatpush1.msra.mxu0 %v2734
        %3238 = vmatprep.subr.mxu0 0.0
        %3239 = vmatpush1.msra.mxu0 %v2733
        %3240 = vmatprep.subr.mxu0 0.0
        %3241 = vmatpush1.msra.mxu0 %v2732
        %3242 = vmatprep.subr.mxu0 0.0
        %3243 = vmatpush1.msra.mxu0 %v2731
        %3244 = vmatprep.subr.mxu0 0.0
        %3245 = vmatpush1.msra.mxu0 %v2730
        %3246 = vmatprep.subr.mxu0 0.0
        %3247 = vmatpush1.msra.mxu0 %v2729
        %3248 = vmatprep.subr.mxu0 0.0
        %3249 = vmatpush1.msra.mxu0 %v2728
        %3250 = vmatprep.subr.mxu0 0.0
        %3251 = vmatpush1.msra.mxu0 %v2727
        %3252 = vmatprep.subr.mxu0 0.0
        %3253 = vmatpush2.msra.mxu0 %v2758
        %3254 = vmatprep.subr.mxu0 0.0
        %3255 = vmatpush2.msra.mxu0 %v2757
        %3256 = vmatprep.subr.mxu0 0.0
        %3257 = vmatpush2.msra.mxu0 %v2756
        %3258 = vmatprep.subr.mxu0 0.0
        %3259 = vmatpush2.msra.mxu0 %v2755
        %3260 = vmatprep.subr.mxu0 0.0
        %3261 = vmatpush2.msra.mxu0 %v2754
        %3262 = vmatprep.subr.mxu0 0.0
        %3263 = vmatpush2.msra.mxu0 %v2753
        %3264 = vmatprep.subr.mxu0 0.0
        %3265 = vmatpush2.msra.mxu0 %v2752
        %3266 = vmatprep.subr.mxu0 0.0
        %3267 = vmatpush2.msra.mxu0 %v2751
        %3268 = vmatprep.subr.mxu0 0.0
        %3269 = vmatpush2.msra.mxu0 %v2750
        %3270 = vmatprep.subr.mxu0 0.0
        %3271 = vmatpush2.msra.mxu0 %v2749
        %3272 = vmatprep.subr.mxu0 0.0
        %3273 = vmatpush2.msra.mxu0 %v2748
        %3274 = vmatprep.subr.mxu0 0.0
        %3275 = vmatpush2.msra.mxu0 %v2747
        %3276 = vmatprep.subr.mxu0 0.0
        %3277 = vmatpush2.msra.mxu0 %v2746
        %3278 = vmatprep.subr.mxu0 0.0
        %3279 = vmatpush2.msra.mxu0 %v2745
        %3280 = vmatprep.subr.mxu0 0.0
        %3281 = vmatpush2.msra.mxu0 %v2744
        %3282 = vmatprep.subr.mxu0 0.0
        %3283 = vmatpush2.msra.mxu0 %v2743
        %3284 = vmatprep.mubr.f32.mxu0 %v2921
        %3285 = vmatmul.mubr.f32.gmra.mxu0 %v2918
        %v3286 = vpop.f32.mrf.mxu0
        %v3287 = vadd.f32 %v2804, %v3286
        %v3288 = vpop.f32.mrf.mxu0
        %3289 = vmatprep.mubr.f32.mxu0 %v3038
        %3290 = vmatmul.mubr.f32.gmra.mxu0 %v3035
        %v3291 = vpop.f32.mrf.mxu0
        %v3292 = vadd.f32 %v2804, %v3291
        %v3293 = vpop.f32.mrf.mxu0
        %3294 = vmatprep.mubr.f32.mxu0 %v3155
        %3295 = vmatmul.mubr.f32.gmra.mxu0 %v3152
        %v3296 = vpop.f32.mrf.mxu0
        %v3297 = vadd.f32 %v2804, %v3296
        %v3298 = vpop.f32.mrf.mxu0
        %3299 = vmatprep.mubr.f32.mxu0 %v3193
        %3300 = vmatmul.mubr.f32.gmra.mxu0 %v3179
        %v3301 = vpop.f32.mrf.mxu0
        %v3302 = vpop.f32.mrf.mxu0
        %3303 = vdwg.mxu0
        %3304 = vmatprep.subr.mxu0 0.0
        %3305 = vmatpush1.msra.mxu0 %v2774
        %3306 = vmatprep.subr.mxu0 0.0
        %3307 = vmatpush1.msra.mxu0 %v2773
        %3308 = vmatprep.subr.mxu0 0.0
        %3309 = vmatpush1.msra.mxu0 %v2772
        %3310 = vmatprep.subr.mxu0 0.0
        %3311 = vmatpush1.msra.mxu0 %v2771
        %3312 = vmatprep.subr.mxu0 0.0
        %3313 = vmatpush1.msra.mxu0 %v2770
        %3314 = vmatprep.subr.mxu0 0.0
        %3315 = vmatpush1.msra.mxu0 %v2769
        %3316 = vmatprep.subr.mxu0 0.0
        %3317 = vmatpush1.msra.mxu0 %v2768
        %3318 = vmatprep.subr.mxu0 0.0
        %3319 = vmatpush1.msra.mxu0 %v2767
        %3320 = vmatprep.subr.mxu0 0.0
        %3321 = vmatpush1.msra.mxu0 %v2766
        %3322 = vmatprep.subr.mxu0 0.0
        %3323 = vmatpush1.msra.mxu0 %v2765
        %3324 = vmatprep.subr.mxu0 0.0
        %3325 = vmatpush1.msra.mxu0 %v2764
        %3326 = vmatprep.subr.mxu0 0.0
        %3327 = vmatpush1.msra.mxu0 %v2763
        %3328 = vmatprep.subr.mxu0 0.0
        %3329 = vmatpush1.msra.mxu0 %v2762
        %3330 = vmatprep.subr.mxu0 0.0
        %3331 = vmatpush1.msra.mxu0 %v2761
        %3332 = vmatprep.subr.mxu0 0.0
        %3333 = vmatpush1.msra.mxu0 %v2760
        %3334 = vmatprep.subr.mxu0 0.0
        %3335 = vmatpush1.msra.mxu0 %v2759
        %3336 = vmatprep.subr.mxu0 0.0
        %3337 = vmatpush2.msra.mxu0 %v2790
        %3338 = vmatprep.subr.mxu0 0.0
        %3339 = vmatpush2.msra.mxu0 %v2789
        %3340 = vmatprep.subr.mxu0 0.0
        %3341 = vmatpush2.msra.mxu0 %v2788
        %3342 = vmatprep.subr.mxu0 0.0
        %3343 = vmatpush2.msra.mxu0 %v2787
        %3344 = vmatprep.subr.mxu0 0.0
        %3345 = vmatpush2.msra.mxu0 %v2786
        %3346 = vmatprep.subr.mxu0 0.0
        %3347 = vmatpush2.msra.mxu0 %v2785
        %3348 = vmatprep.subr.mxu0 0.0
        %3349 = vmatpush2.msra.mxu0 %v2784
        %3350 = vmatprep.subr.mxu0 0.0
        %3351 = vmatpush2.msra.mxu0 %v2783
        %3352 = vmatprep.subr.mxu0 0.0
        %3353 = vmatpush2.msra.mxu0 %v2782
        %3354 = vmatprep.subr.mxu0 0.0
        %3355 = vmatpush2.msra.mxu0 %v2781
        %3356 = vmatprep.subr.mxu0 0.0
        %3357 = vmatpush2.msra.mxu0 %v2780
        %3358 = vmatprep.subr.mxu0 0.0
        %3359 = vmatpush2.msra.mxu0 %v2779
        %3360 = vmatprep.subr.mxu0 0.0
        %3361 = vmatpush2.msra.mxu0 %v2778
        %3362 = vmatprep.subr.mxu0 0.0
        %3363 = vmatpush2.msra.mxu0 %v2777
        %3364 = vmatprep.subr.mxu0 0.0
        %3365 = vmatpush2.msra.mxu0 %v2776
        %3366 = vmatprep.subr.mxu0 0.0
        %3367 = vmatpush2.msra.mxu0 %v2775
        %3368 = vmatprep.mubr.f32.mxu0 %v2922
        %3369 = vmatmul.mubr.f32.gmra.mxu0 %v2919
        %v3370 = vpop.f32.mrf.mxu0
        %v3371 = vadd.f32 %v3287, %v3370
        %v3372 = vpop.f32.mrf.mxu0
        %3373 = vmatprep.mubr.f32.mxu0 %v3039
        %3374 = vmatmul.mubr.f32.gmra.mxu0 %v3036
        %v3375 = vpop.f32.mrf.mxu0
        %v3376 = vadd.f32 %v3292, %v3375
        %v3377 = vpop.f32.mrf.mxu0
        %3378 = vmatprep.mubr.f32.mxu0 %v3156
        %3379 = vmatmul.mubr.f32.gmra.mxu0 %v3153
        %v3380 = vpop.f32.mrf.mxu0
        %v3381 = vadd.f32 %v3297, %v3380
        %v3382 = vpop.f32.mrf.mxu0
        %3383 = vmatprep.mubr.f32.mxu0 %v3195
        %3384 = vmatmul.mubr.f32.gmra.mxu0 %v3194
        %v3385 = vpop.f32.mrf.mxu0
        %v3386 = vpop.f32.mrf.mxu0
        %3387 = vdwg.mxu0
        %3388 = vmatprep.subr.mxu0 0.0
        %3389 = vmatpush1.msra.mxu0 0.0
        %3390 = vmatprep.subr.mxu0 0.0
        %3391 = vmatpush1.msra.mxu0 0.0
        %3392 = vmatprep.subr.mxu0 0.0
        %3393 = vmatpush1.msra.mxu0 0.0
        %3394 = vmatprep.subr.mxu0 0.0
        %3395 = vmatpush1.msra.mxu0 0.0
        %3396 = vmatprep.subr.mxu0 0.0
        %3397 = vmatpush1.msra.mxu0 0.0
        %3398 = vmatprep.subr.mxu0 0.0
        %3399 = vmatpush1.msra.mxu0 0.0
        %3400 = vmatprep.subr.mxu0 0.0
        %3401 = vmatpush1.msra.mxu0 0.0
        %3402 = vmatprep.subr.mxu0 0.0
        %3403 = vmatpush1.msra.mxu0 0.0
        %3404 = vmatprep.subr.mxu0 0.0
        %3405 = vmatpush1.msra.mxu0 %v2798
        %3406 = vmatprep.subr.mxu0 0.0
        %3407 = vmatpush1.msra.mxu0 %v2797
        %3408 = vmatprep.subr.mxu0 0.0
        %3409 = vmatpush1.msra.mxu0 %v2796
        %3410 = vmatprep.subr.mxu0 0.0
        %3411 = vmatpush1.msra.mxu0 %v2795
        %3412 = vmatprep.subr.mxu0 0.0
        %3413 = vmatpush1.msra.mxu0 %v2794
        %3414 = vmatprep.subr.mxu0 0.0
        %3415 = vmatpush1.msra.mxu0 %v2793
        %3416 = vmatprep.subr.mxu0 0.0
        %3417 = vmatpush1.msra.mxu0 %v2792
        %3418 = vmatprep.subr.mxu0 0.0
        %3419 = vmatpush1.msra.mxu0 %v2791
        %3420 = vmatprep.subr.mxu0 0.0
        %3421 = vmatpush2.msra.mxu0 0.0
        %3422 = vmatprep.subr.mxu0 0.0
        %3423 = vmatpush2.msra.mxu0 0.0
        %3424 = vmatprep.subr.mxu0 0.0
        %3425 = vmatpush2.msra.mxu0 0.0
        %3426 = vmatprep.subr.mxu0 0.0
        %3427 = vmatpush2.msra.mxu0 0.0
        %3428 = vmatprep.subr.mxu0 0.0
        %3429 = vmatpush2.msra.mxu0 0.0
        %3430 = vmatprep.subr.mxu0 0.0
        %3431 = vmatpush2.msra.mxu0 0.0
        %3432 = vmatprep.subr.mxu0 0.0
        %3433 = vmatpush2.msra.mxu0 0.0
        %3434 = vmatprep.subr.mxu0 0.0
        %3435 = vmatpush2.msra.mxu0 0.0
        %3436 = vmatprep.subr.mxu0 0.0
        %3437 = vmatpush2.msra.mxu0 0.0
        %3438 = vmatprep.subr.mxu0 0.0
        %3439 = vmatpush2.msra.mxu0 0.0
        %3440 = vmatprep.subr.mxu0 0.0
        %3441 = vmatpush2.msra.mxu0 0.0
        %3442 = vmatprep.subr.mxu0 0.0
        %3443 = vmatpush2.msra.mxu0 0.0
        %3444 = vmatprep.subr.mxu0 0.0
        %3445 = vmatpush2.msra.mxu0 0.0
        %3446 = vmatprep.subr.mxu0 0.0
        %3447 = vmatpush2.msra.mxu0 0.0
        %3448 = vmatprep.subr.mxu0 0.0
        %3449 = vmatpush2.msra.mxu0 0.0
        %3450 = vmatprep.subr.mxu0 0.0
        %3451 = vmatpush2.msra.mxu0 0.0
        %3452 = vmatprep.mubr.f32.mxu0 0.0
        %3453 = vmatmul.mubr.f32.gmra.mxu0 %v3212
        %v3454 = vpop.f32.mrf.mxu0
        %v3455 = vadd.f32 %v3371, %v3454
        %v3456 = vpop.f32.mrf.mxu0
        %3457 = vmatprep.mubr.f32.mxu0 0.0
        %3458 = vmatmul.mubr.f32.gmra.mxu0 %v3214
        %v3459 = vpop.f32.mrf.mxu0
        %v3460 = vadd.f32 %v3376, %v3459
        %v3461 = vpop.f32.mrf.mxu0
        %3462 = vmatprep.mubr.f32.mxu0 0.0
        %3463 = vmatmul.mubr.f32.gmra.mxu0 %v3216
        %v3464 = vpop.f32.mrf.mxu0
        %v3465 = vadd.f32 %v3381, %v3464
        %v3466 = vpop.f32.mrf.mxu0
        %3467 = vmatprep.mubr.f32.mxu0 0.0
        %3468 = vmatmul.mubr.f32.gmra.mxu0 %v3218
        %v3469 = vpop.f32.mrf.mxu0
        %v3470 = vpop.f32.mrf.mxu0
        %3471 = vdwg.mxu0
        %v3472 = vmax.f32 %v3455, 0.0
        %v3473 = vmax.f32 %v3460, 0.0
        %v3474 = vmax.f32 %v3465, 0.0
        %v3476 = vrot.slane %v3472, 1
        %v3478 = vmax.f32 %v3472, %v3476
        %v3479 = vrot.slane %v3472, 5
        %v3481 = vmax.f32 %v3478, %v3479
        %v3482 = vrot.slane %v3472, 6
        %v3484 = vmax.f32 %v3481, %v3482
        %v3486 = vrot.slane %v3473, 6
        %v3488 = vmax.f32 %v3481, %v3486
        %v3489 = vrot.slane %v3473, 1
        %v3491 = vmax.f32 %v3473, %v3489
        %v3492 = vrot.slane %v3473, 5
        %v3494 = vmax.f32 %v3491, %v3492
        %v3496 = vrot.slane %v3474, 6
        %v3498 = vmax.f32 %v3494, %v3496
        %v3499 = vrot.slane %v3474, 5
        %v3501 = vmax.f32 %v3491, %v3499
        %v3502 = vmax.f32 %v3501, %v3496
        %v3504 = vrot.slane %v3488, 2
        %v3507 = vrot.slane %v3498, 2
        %v3510 = vrot.slane %v3502, 4
        %v3512 = vld [vmem:[#allocation10] sm:$0xff]
        %v3513 = vld [vmem:[#allocation10 + $0x8] sm:$0xff]
        %v3514 = vld [vmem:[#allocation10 + $0x10] sm:$0xff]
        %v3515 = vld [vmem:[#allocation10 + $0x18] sm:$0xff]
        %v3516 = vld [vmem:[#allocation10 + $0x20] sm:$0xff]
        %v3517 = vld [vmem:[#allocation10 + $0x28] sm:$0xff]
        %v3518 = vld [vmem:[#allocation10 + $0x30] sm:$0xff]
        %v3519 = vld [vmem:[#allocation10 + $0x38] sm:$0xff]
        %v3520 = vld [vmem:[#allocation10 + $0x40] sm:$0xff]
        %v3521 = vld [vmem:[#allocation10 + $0x48] sm:$0xff]
        %v3522 = vld [vmem:[#allocation10 + $0x50] sm:$0xff]
        %v3523 = vld [vmem:[#allocation10 + $0x58] sm:$0xff]
        %v3524 = vld [vmem:[#allocation10 + $0x60] sm:$0xff]
        %v3525 = vld [vmem:[#allocation10 + $0x68] sm:$0xff]
        %v3526 = vld [vmem:[#allocation10 + $0x70] sm:$0xff]
        %v3527 = vld [vmem:[#allocation10 + $0x78] sm:$0xff]
        %v3528 = vld [vmem:[#allocation10 + $0x80] sm:$0xff]
        %v3529 = vld [vmem:[#allocation10 + $0x88] sm:$0xff]
        %v3530 = vld [vmem:[#allocation10 + $0x90] sm:$0xff]
        %v3531 = vld [vmem:[#allocation10 + $0x98] sm:$0xff]
        %v3532 = vld [vmem:[#allocation10 + $0xa0] sm:$0xff]
        %v3533 = vld [vmem:[#allocation10 + $0xa8] sm:$0xff]
        %v3534 = vld [vmem:[#allocation10 + $0xb0] sm:$0xff]
        %v3535 = vld [vmem:[#allocation10 + $0xb8] sm:$0xff]
        %v3536 = vld [vmem:[#allocation10 + $0xc0] sm:$0xff]
        %v3537 = vld [vmem:[#allocation10 + $0xc8] sm:$0xff]
        %v3538 = vld [vmem:[#allocation10 + $0xd0] sm:$0xff]
        %v3539 = vld [vmem:[#allocation10 + $0xd8] sm:$0xff]
        %v3540 = vld [vmem:[#allocation10 + $0xe0] sm:$0xff]
        %v3541 = vld [vmem:[#allocation10 + $0xe8] sm:$0xff]
        %v3542 = vld [vmem:[#allocation10 + $0xf0] sm:$0xff]
        %v3543 = vld [vmem:[#allocation10 + $0xf8] sm:$0xff]
        %v3544 = vld [vmem:[#allocation10 + $0x100] sm:$0xff]
        %v3545 = vld [vmem:[#allocation10 + $0x108] sm:$0xff]
        %v3546 = vld [vmem:[#allocation10 + $0x110] sm:$0xff]
        %v3547 = vld [vmem:[#allocation10 + $0x118] sm:$0xff]
        %v3548 = vld [vmem:[#allocation10 + $0x120] sm:$0xff]
        %v3549 = vld [vmem:[#allocation10 + $0x128] sm:$0xff]
        %v3550 = vld [vmem:[#allocation10 + $0x130] sm:$0xff]
        %v3551 = vld [vmem:[#allocation10 + $0x138] sm:$0xff]
        %v3552 = vld [vmem:[#allocation10 + $0x140] sm:$0xff]
        %v3553 = vld [vmem:[#allocation10 + $0x148] sm:$0xff]
        %v3554 = vld [vmem:[#allocation10 + $0x150] sm:$0xff]
        %v3555 = vld [vmem:[#allocation10 + $0x158] sm:$0xff]
        %v3556 = vld [vmem:[#allocation10 + $0x160] sm:$0xff]
        %v3557 = vld [vmem:[#allocation10 + $0x168] sm:$0xff]
        %v3558 = vld [vmem:[#allocation10 + $0x170] sm:$0xff]
        %v3559 = vld [vmem:[#allocation10 + $0x178] sm:$0xff]
        %v3560 = vld [vmem:[#allocation10 + $0x180] sm:$0xff]
        %v3561 = vld [vmem:[#allocation10 + $0x188] sm:$0xff]
        %v3562 = vld [vmem:[#allocation10 + $0x190] sm:$0xff]
        %v3563 = vld [vmem:[#allocation10 + $0x198] sm:$0xff]
        %v3564 = vld [vmem:[#allocation10 + $0x1a0] sm:$0xff]
        %v3565 = vld [vmem:[#allocation10 + $0x1a8] sm:$0xff]
        %v3566 = vld [vmem:[#allocation10 + $0x1b0] sm:$0xff]
        %v3567 = vld [vmem:[#allocation10 + $0x1b8] sm:$0xff]
        %v3568 = vld [vmem:[#allocation10 + $0x1c0] sm:$0xff]
        %v3569 = vld [vmem:[#allocation10 + $0x1c8] sm:$0xff]
        %v3570 = vld [vmem:[#allocation10 + $0x1d0] sm:$0xff]
        %v3571 = vld [vmem:[#allocation10 + $0x1d8] sm:$0xff]
        %v3572 = vld [vmem:[#allocation10 + $0x1e0] sm:$0xff]
        %v3573 = vld [vmem:[#allocation10 + $0x1e8] sm:$0xff]
        %v3574 = vld [vmem:[#allocation10 + $0x1f0] sm:$0xff]
        %v3575 = vld [vmem:[#allocation10 + $0x1f8] sm:$0xff]
        %v3576 = vld [vmem:[#allocation10 + $0x200] sm:$0xff]
        %v3577 = vld [vmem:[#allocation10 + $0x208] sm:$0xff]
        %v3578 = vld [vmem:[#allocation10 + $0x210] sm:$0xff]
        %v3579 = vld [vmem:[#allocation10 + $0x218] sm:$0xff]
        %v3580 = vld [vmem:[#allocation10 + $0x220] sm:$0xff]
        %v3581 = vld [vmem:[#allocation10 + $0x228] sm:$0xff]
        %v3582 = vld [vmem:[#allocation10 + $0x230] sm:$0xff]
        %v3583 = vld [vmem:[#allocation10 + $0x238] sm:$0xff]
        %v3584 = vld [vmem:[#allocation10 + $0x240] sm:$0xff]
        %v3585 = vld [vmem:[#allocation10 + $0x248] sm:$0xff]
        %v3586 = vld [vmem:[#allocation10 + $0x250] sm:$0xff]
        %v3587 = vld [vmem:[#allocation10 + $0x258] sm:$0xff]
        %v3588 = vld [vmem:[#allocation10 + $0x260] sm:$0xff]
        %v3589 = vld [vmem:[#allocation10 + $0x268] sm:$0xff]
        %v3590 = vld [vmem:[#allocation10 + $0x270] sm:$0xff]
        %v3591 = vld [vmem:[#allocation10 + $0x278] sm:$0xff]
        %v3592 = vld [vmem:[#allocation10 + $0x280] sm:$0xff]
        %v3593 = vld [vmem:[#allocation10 + $0x288] sm:$0xff]
        %v3594 = vld [vmem:[#allocation10 + $0x290] sm:$0xff]
        %v3595 = vld [vmem:[#allocation10 + $0x298] sm:$0xff]
        %v3596 = vld [vmem:[#allocation10 + $0x2a0] sm:$0xff]
        %v3597 = vld [vmem:[#allocation10 + $0x2a8] sm:$0xff]
        %v3598 = vld [vmem:[#allocation10 + $0x2b0] sm:$0xff]
        %v3599 = vld [vmem:[#allocation10 + $0x2b8] sm:$0xff]
        %v3600 = vld [vmem:[#allocation10 + $0x2c0] sm:$0xff]
        %v3601 = vld [vmem:[#allocation10 + $0x2c8] sm:$0xff]
        %v3602 = vld [vmem:[#allocation10 + $0x2d0] sm:$0xff]
        %v3603 = vld [vmem:[#allocation10 + $0x2d8] sm:$0xff]
        %v3604 = vld [vmem:[#allocation10 + $0x2e0] sm:$0xff]
        %v3605 = vld [vmem:[#allocation10 + $0x2e8] sm:$0xff]
        %v3606 = vld [vmem:[#allocation10 + $0x2f0] sm:$0xff]
        %v3607 = vld [vmem:[#allocation10 + $0x2f8] sm:$0xff]
        %v3608 = vld [vmem:[#allocation10 + $0x300] sm:$0xff]
        %v3609 = vld [vmem:[#allocation10 + $0x308] sm:$0xff]
        %v3610 = vld [vmem:[#allocation10 + $0x310] sm:$0xff]
        %v3611 = vld [vmem:[#allocation10 + $0x318] sm:$0xff]
        %v3612 = vld [vmem:[#allocation10 + $0x320] sm:$0xff]
        %v3613 = vld [vmem:[#allocation10 + $0x328] sm:$0xff]
        %v3614 = vld [vmem:[#allocation10 + $0x330] sm:$0xff]
        %v3615 = vld [vmem:[#allocation10 + $0x338] sm:$0xff]
        %v3616 = vld [vmem:[#allocation10 + $0x340] sm:$0xff]
        %v3617 = vld [vmem:[#allocation10 + $0x348] sm:$0xff]
        %v3618 = vld [vmem:[#allocation10 + $0x350] sm:$0xff]
        %v3619 = vld [vmem:[#allocation10 + $0x358] sm:$0xff]
        %v3620 = vld [vmem:[#allocation10 + $0x360] sm:$0xff]
        %v3621 = vld [vmem:[#allocation10 + $0x368] sm:$0xff]
        %v3622 = vld [vmem:[#allocation10 + $0x370] sm:$0xff]
        %v3623 = vld [vmem:[#allocation10 + $0x378] sm:$0xff]
        %v3624 = vld [vmem:[#allocation10 + $0x380] sm:$0xff]
        %v3625 = vld [vmem:[#allocation10 + $0x388] sm:$0xff]
        %v3626 = vld [vmem:[#allocation10 + $0x390] sm:$0xff]
        %v3627 = vld [vmem:[#allocation10 + $0x398] sm:$0xff]
        %v3628 = vld [vmem:[#allocation10 + $0x3a0] sm:$0xff]
        %v3629 = vld [vmem:[#allocation10 + $0x3a8] sm:$0xff]
        %v3630 = vld [vmem:[#allocation10 + $0x3b0] sm:$0xff]
        %v3631 = vld [vmem:[#allocation10 + $0x3b8] sm:$0xff]
        %v3632 = vld [vmem:[#allocation10 + $0x3c0] sm:$0xff]
        %v3633 = vld [vmem:[#allocation10 + $0x3c8] sm:$0xff]
        %v3634 = vld [vmem:[#allocation10 + $0x3d0] sm:$0xff]
        %v3635 = vld [vmem:[#allocation10 + $0x3d8] sm:$0xff]
        %v3636 = vld [vmem:[#allocation10 + $0x3e0] sm:$0xff]
        %v3637 = vld [vmem:[#allocation10 + $0x3e8] sm:$0xff]
        %v3638 = vld [vmem:[#allocation10 + $0x3f0] sm:$0xff]
        %v3639 = vld [vmem:[#allocation10 + $0x3f8] sm:$0xff]
        %v3640 = vld [vmem:[%s6] sm:$0x3]
        %v3642 = vlaneseq
        %v3643 = vshrl.u32 %v3642, 7
        %v3644 = vsub.s32 0, %v3643
        %v3645 = vrot.slane %v3640, %v3644
        %v3646 = vlaneseq
        %v3647 = vshrl.u32 %v3646, 7
        %v3648 = vsub.s32 1, %v3647
        %v3649 = vrot.slane %v3640, %v3648
        %3652 = vmatprep.subr.mxu0 %v3543
        %3653 = vmatpush1.msra.mxu0 %v3542
        %3654 = vmatprep.subr.mxu0 %v3541
        %3655 = vmatpush1.msra.mxu0 %v3540
        %3656 = vmatprep.subr.mxu0 %v3539
        %3657 = vmatpush1.msra.mxu0 %v3538
        %3658 = vmatprep.subr.mxu0 %v3537
        %3659 = vmatpush1.msra.mxu0 %v3536
        %3660 = vmatprep.subr.mxu0 %v3535
        %3661 = vmatpush1.msra.mxu0 %v3534
        %3662 = vmatprep.subr.mxu0 %v3533
        %3663 = vmatpush1.msra.mxu0 %v3532
        %3664 = vmatprep.subr.mxu0 %v3531
        %3665 = vmatpush1.msra.mxu0 %v3530
        %3666 = vmatprep.subr.mxu0 %v3529
        %3667 = vmatpush1.msra.mxu0 %v3528
        %3668 = vmatprep.subr.mxu0 %v3527
        %3669 = vmatpush1.msra.mxu0 %v3526
        %3670 = vmatprep.subr.mxu0 %v3525
        %3671 = vmatpush1.msra.mxu0 %v3524
        %3672 = vmatprep.subr.mxu0 %v3523
        %3673 = vmatpush1.msra.mxu0 %v3522
        %3674 = vmatprep.subr.mxu0 %v3521
        %3675 = vmatpush1.msra.mxu0 %v3520
        %3676 = vmatprep.subr.mxu0 %v3519
        %3677 = vmatpush1.msra.mxu0 %v3518
        %3678 = vmatprep.subr.mxu0 %v3517
        %3679 = vmatpush1.msra.mxu0 %v3516
        %3680 = vmatprep.subr.mxu0 %v3515
        %3681 = vmatpush1.msra.mxu0 %v3514
        %3682 = vmatprep.subr.mxu0 %v3513
        %3683 = vmatpush1.msra.mxu0 %v3512
        %3684 = vmatprep.subr.mxu0 %v3575
        %3685 = vmatpush2.msra.mxu0 %v3574
        %3686 = vmatprep.subr.mxu0 %v3573
        %3687 = vmatpush2.msra.mxu0 %v3572
        %3688 = vmatprep.subr.mxu0 %v3571
        %3689 = vmatpush2.msra.mxu0 %v3570
        %3690 = vmatprep.subr.mxu0 %v3569
        %3691 = vmatpush2.msra.mxu0 %v3568
        %3692 = vmatprep.subr.mxu0 %v3567
        %3693 = vmatpush2.msra.mxu0 %v3566
        %3694 = vmatprep.subr.mxu0 %v3565
        %3695 = vmatpush2.msra.mxu0 %v3564
        %3696 = vmatprep.subr.mxu0 %v3563
        %3697 = vmatpush2.msra.mxu0 %v3562
        %3698 = vmatprep.subr.mxu0 %v3561
        %3699 = vmatpush2.msra.mxu0 %v3560
        %3700 = vmatprep.subr.mxu0 %v3559
        %3701 = vmatpush2.msra.mxu0 %v3558
        %3702 = vmatprep.subr.mxu0 %v3557
        %3703 = vmatpush2.msra.mxu0 %v3556
        %3704 = vmatprep.subr.mxu0 %v3555
        %3705 = vmatpush2.msra.mxu0 %v3554
        %3706 = vmatprep.subr.mxu0 %v3553
        %3707 = vmatpush2.msra.mxu0 %v3552
        %3708 = vmatprep.subr.mxu0 %v3551
        %3709 = vmatpush2.msra.mxu0 %v3550
        %3710 = vmatprep.subr.mxu0 %v3549
        %3711 = vmatpush2.msra.mxu0 %v3548
        %3712 = vmatprep.subr.mxu0 %v3547
        %3713 = vmatpush2.msra.mxu0 %v3546
        %3714 = vmatprep.subr.mxu0 %v3545
        %3715 = vmatpush2.msra.mxu0 %v3544
        %3716 = vmatprep.mubr.f32.mxu0 %v3504
        %3717 = vmatmul.mubr.f32.gmra.mxu0 %v3484
        %v3718 = vpop.f32.mrf.mxu0
        %v3719 = vadd.f32 %v3645, %v3718
        %v3720 = vpop.f32.mrf.mxu0
        %v3721 = vadd.f32 %v3649, %v3720
        %3722 = vdwg.mxu0
        %3723 = vmatprep.subr.mxu0 %v3607
        %3724 = vmatpush1.msra.mxu0 %v3606
        %3725 = vmatprep.subr.mxu0 %v3605
        %3726 = vmatpush1.msra.mxu0 %v3604
        %3727 = vmatprep.subr.mxu0 %v3603
        %3728 = vmatpush1.msra.mxu0 %v3602
        %3729 = vmatprep.subr.mxu0 %v3601
        %3730 = vmatpush1.msra.mxu0 %v3600
        %3731 = vmatprep.subr.mxu0 %v3599
        %3732 = vmatpush1.msra.mxu0 %v3598
        %3733 = vmatprep.subr.mxu0 %v3597
        %3734 = vmatpush1.msra.mxu0 %v3596
        %3735 = vmatprep.subr.mxu0 %v3595
        %3736 = vmatpush1.msra.mxu0 %v3594
        %3737 = vmatprep.subr.mxu0 %v3593
        %3738 = vmatpush1.msra.mxu0 %v3592
        %3739 = vmatprep.subr.mxu0 %v3591
        %3740 = vmatpush1.msra.mxu0 %v3590
        %3741 = vmatprep.subr.mxu0 %v3589
        %3742 = vmatpush1.msra.mxu0 %v3588
        %3743 = vmatprep.subr.mxu0 %v3587
        %3744 = vmatpush1.msra.mxu0 %v3586
        %3745 = vmatprep.subr.mxu0 %v3585
        %3746 = vmatpush1.msra.mxu0 %v3584
        %3747 = vmatprep.subr.mxu0 %v3583
        %3748 = vmatpush1.msra.mxu0 %v3582
        %3749 = vmatprep.subr.mxu0 %v3581
        %3750 = vmatpush1.msra.mxu0 %v3580
        %3751 = vmatprep.subr.mxu0 %v3579
        %3752 = vmatpush1.msra.mxu0 %v3578
        %3753 = vmatprep.subr.mxu0 %v3577
        %3754 = vmatpush1.msra.mxu0 %v3576
        %3755 = vmatprep.subr.mxu0 %v3639
        %3756 = vmatpush2.msra.mxu0 %v3638
        %3757 = vmatprep.subr.mxu0 %v3637
        %3758 = vmatpush2.msra.mxu0 %v3636
        %3759 = vmatprep.subr.mxu0 %v3635
        %3760 = vmatpush2.msra.mxu0 %v3634
        %3761 = vmatprep.subr.mxu0 %v3633
        %3762 = vmatpush2.msra.mxu0 %v3632
        %3763 = vmatprep.subr.mxu0 %v3631
        %3764 = vmatpush2.msra.mxu0 %v3630
        %3765 = vmatprep.subr.mxu0 %v3629
        %3766 = vmatpush2.msra.mxu0 %v3628
        %3767 = vmatprep.subr.mxu0 %v3627
        %3768 = vmatpush2.msra.mxu0 %v3626
        %3769 = vmatprep.subr.mxu0 %v3625
        %3770 = vmatpush2.msra.mxu0 %v3624
        %3771 = vmatprep.subr.mxu0 %v3623
        %3772 = vmatpush2.msra.mxu0 %v3622
        %3773 = vmatprep.subr.mxu0 %v3621
        %3774 = vmatpush2.msra.mxu0 %v3620
        %3775 = vmatprep.subr.mxu0 %v3619
        %3776 = vmatpush2.msra.mxu0 %v3618
        %3777 = vmatprep.subr.mxu0 %v3617
        %3778 = vmatpush2.msra.mxu0 %v3616
        %3779 = vmatprep.subr.mxu0 %v3615
        %3780 = vmatpush2.msra.mxu0 %v3614
        %3781 = vmatprep.subr.mxu0 %v3613
        %3782 = vmatpush2.msra.mxu0 %v3612
        %3783 = vmatprep.subr.mxu0 %v3611
        %3784 = vmatpush2.msra.mxu0 %v3610
        %3785 = vmatprep.subr.mxu0 %v3609
        %3786 = vmatpush2.msra.mxu0 %v3608
        %3787 = vmatprep.mubr.f32.mxu0 %v3510
        %3788 = vmatmul.mubr.f32.gmra.mxu0 %v3507
        %v3789 = vpop.f32.mrf.mxu0
        %v3790 = vadd.f32 %v3719, %v3789
        %v3791 = vpop.f32.mrf.mxu0
        %v3792 = vadd.f32 %v3721, %v3791
        %3793 = vdwg.mxu0
        %v3794 = vmax.f32 %v3790, 0.0
        %v3795 = vmax.f32 %v3792, 0.0
        %v3796 = vld [vmem:[#allocation11] sm:$0xff]
        %v3797 = vld [vmem:[#allocation11 + $0x8] sm:$0xff]
        %v3798 = vld [vmem:[#allocation11 + $0x10] sm:$0xff]
        %v3799 = vld [vmem:[#allocation11 + $0x18] sm:$0xff]
        %v3800 = vld [vmem:[#allocation11 + $0x20] sm:$0xff]
        %v3801 = vld [vmem:[#allocation11 + $0x28] sm:$0xff]
        %v3802 = vld [vmem:[#allocation11 + $0x30] sm:$0xff]
        %v3803 = vld [vmem:[#allocation11 + $0x38] sm:$0xff]
        %v3804 = vld [vmem:[#allocation11 + $0x40] sm:$0xff]
        %v3805 = vld [vmem:[#allocation11 + $0x48] sm:$0xff]
        %v3806 = vld [vmem:[#allocation11 + $0x50] sm:$0xff]
        %v3807 = vld [vmem:[#allocation11 + $0x58] sm:$0xff]
        %v3808 = vld [vmem:[#allocation11 + $0x60] sm:$0xff]
        %v3809 = vld [vmem:[#allocation11 + $0x68] sm:$0xff]
        %v3810 = vld [vmem:[#allocation11 + $0x70] sm:$0xff]
        %v3811 = vld [vmem:[#allocation11 + $0x78] sm:$0xff]
        %v3812 = vld [vmem:[#allocation11 + $0x80] sm:$0xff]
        %v3813 = vld [vmem:[#allocation11 + $0x88] sm:$0xff]
        %v3814 = vld [vmem:[#allocation11 + $0x90] sm:$0xff]
        %v3815 = vld [vmem:[#allocation11 + $0x98] sm:$0xff]
        %v3816 = vld [vmem:[#allocation11 + $0xa0] sm:$0xff]
        %v3817 = vld [vmem:[#allocation11 + $0xa8] sm:$0xff]
        %v3818 = vld [vmem:[#allocation11 + $0xb0] sm:$0xff]
        %v3819 = vld [vmem:[#allocation11 + $0xb8] sm:$0xff]
        %v3820 = vld [vmem:[#allocation11 + $0xc0] sm:$0xff]
        %v3821 = vld [vmem:[#allocation11 + $0xc8] sm:$0xff]
        %v3822 = vld [vmem:[#allocation11 + $0xd0] sm:$0xff]
        %v3823 = vld [vmem:[#allocation11 + $0xd8] sm:$0xff]
        %v3824 = vld [vmem:[#allocation11 + $0xe0] sm:$0xff]
        %v3825 = vld [vmem:[#allocation11 + $0xe8] sm:$0xff]
        %v3826 = vld [vmem:[#allocation11 + $0xf0] sm:$0xff]
        %v3827 = vld [vmem:[#allocation11 + $0xf8] sm:$0xff]
        %v3828 = vld [vmem:[#allocation11 + $0x100] sm:$0xff]
        %v3829 = vld [vmem:[#allocation11 + $0x108] sm:$0xff]
        %v3830 = vld [vmem:[#allocation11 + $0x110] sm:$0xff]
        %v3831 = vld [vmem:[#allocation11 + $0x118] sm:$0xff]
        %v3832 = vld [vmem:[#allocation11 + $0x120] sm:$0xff]
        %v3833 = vld [vmem:[#allocation11 + $0x128] sm:$0xff]
        %v3834 = vld [vmem:[#allocation11 + $0x130] sm:$0xff]
        %v3835 = vld [vmem:[#allocation11 + $0x138] sm:$0xff]
        %v3836 = vld [vmem:[#allocation11 + $0x140] sm:$0xff]
        %v3837 = vld [vmem:[#allocation11 + $0x148] sm:$0xff]
        %v3838 = vld [vmem:[#allocation11 + $0x150] sm:$0xff]
        %v3839 = vld [vmem:[#allocation11 + $0x158] sm:$0xff]
        %v3840 = vld [vmem:[#allocation11 + $0x160] sm:$0xff]
        %v3841 = vld [vmem:[#allocation11 + $0x168] sm:$0xff]
        %v3842 = vld [vmem:[#allocation11 + $0x170] sm:$0xff]
        %v3843 = vld [vmem:[#allocation11 + $0x178] sm:$0xff]
        %v3844 = vld [vmem:[#allocation11 + $0x180] sm:$0xff]
        %v3845 = vld [vmem:[#allocation11 + $0x188] sm:$0xff]
        %v3846 = vld [vmem:[#allocation11 + $0x190] sm:$0xff]
        %v3847 = vld [vmem:[#allocation11 + $0x198] sm:$0xff]
        %v3848 = vld [vmem:[#allocation11 + $0x1a0] sm:$0xff]
        %v3849 = vld [vmem:[#allocation11 + $0x1a8] sm:$0xff]
        %v3850 = vld [vmem:[#allocation11 + $0x1b0] sm:$0xff]
        %v3851 = vld [vmem:[#allocation11 + $0x1b8] sm:$0xff]
        %v3852 = vld [vmem:[#allocation11 + $0x1c0] sm:$0xff]
        %v3853 = vld [vmem:[#allocation11 + $0x1c8] sm:$0xff]
        %v3854 = vld [vmem:[#allocation11 + $0x1d0] sm:$0xff]
        %v3855 = vld [vmem:[#allocation11 + $0x1d8] sm:$0xff]
        %v3856 = vld [vmem:[#allocation11 + $0x1e0] sm:$0xff]
        %v3857 = vld [vmem:[#allocation11 + $0x1e8] sm:$0xff]
        %v3858 = vld [vmem:[#allocation11 + $0x1f0] sm:$0xff]
        %v3859 = vld [vmem:[#allocation11 + $0x1f8] sm:$0xff]
        %v3860 = vld [vmem:[#allocation11 + $0x200] sm:$0xff]
        %v3861 = vld [vmem:[#allocation11 + $0x208] sm:$0xff]
        %v3862 = vld [vmem:[#allocation11 + $0x210] sm:$0xff]
        %v3863 = vld [vmem:[#allocation11 + $0x218] sm:$0xff]
        %v3864 = vld [vmem:[#allocation11 + $0x220] sm:$0xff]
        %v3865 = vld [vmem:[#allocation11 + $0x228] sm:$0xff]
        %v3866 = vld [vmem:[#allocation11 + $0x230] sm:$0xff]
        %v3867 = vld [vmem:[#allocation11 + $0x238] sm:$0xff]
        %v3868 = vld [vmem:[#allocation11 + $0x240] sm:$0xff]
        %v3869 = vld [vmem:[#allocation11 + $0x248] sm:$0xff]
        %v3870 = vld [vmem:[#allocation11 + $0x250] sm:$0xff]
        %v3871 = vld [vmem:[#allocation11 + $0x258] sm:$0xff]
        %v3872 = vld [vmem:[#allocation11 + $0x260] sm:$0xff]
        %v3873 = vld [vmem:[#allocation11 + $0x268] sm:$0xff]
        %v3874 = vld [vmem:[#allocation11 + $0x270] sm:$0xff]
        %v3875 = vld [vmem:[#allocation11 + $0x278] sm:$0xff]
        %v3876 = vld [vmem:[#allocation11 + $0x280] sm:$0xff]
        %v3877 = vld [vmem:[#allocation11 + $0x288] sm:$0xff]
        %v3878 = vld [vmem:[#allocation11 + $0x290] sm:$0xff]
        %v3879 = vld [vmem:[#allocation11 + $0x298] sm:$0xff]
        %v3880 = vld [vmem:[#allocation11 + $0x2a0] sm:$0xff]
        %v3881 = vld [vmem:[#allocation11 + $0x2a8] sm:$0xff]
        %v3882 = vld [vmem:[#allocation11 + $0x2b0] sm:$0xff]
        %v3883 = vld [vmem:[#allocation11 + $0x2b8] sm:$0xff]
        %v3884 = vld [vmem:[#allocation11 + $0x2c0] sm:$0xff]
        %v3885 = vld [vmem:[#allocation11 + $0x2c8] sm:$0xff]
        %v3886 = vld [vmem:[#allocation11 + $0x2d0] sm:$0xff]
        %v3887 = vld [vmem:[#allocation11 + $0x2d8] sm:$0xff]
        %v3888 = vld [vmem:[#allocation11 + $0x2e0] sm:$0xff]
        %v3889 = vld [vmem:[#allocation11 + $0x2e8] sm:$0xff]
        %v3890 = vld [vmem:[#allocation11 + $0x2f0] sm:$0xff]
        %v3891 = vld [vmem:[#allocation11 + $0x2f8] sm:$0xff]
        %v3892 = vld [vmem:[#allocation11 + $0x300] sm:$0xff]
        %v3893 = vld [vmem:[#allocation11 + $0x308] sm:$0xff]
        %v3894 = vld [vmem:[#allocation11 + $0x310] sm:$0xff]
        %v3895 = vld [vmem:[#allocation11 + $0x318] sm:$0xff]
        %v3896 = vld [vmem:[#allocation11 + $0x320] sm:$0xff]
        %v3897 = vld [vmem:[#allocation11 + $0x328] sm:$0xff]
        %v3898 = vld [vmem:[#allocation11 + $0x330] sm:$0xff]
        %v3899 = vld [vmem:[#allocation11 + $0x338] sm:$0xff]
        %v3900 = vld [vmem:[#allocation11 + $0x340] sm:$0xff]
        %v3901 = vld [vmem:[#allocation11 + $0x348] sm:$0xff]
        %v3902 = vld [vmem:[#allocation11 + $0x350] sm:$0xff]
        %v3903 = vld [vmem:[#allocation11 + $0x358] sm:$0xff]
        %v3904 = vld [vmem:[#allocation11 + $0x360] sm:$0xff]
        %v3905 = vld [vmem:[#allocation11 + $0x368] sm:$0xff]
        %v3906 = vld [vmem:[#allocation11 + $0x370] sm:$0xff]
        %v3907 = vld [vmem:[#allocation11 + $0x378] sm:$0xff]
        %v3908 = vld [vmem:[#allocation11 + $0x380] sm:$0xff]
        %v3909 = vld [vmem:[#allocation11 + $0x388] sm:$0xff]
        %v3910 = vld [vmem:[#allocation11 + $0x390] sm:$0xff]
        %v3911 = vld [vmem:[#allocation11 + $0x398] sm:$0xff]
        %v3912 = vld [vmem:[#allocation11 + $0x3a0] sm:$0xff]
        %v3913 = vld [vmem:[#allocation11 + $0x3a8] sm:$0xff]
        %v3914 = vld [vmem:[#allocation11 + $0x3b0] sm:$0xff]
        %v3915 = vld [vmem:[#allocation11 + $0x3b8] sm:$0xff]
        %v3916 = vld [vmem:[#allocation11 + $0x3c0] sm:$0xff]
        %v3917 = vld [vmem:[#allocation11 + $0x3c8] sm:$0xff]
        %v3918 = vld [vmem:[#allocation11 + $0x3d0] sm:$0xff]
        %v3919 = vld [vmem:[#allocation11 + $0x3d8] sm:$0xff]
        %v3920 = vld [vmem:[#allocation11 + $0x3e0] sm:$0xff]
        %v3921 = vld [vmem:[#allocation11 + $0x3e8] sm:$0xff]
        %v3922 = vld [vmem:[#allocation11 + $0x3f0] sm:$0xff]
        %v3923 = vld [vmem:[#allocation11 + $0x3f8] sm:$0xff]
        %v3924 = vld [vmem:[%s8] sm:$0xf]
        %v3926 = vlaneseq
        %v3927 = vshrl.u32 %v3926, 7
        %v3928 = vsub.s32 0, %v3927
        %v3929 = vrot.slane %v3924, %v3928
        %v3930 = vlaneseq
        %v3931 = vshrl.u32 %v3930, 7
        %v3932 = vsub.s32 1, %v3931
        %v3933 = vrot.slane %v3924, %v3932
        %v3934 = vlaneseq
        %v3935 = vshrl.u32 %v3934, 7
        %v3936 = vsub.s32 2, %v3935
        %v3937 = vrot.slane %v3924, %v3936
        %v3938 = vlaneseq
        %v3939 = vshrl.u32 %v3938, 7
        %v3940 = vsub.s32 3, %v3939
        %v3941 = vrot.slane %v3924, %v3940
        %3946 = vmatprep.subr.mxu0 %v3857
        %3947 = vmatpush1.msra.mxu0 %v3856
        %3948 = vmatprep.subr.mxu0 %v3853
        %3949 = vmatpush1.msra.mxu0 %v3852
        %3950 = vmatprep.subr.mxu0 %v3849
        %3951 = vmatpush1.msra.mxu0 %v3848
        %3952 = vmatprep.subr.mxu0 %v3845
        %3953 = vmatpush1.msra.mxu0 %v3844
        %3954 = vmatprep.subr.mxu0 %v3841
        %3955 = vmatpush1.msra.mxu0 %v3840
        %3956 = vmatprep.subr.mxu0 %v3837
        %3957 = vmatpush1.msra.mxu0 %v3836
        %3958 = vmatprep.subr.mxu0 %v3833
        %3959 = vmatpush1.msra.mxu0 %v3832
        %3960 = vmatprep.subr.mxu0 %v3829
        %3961 = vmatpush1.msra.mxu0 %v3828
        %3962 = vmatprep.subr.mxu0 %v3825
        %3963 = vmatpush1.msra.mxu0 %v3824
        %3964 = vmatprep.subr.mxu0 %v3821
        %3965 = vmatpush1.msra.mxu0 %v3820
        %3966 = vmatprep.subr.mxu0 %v3817
        %3967 = vmatpush1.msra.mxu0 %v3816
        %3968 = vmatprep.subr.mxu0 %v3813
        %3969 = vmatpush1.msra.mxu0 %v3812
        %3970 = vmatprep.subr.mxu0 %v3809
        %3971 = vmatpush1.msra.mxu0 %v3808
        %3972 = vmatprep.subr.mxu0 %v3805
        %3973 = vmatpush1.msra.mxu0 %v3804
        %3974 = vmatprep.subr.mxu0 %v3801
        %3975 = vmatpush1.msra.mxu0 %v3800
        %3976 = vmatprep.subr.mxu0 %v3797
        %3977 = vmatpush1.msra.mxu0 %v3796
        %3978 = vmatprep.subr.mxu0 %v3921
        %3979 = vmatpush2.msra.mxu0 %v3920
        %3980 = vmatprep.subr.mxu0 %v3917
        %3981 = vmatpush2.msra.mxu0 %v3916
        %3982 = vmatprep.subr.mxu0 %v3913
        %3983 = vmatpush2.msra.mxu0 %v3912
        %3984 = vmatprep.subr.mxu0 %v3909
        %3985 = vmatpush2.msra.mxu0 %v3908
        %3986 = vmatprep.subr.mxu0 %v3905
        %3987 = vmatpush2.msra.mxu0 %v3904
        %3988 = vmatprep.subr.mxu0 %v3901
        %3989 = vmatpush2.msra.mxu0 %v3900
        %3990 = vmatprep.subr.mxu0 %v3897
        %3991 = vmatpush2.msra.mxu0 %v3896
        %3992 = vmatprep.subr.mxu0 %v3893
        %3993 = vmatpush2.msra.mxu0 %v3892
        %3994 = vmatprep.subr.mxu0 %v3889
        %3995 = vmatpush2.msra.mxu0 %v3888
        %3996 = vmatprep.subr.mxu0 %v3885
        %3997 = vmatpush2.msra.mxu0 %v3884
        %3998 = vmatprep.subr.mxu0 %v3881
        %3999 = vmatpush2.msra.mxu0 %v3880
        %4000 = vmatprep.subr.mxu0 %v3877
        %4001 = vmatpush2.msra.mxu0 %v3876
        %4002 = vmatprep.subr.mxu0 %v3873
        %4003 = vmatpush2.msra.mxu0 %v3872
        %4004 = vmatprep.subr.mxu0 %v3869
        %4005 = vmatpush2.msra.mxu0 %v3868
        %4006 = vmatprep.subr.mxu0 %v3865
        %4007 = vmatpush2.msra.mxu0 %v3864
        %4008 = vmatprep.subr.mxu0 %v3861
        %4009 = vmatpush2.msra.mxu0 %v3860
        %4010 = vmatprep.mubr.f32.mxu0 %v3795
        %4011 = vmatmul.mubr.f32.gmra.mxu0 %v3794
        %v4012 = vpop.f32.mrf.mxu0
        %v4013 = vadd.f32 %v3929, %v4012
        %v4014 = vpop.f32.mrf.mxu0
        %v4015 = vadd.f32 %v3933, %v4014
        %4016 = vdwg.mxu0
        %4017 = vmatprep.subr.mxu0 %v3859
        %4018 = vmatpush1.msra.mxu0 %v3858
        %4019 = vmatprep.subr.mxu0 %v3855
        %4020 = vmatpush1.msra.mxu0 %v3854
        %4021 = vmatprep.subr.mxu0 %v3851
        %4022 = vmatpush1.msra.mxu0 %v3850
        %4023 = vmatprep.subr.mxu0 %v3847
        %4024 = vmatpush1.msra.mxu0 %v3846
        %4025 = vmatprep.subr.mxu0 %v3843
        %4026 = vmatpush1.msra.mxu0 %v3842
        %4027 = vmatprep.subr.mxu0 %v3839
        %4028 = vmatpush1.msra.mxu0 %v3838
        %4029 = vmatprep.subr.mxu0 %v3835
        %4030 = vmatpush1.msra.mxu0 %v3834
        %4031 = vmatprep.subr.mxu0 %v3831
        %4032 = vmatpush1.msra.mxu0 %v3830
        %4033 = vmatprep.subr.mxu0 %v3827
        %4034 = vmatpush1.msra.mxu0 %v3826
        %4035 = vmatprep.subr.mxu0 %v3823
        %4036 = vmatpush1.msra.mxu0 %v3822
        %4037 = vmatprep.subr.mxu0 %v3819
        %4038 = vmatpush1.msra.mxu0 %v3818
        %4039 = vmatprep.subr.mxu0 %v3815
        %4040 = vmatpush1.msra.mxu0 %v3814
        %4041 = vmatprep.subr.mxu0 %v3811
        %4042 = vmatpush1.msra.mxu0 %v3810
        %4043 = vmatprep.subr.mxu0 %v3807
        %4044 = vmatpush1.msra.mxu0 %v3806
        %4045 = vmatprep.subr.mxu0 %v3803
        %4046 = vmatpush1.msra.mxu0 %v3802
        %4047 = vmatprep.subr.mxu0 %v3799
        %4048 = vmatpush1.msra.mxu0 %v3798
        %4049 = vmatprep.subr.mxu0 %v3923
        %4050 = vmatpush2.msra.mxu0 %v3922
        %4051 = vmatprep.subr.mxu0 %v3919
        %4052 = vmatpush2.msra.mxu0 %v3918
        %4053 = vmatprep.subr.mxu0 %v3915
        %4054 = vmatpush2.msra.mxu0 %v3914
        %4055 = vmatprep.subr.mxu0 %v3911
        %4056 = vmatpush2.msra.mxu0 %v3910
        %4057 = vmatprep.subr.mxu0 %v3907
        %4058 = vmatpush2.msra.mxu0 %v3906
        %4059 = vmatprep.subr.mxu0 %v3903
        %4060 = vmatpush2.msra.mxu0 %v3902
        %4061 = vmatprep.subr.mxu0 %v3899
        %4062 = vmatpush2.msra.mxu0 %v3898
        %4063 = vmatprep.subr.mxu0 %v3895
        %4064 = vmatpush2.msra.mxu0 %v3894
        %4065 = vmatprep.subr.mxu0 %v3891
        %4066 = vmatpush2.msra.mxu0 %v3890
        %4067 = vmatprep.subr.mxu0 %v3887
        %4068 = vmatpush2.msra.mxu0 %v3886
        %4069 = vmatprep.subr.mxu0 %v3883
        %4070 = vmatpush2.msra.mxu0 %v3882
        %4071 = vmatprep.subr.mxu0 %v3879
        %4072 = vmatpush2.msra.mxu0 %v3878
        %4073 = vmatprep.subr.mxu0 %v3875
        %4074 = vmatpush2.msra.mxu0 %v3874
        %4075 = vmatprep.subr.mxu0 %v3871
        %4076 = vmatpush2.msra.mxu0 %v3870
        %4077 = vmatprep.subr.mxu0 %v3867
        %4078 = vmatpush2.msra.mxu0 %v3866
        %4079 = vmatprep.subr.mxu0 %v3863
        %4080 = vmatpush2.msra.mxu0 %v3862
        %4081 = vmatprep.mubr.f32.mxu0 %v3795
        %4082 = vmatmul.mubr.f32.gmra.mxu0 %v3794
        %v4083 = vpop.f32.mrf.mxu0
        %v4084 = vadd.f32 %v3937, %v4083
        %v4085 = vpop.f32.mrf.mxu0
        %v4086 = vadd.f32 %v3941, %v4085
        %4087 = vdwg.mxu0
        %v4088 = vmax.f32 %v4013, 0.0
        %v4089 = vmax.f32 %v4015, 0.0
        %v4090 = vmax.f32 %v4084, 0.0
        %v4091 = vmax.f32 %v4086, 0.0
        %v4092 = vld [vmem:[#allocation13] sm:$0xff]
        %v4093 = vld [vmem:[#allocation13 + $0x8] sm:$0xff]
        %v4094 = vld [vmem:[#allocation13 + $0x10] sm:$0xff]
        %v4095 = vld [vmem:[#allocation13 + $0x18] sm:$0xff]
        %v4096 = vld [vmem:[#allocation13 + $0x20] sm:$0xff]
        %v4097 = vld [vmem:[#allocation13 + $0x28] sm:$0xff]
        %v4098 = vld [vmem:[#allocation13 + $0x30] sm:$0xff]
        %v4099 = vld [vmem:[#allocation13 + $0x38] sm:$0xff]
        %v4100 = vld [vmem:[#allocation13 + $0x40] sm:$0xff]
        %v4101 = vld [vmem:[#allocation13 + $0x48] sm:$0xff]
        %v4102 = vld [vmem:[#allocation13 + $0x50] sm:$0xff]
        %v4103 = vld [vmem:[#allocation13 + $0x58] sm:$0xff]
        %v4104 = vld [vmem:[#allocation13 + $0x60] sm:$0xff]
        %v4105 = vld [vmem:[#allocation13 + $0x68] sm:$0xff]
        %v4106 = vld [vmem:[#allocation13 + $0x70] sm:$0xff]
        %v4107 = vld [vmem:[#allocation13 + $0x78] sm:$0xff]
        %v4108 = vld [vmem:[#allocation13 + $0x80] sm:$0xff]
        %v4109 = vld [vmem:[#allocation13 + $0x88] sm:$0xff]
        %v4110 = vld [vmem:[#allocation13 + $0x90] sm:$0xff]
        %v4111 = vld [vmem:[#allocation13 + $0x98] sm:$0xff]
        %v4112 = vld [vmem:[#allocation13 + $0xa0] sm:$0xff]
        %v4113 = vld [vmem:[#allocation13 + $0xa8] sm:$0xff]
        %v4114 = vld [vmem:[#allocation13 + $0xb0] sm:$0xff]
        %v4115 = vld [vmem:[#allocation13 + $0xb8] sm:$0xff]
        %v4116 = vld [vmem:[#allocation13 + $0xc0] sm:$0xff]
        %v4117 = vld [vmem:[#allocation13 + $0xc8] sm:$0xff]
        %v4118 = vld [vmem:[#allocation13 + $0xd0] sm:$0xff]
        %v4119 = vld [vmem:[#allocation13 + $0xd8] sm:$0xff]
        %v4120 = vld [vmem:[#allocation13 + $0xe0] sm:$0xff]
        %v4121 = vld [vmem:[#allocation13 + $0xe8] sm:$0xff]
        %v4122 = vld [vmem:[#allocation13 + $0xf0] sm:$0xff]
        %v4123 = vld [vmem:[#allocation13 + $0xf8] sm:$0xff]
        %v4124 = vld [vmem:[#allocation13 + $0x100] sm:$0xff]
        %v4125 = vld [vmem:[#allocation13 + $0x108] sm:$0xff]
        %v4126 = vld [vmem:[#allocation13 + $0x110] sm:$0xff]
        %v4127 = vld [vmem:[#allocation13 + $0x118] sm:$0xff]
        %v4128 = vld [vmem:[#allocation13 + $0x120] sm:$0xff]
        %v4129 = vld [vmem:[#allocation13 + $0x128] sm:$0xff]
        %v4130 = vld [vmem:[#allocation13 + $0x130] sm:$0xff]
        %v4131 = vld [vmem:[#allocation13 + $0x138] sm:$0xff]
        %v4132 = vld [vmem:[#allocation13 + $0x140] sm:$0xff]
        %v4133 = vld [vmem:[#allocation13 + $0x148] sm:$0xff]
        %v4134 = vld [vmem:[#allocation13 + $0x150] sm:$0xff]
        %v4135 = vld [vmem:[#allocation13 + $0x158] sm:$0xff]
        %v4136 = vld [vmem:[#allocation13 + $0x160] sm:$0xff]
        %v4137 = vld [vmem:[#allocation13 + $0x168] sm:$0xff]
        %v4138 = vld [vmem:[#allocation13 + $0x170] sm:$0xff]
        %v4139 = vld [vmem:[#allocation13 + $0x178] sm:$0xff]
        %v4140 = vld [vmem:[#allocation13 + $0x180] sm:$0xff]
        %v4141 = vld [vmem:[#allocation13 + $0x188] sm:$0xff]
        %v4142 = vld [vmem:[#allocation13 + $0x190] sm:$0xff]
        %v4143 = vld [vmem:[#allocation13 + $0x198] sm:$0xff]
        %v4144 = vld [vmem:[#allocation13 + $0x1a0] sm:$0xff]
        %v4145 = vld [vmem:[#allocation13 + $0x1a8] sm:$0xff]
        %v4146 = vld [vmem:[#allocation13 + $0x1b0] sm:$0xff]
        %v4147 = vld [vmem:[#allocation13 + $0x1b8] sm:$0xff]
        %v4148 = vld [vmem:[#allocation13 + $0x1c0] sm:$0xff]
        %v4149 = vld [vmem:[#allocation13 + $0x1c8] sm:$0xff]
        %v4150 = vld [vmem:[#allocation13 + $0x1d0] sm:$0xff]
        %v4151 = vld [vmem:[#allocation13 + $0x1d8] sm:$0xff]
        %v4152 = vld [vmem:[#allocation13 + $0x1e0] sm:$0xff]
        %v4153 = vld [vmem:[#allocation13 + $0x1e8] sm:$0xff]
        %v4154 = vld [vmem:[#allocation13 + $0x1f0] sm:$0xff]
        %v4155 = vld [vmem:[#allocation13 + $0x1f8] sm:$0xff]
        %v4156 = vld [vmem:[%s10] sm:$0x1]
        %4157 = vmatprep.subr.mxu0 0.0
        %4158 = vmatpush1.msra.mxu0 %v4107
        %4159 = vmatprep.subr.mxu0 0.0
        %4160 = vmatpush1.msra.mxu0 %v4106
        %4161 = vmatprep.subr.mxu0 0.0
        %4162 = vmatpush1.msra.mxu0 %v4105
        %4163 = vmatprep.subr.mxu0 0.0
        %4164 = vmatpush1.msra.mxu0 %v4104
        %4165 = vmatprep.subr.mxu0 0.0
        %4166 = vmatpush1.msra.mxu0 %v4103
        %4167 = vmatprep.subr.mxu0 0.0
        %4168 = vmatpush1.msra.mxu0 %v4102
        %4169 = vmatprep.subr.mxu0 0.0
        %4170 = vmatpush1.msra.mxu0 %v4101
        %4171 = vmatprep.subr.mxu0 0.0
        %4172 = vmatpush1.msra.mxu0 %v4100
        %4173 = vmatprep.subr.mxu0 0.0
        %4174 = vmatpush1.msra.mxu0 %v4099
        %4175 = vmatprep.subr.mxu0 0.0
        %4176 = vmatpush1.msra.mxu0 %v4098
        %4177 = vmatprep.subr.mxu0 0.0
        %4178 = vmatpush1.msra.mxu0 %v4097
        %4179 = vmatprep.subr.mxu0 0.0
        %4180 = vmatpush1.msra.mxu0 %v4096
        %4181 = vmatprep.subr.mxu0 0.0
        %4182 = vmatpush1.msra.mxu0 %v4095
        %4183 = vmatprep.subr.mxu0 0.0
        %4184 = vmatpush1.msra.mxu0 %v4094
        %4185 = vmatprep.subr.mxu0 0.0
        %4186 = vmatpush1.msra.mxu0 %v4093
        %4187 = vmatprep.subr.mxu0 0.0
        %4188 = vmatpush1.msra.mxu0 %v4092
        %4189 = vmatprep.subr.mxu0 0.0
        %4190 = vmatpush2.msra.mxu0 %v4123
        %4191 = vmatprep.subr.mxu0 0.0
        %4192 = vmatpush2.msra.mxu0 %v4122
        %4193 = vmatprep.subr.mxu0 0.0
        %4194 = vmatpush2.msra.mxu0 %v4121
        %4195 = vmatprep.subr.mxu0 0.0
        %4196 = vmatpush2.msra.mxu0 %v4120
        %4197 = vmatprep.subr.mxu0 0.0
        %4198 = vmatpush2.msra.mxu0 %v4119
        %4199 = vmatprep.subr.mxu0 0.0
        %4200 = vmatpush2.msra.mxu0 %v4118
        %4201 = vmatprep.subr.mxu0 0.0
        %4202 = vmatpush2.msra.mxu0 %v4117
        %4203 = vmatprep.subr.mxu0 0.0
        %4204 = vmatpush2.msra.mxu0 %v4116
        %4205 = vmatprep.subr.mxu0 0.0
        %4206 = vmatpush2.msra.mxu0 %v4115
        %4207 = vmatprep.subr.mxu0 0.0
        %4208 = vmatpush2.msra.mxu0 %v4114
        %4209 = vmatprep.subr.mxu0 0.0
        %4210 = vmatpush2.msra.mxu0 %v4113
        %4211 = vmatprep.subr.mxu0 0.0
        %4212 = vmatpush2.msra.mxu0 %v4112
        %4213 = vmatprep.subr.mxu0 0.0
        %4214 = vmatpush2.msra.mxu0 %v4111
        %4215 = vmatprep.subr.mxu0 0.0
        %4216 = vmatpush2.msra.mxu0 %v4110
        %4217 = vmatprep.subr.mxu0 0.0
        %4218 = vmatpush2.msra.mxu0 %v4109
        %4219 = vmatprep.subr.mxu0 0.0
        %4220 = vmatpush2.msra.mxu0 %v4108
        %4221 = vmatprep.mubr.f32.mxu0 %v4089
        %4222 = vmatmul.mubr.f32.gmra.mxu0 %v4088
        %v4223 = vpop.f32.mrf.mxu0
        %v4224 = vadd.f32 %v4156, %v4223
        %v4225 = vpop.f32.mrf.mxu0
        %4226 = vdwg.mxu0
        %4227 = vmatprep.subr.mxu0 0.0
        %4228 = vmatpush1.msra.mxu0 %v4139
        %4229 = vmatprep.subr.mxu0 0.0
        %4230 = vmatpush1.msra.mxu0 %v4138
        %4231 = vmatprep.subr.mxu0 0.0
        %4232 = vmatpush1.msra.mxu0 %v4137
        %4233 = vmatprep.subr.mxu0 0.0
        %4234 = vmatpush1.msra.mxu0 %v4136
        %4235 = vmatprep.subr.mxu0 0.0
        %4236 = vmatpush1.msra.mxu0 %v4135
        %4237 = vmatprep.subr.mxu0 0.0
        %4238 = vmatpush1.msra.mxu0 %v4134
        %4239 = vmatprep.subr.mxu0 0.0
        %4240 = vmatpush1.msra.mxu0 %v4133
        %4241 = vmatprep.subr.mxu0 0.0
        %4242 = vmatpush1.msra.mxu0 %v4132
        %4243 = vmatprep.subr.mxu0 0.0
        %4244 = vmatpush1.msra.mxu0 %v4131
        %4245 = vmatprep.subr.mxu0 0.0
        %4246 = vmatpush1.msra.mxu0 %v4130
        %4247 = vmatprep.subr.mxu0 0.0
        %4248 = vmatpush1.msra.mxu0 %v4129
        %4249 = vmatprep.subr.mxu0 0.0
        %4250 = vmatpush1.msra.mxu0 %v4128
        %4251 = vmatprep.subr.mxu0 0.0
        %4252 = vmatpush1.msra.mxu0 %v4127
        %4253 = vmatprep.subr.mxu0 0.0
        %4254 = vmatpush1.msra.mxu0 %v4126
        %4255 = vmatprep.subr.mxu0 0.0
        %4256 = vmatpush1.msra.mxu0 %v4125
        %4257 = vmatprep.subr.mxu0 0.0
        %4258 = vmatpush1.msra.mxu0 %v4124
        %4259 = vmatprep.subr.mxu0 0.0
        %4260 = vmatpush2.msra.mxu0 %v4155
        %4261 = vmatprep.subr.mxu0 0.0
        %4262 = vmatpush2.msra.mxu0 %v4154
        %4263 = vmatprep.subr.mxu0 0.0
        %4264 = vmatpush2.msra.mxu0 %v4153
        %4265 = vmatprep.subr.mxu0 0.0
        %4266 = vmatpush2.msra.mxu0 %v4152
        %4267 = vmatprep.subr.mxu0 0.0
        %4268 = vmatpush2.msra.mxu0 %v4151
        %4269 = vmatprep.subr.mxu0 0.0
        %4270 = vmatpush2.msra.mxu0 %v4150
        %4271 = vmatprep.subr.mxu0 0.0
        %4272 = vmatpush2.msra.mxu0 %v4149
        %4273 = vmatprep.subr.mxu0 0.0
        %4274 = vmatpush2.msra.mxu0 %v4148
        %4275 = vmatprep.subr.mxu0 0.0
        %4276 = vmatpush2.msra.mxu0 %v4147
        %4277 = vmatprep.subr.mxu0 0.0
        %4278 = vmatpush2.msra.mxu0 %v4146
        %4279 = vmatprep.subr.mxu0 0.0
        %4280 = vmatpush2.msra.mxu0 %v4145
        %4281 = vmatprep.subr.mxu0 0.0
        %4282 = vmatpush2.msra.mxu0 %v4144
        %4283 = vmatprep.subr.mxu0 0.0
        %4284 = vmatpush2.msra.mxu0 %v4143
        %4285 = vmatprep.subr.mxu0 0.0
        %4286 = vmatpush2.msra.mxu0 %v4142
        %4287 = vmatprep.subr.mxu0 0.0
        %4288 = vmatpush2.msra.mxu0 %v4141
        %4289 = vmatprep.subr.mxu0 0.0
        %4290 = vmatpush2.msra.mxu0 %v4140
        %4291 = vmatprep.mubr.f32.mxu0 %v4091
        %4292 = vmatmul.mubr.f32.gmra.mxu0 %v4090
        %v4293 = vpop.f32.mrf.mxu0
        %v4294 = vadd.f32 %v4224, %v4293
        %v4295 = vpop.f32.mrf.mxu0
        %4296 = vdwg.mxu0
        %4297 = vst [vmem:[%s488] sm:$0x1] %v4294
        %s4298 = sand.u32 %s275, 1
        %s4299 = scalar_lea.sflag [#allocation4], %s4298
        %s4300 = sand.u32 %s275, 1
        %s4301 = scalar_lea.vmem [#allocation14], %s4300
        // Predicated region
        $region93: #{tpu_custom_call.1} parent=63 // pred_check
          %p4302 = pneg %p285
        $region94: #{tpu_custom_call.1} parent=63 // pred_check_branch
          %4304 = sbr.rel (%p4302) target = $region96
        $region95: #{tpu_custom_call.1} parent=63 // pred_region
          %s4306 = ssub.s32 16, 16
          %4307 = vsyncadd %s4299, %s4306
          %s4308 = smul.addr %s31, 16
          %s4309 = scalar_lea.hbm %s11, %s4308
          %s4311 = sshll.u32 %s4301, 4
          %s4312 = int_to_ptr.vmem [resolvable:$true] %s4311
          %4314 = dma.vmem_to_hbm [thread:$0]  %s4312, 16, %s4309, %s4299
        $region96: #{tpu_custom_call.1} parent=63 // pred_fallthru
          _
      $region64: #{tpu_custom_call.1} parent=5 // pred_fallthru
        _
      %p4315 = scmp.le.s32.totalorder 2, %s26
      // Predicated region
      $region97: #{tpu_custom_call.1} parent=5 // pred_check
        %p4316 = pneg %p4315
      $region98: #{tpu_custom_call.1} parent=5 // pred_check_branch
        %4318 = sbr.rel (%p4316) target = $region100
      $region99: #{tpu_custom_call.1} parent=5 // pred_region
        %s4319 = ssub.s32 %s26, 2
        // Predicated region
        $region101: #{tpu_custom_call.1} parent=99 // pred_check
          %p4320 = pneg %p291
        $region102: #{tpu_custom_call.1} parent=99 // pred_check_branch
          %4322 = sbr.rel (%p4320) target = $region104
        $region103: #{tpu_custom_call.1} parent=99 // pred_region
          %s4323 = sand.u32 %s276, 1
          %s4324 = scalar_lea.sflag [#allocation4], %s4323
          %s4325 = sand.u32 %s276, 1
          %s4326 = scalar_lea.vmem [#allocation14], %s4325
          %4327 = dma.done %s4324, 16
        $region104: #{tpu_custom_call.1} parent=99 // pred_fallthru
          _
      $region100: #{tpu_custom_call.1} parent=5 // pred_fallthru
        _
    $region6: #{tpu_custom_call.1} parent=1 // loop_footer
      %s30 = sadd.s32 1, %s26
    $region7: #{tpu_custom_call.1} parent=1 // loop_footer_branch
      %25 = sbr.rel target = $region3
    $region8: #{tpu_custom_call.1} parent=1 // loop_exit
      _
    %4328 = vsyncpa [#allocation3], 1
    %s4329 = scalar_lea.sflag [#allocation3], 1
    %4330 = vsyncpa %s4329, 1
    %4331 = vsyncpa [#allocation6], 1
    %4332 = vsyncpa [#allocation9], 1
    %4333 = vsyncpa [#allocation12], 1
    %4334 = vsyncpa [#allocation4], 1
    %s4335 = scalar_lea.sflag [#allocation4], 1
    %4336 = vsyncpa %s4335, 1

</llo_original>
